<compile_context>
chip_gen: v5e
topology: v5e:2x2
jax: 0.10.0
libtpu: 0.0.40
codegen_flags: <defaults>
</compile_context>

<pallas_src>
import math
from functools import partial

import jax
import jax.numpy as jnp
from jax import lax
from jax.experimental import pallas as pl
from jax.experimental.pallas import tpu as pltpu


# ----------------------------------------------------------------------------
# Kernel
# ----------------------------------------------------------------------------
def _decoder_kernel(x_ref, mem_ref, w_qkv_ref, b_qkv_ref, w_out_ref,
                    ff_w1_ref, ff_b1_ref, ff_w2_ref, misc_ref, o_ref,
                    *, h, p, c_pad, kv_len, scale, eps, compute_dtype):
    f32 = jnp.float32
    x = x_ref[...].astype(f32)           # (M, d_model)   M = rows in this block
    mem = mem_ref[...].astype(f32)       # (M, d_model)
    M = x.shape[0]
    hp = h * p
    n_chunks = M // c_pad

    # Small f32 params, loaded once:
    #   misc[0..5] = LN{1,2,3} gamma/beta, misc[6]=sa b_o, misc[7]=ed b_o, misc[8]=ff b2
    misc = misc_ref[...]                 # (9, 1, d_model)

    # Additive key mask for padded chunk columns (only when chunk_size % 8 != 0).
    # Finite constant is safe: scores stay f32.
    if kv_len < c_pad:
        col = lax.broadcasted_iota(jnp.int32, (1, 1, c_pad), 2)
        key_bias = jnp.where(col < kv_len, 0.0, -1e30).astype(f32)
    else:
        key_bias = None

    def layer_norm(y, idx):
        gamma = misc[2 * idx]            # (1, d_model)
        beta = misc[2 * idx + 1]
        mu = jnp.mean(y, axis=-1, keepdims=True)
        ms = jnp.mean(y * y, axis=-1, keepdims=True)   # one-pass: var = E[x^2] - mu^2
        var = ms - mu * mu
        return (y - mu) * lax.rsqrt(var + eps) * gamma + beta

    def mha(query, key_value, blk, fused):
        """MultiHeadAttentionChunk (blk=0: self-attn weights, blk=1: enc-dec)."""
        w = w_qkv_ref[blk]               # (d_model, 3*hp)  compute_dtype, [Wq|Wk|Wv]
        b = b_qkv_ref[blk]               # (1, 3*hp)        f32
        q_c = query.astype(compute_dtype)
        if fused:
            # self-attention: single fused QKV matmul (query == key_value)
            qkv = jnp.dot(q_c, w, preferred_element_type=f32) + b    # (M, 3hp)
            q_all = qkv[:, :hp]
            kv_all = qkv[:, hp:]
        else:
            # enc-dec: Q from query, K/V from memory (one fused KV matmul)
            kv_c = key_value.astype(compute_dtype)
            q_all = jnp.dot(q_c, w[:, :hp], preferred_element_type=f32) + b[:, :hp]
            kv_all = jnp.dot(kv_c, w[:, hp:], preferred_element_type=f32) + b[:, hp:]

        # (M, hp) -> (n_chunks, c_pad, hp): free sublane regroup (c_pad % 8 == 0).
        q3 = q_all.reshape(n_chunks, c_pad, hp)
        k3 = kv_all[:, :hp].reshape(n_chunks, c_pad, hp)
        v3 = kv_all[:, hp:].reshape(n_chunks, c_pad, hp)

        ctx = []
        for hh in range(h):              # static unroll; tiny c_pad x c_pad matmuls
            sl = slice(hh * p, (hh + 1) * p)
            s = jnp.einsum("ncd,nkd->nck", q3[..., sl], k3[..., sl],
                           preferred_element_type=f32) * scale        # (n, c, c)
            if key_bias is not None:
                s = s + key_bias
            s = s - jnp.max(s, axis=-1, keepdims=True)
            e = jnp.exp(s)
            pr = e * pl.reciprocal(jnp.sum(e, axis=-1, keepdims=True), approx=True)
            ctx.append(jnp.einsum("nck,nkd->ncd", pr, v3[..., sl],
                                  preferred_element_type=f32))         # (n, c, p)

        a = jnp.concatenate(ctx, axis=-1).reshape(M, hp)               # (M, hp)
        wo = w_out_ref[blk]                                            # (hp, d_model)
        return jnp.dot(a.astype(compute_dtype), wo,
                       preferred_element_type=f32) + misc[6 + blk]     # + b_o

    # Self-attention -> add & LayerNorm   (dropout == identity in eval mode)
    x1 = layer_norm(mha(x, x, 0, True) + x, 0)
    # Encoder-decoder attention -> add & LayerNorm
    x2 = layer_norm(mha(x1, mem, 1, False) + x1, 1)
    # Position-wise feed-forward: Linear -> ReLU -> Linear, add & LayerNorm
    h1 = jnp.dot(x2.astype(compute_dtype), ff_w1_ref[...],
                 preferred_element_type=f32) + ff_b1_ref[...]
    h1 = jnp.maximum(h1, 0.0)
    ff = jnp.dot(h1.astype(compute_dtype), ff_w2_ref[...],
                 preferred_element_type=f32) + misc[8]
    o_ref[...] = layer_norm(ff + x2, 2).astype(o_ref.dtype)


# ----------------------------------------------------------------------------
# Wrapper
# ----------------------------------------------------------------------------
def decoder_forward(x, memory, params, *, h, q, v, chunk_size, eps=1e-5,
                    compute_dtype=jnp.bfloat16):
    B, K, d_model = x.shape
    assert K % chunk_size == 0, "K must be a multiple of chunk_size"
    p_dim = max(q, v)   # zero-padding keeps the packed layout uniform when q != v
    hp = h * p_dim
    d_ff = params["ff_w1"].shape[1]

    # ---- pack weights: fused per-block QKV / W_o, few fat DMAs -----------------
    def pad_cols(w, dim):     # (d_model, h*dim) -> (d_model, hp)
        if dim == p_dim:
            return w
        w = w.reshape(w.shape[0], h, dim)
        w = jnp.pad(w, ((0, 0), (0, 0), (0, p_dim - dim)))
        return w.reshape(w.shape[0], hp)

    def pad_bias(b, dim):     # (1, h*dim) -> (1, hp)
        if dim == p_dim:
            return b
        b = b.reshape(1, h, dim)
        b = jnp.pad(b, ((0, 0), (0, 0), (0, p_dim - dim)))
        return b.reshape(1, hp)

    def pad_rows(w, dim):     # (h*dim, d_model) -> (hp, d_model)
        if dim == p_dim:
            return w
        w = w.reshape(h, dim, d_model)
        w = jnp.pad(w, ((0, 0), (0, p_dim - dim), (0, 0)))
        return w.reshape(hp, d_model)

    w_qkv = jnp.stack([
        jnp.concatenate([pad_cols(params["sa_wq"], q),
                         pad_cols(params["sa_wk"], q),
                         pad_cols(params["sa_wv"], v)], axis=-1),
        jnp.concatenate([pad_cols(params["ed_wq"], q),
                         pad_cols(params["ed_wk"], q),
                         pad_cols(params["ed_wv"], v)], axis=-1),
    ]).astype(compute_dtype)                                   # (2, d_model, 3hp)
    b_qkv = jnp.stack([
        jnp.concatenate([pad_bias(params["sa_bq"], q),
                         pad_bias(params["sa_bk"], q),
                         pad_bias(params["sa_bv"], v)], axis=-1),
        jnp.concatenate([pad_bias(params["ed_bq"], q),
                         pad_bias(params["ed_bk"], q),
                         pad_bias(params["ed_bv"], v)], axis=-1),
    ]).astype(jnp.float32)                                     # (2, 1, 3hp)
    w_out = jnp.stack([pad_rows(params["sa_wo"], v),
                       pad_rows(params["ed_wo"], v)]).astype(compute_dtype)  # (2, hp, d_model)
    misc = jnp.concatenate([
        params["ln1_g"], params["ln1_b"], params["ln2_g"], params["ln2_b"],
        params["ln3_g"], params["ln3_b"], params["sa_bo"], params["ed_bo"],
        params["ff_b2"],
    ], axis=0).astype(jnp.float32)[:, None, :]                 # (9, 1, d_model)
    ff_w1 = params["ff_w1"].astype(compute_dtype)              # (d_model, d_ff)
    ff_b1 = params["ff_b1"].astype(jnp.float32)                # (1, d_ff)
    ff_w2 = params["ff_w2"].astype(compute_dtype)              # (d_ff, d_model)
    weights = [w_qkv, b_qkv, w_out, ff_w1, ff_b1, ff_w2, misc]

    # ---- chunk padding: keep attention strictly per-chunk (no (M, M) scores) ---
    n_chunk = K // chunk_size
    c_pad = chunk_size if chunk_size % 8 == 0 else ((chunk_size + 7) // 8) * 8
    K_pad = n_chunk * c_pad
    if c_pad != chunk_size:
        padw = ((0, 0), (0, 0), (0, c_pad - chunk_size), (0, 0))
        x2d = jnp.pad(x.reshape(B, n_chunk, chunk_size, d_model), padw
                      ).reshape(B * K_pad, d_model)
        mem2d = jnp.pad(memory.reshape(B, n_chunk, chunk_size, d_model), padw
                        ).reshape(B * K_pad, d_model)
    else:
        x2d = x.reshape(B * K, d_model)
        mem2d = memory.reshape(B * K, d_model)

    # ---- generation-aware batch folding & grid ---------------------------------
    kind = jax.devices()[0].device_kind.lower()
    is_v7 = "v7" in kind                       # v7x: 2 TensorCores, 64 MiB VMEM
    vmem_budget = (24 << 20) if is_v7 else (48 << 20)

    w_bytes = sum(int(a.size) * a.dtype.itemsize for a in weights)

    def step_bytes(rows):
        act = 3 * 2 * rows * d_model * x.dtype.itemsize           # x/mem/out, dbl-buffered
        live = 4 * (8 * rows * d_model + 2 * rows * d_ff + 4 * rows * 3 * hp)
        return 2 * w_bytes + act + live                            # weights dbl-buffered

    nb = B
    for cand in range(1, B + 1):
        if B % cand == 0 and step_bytes((B // cand) * K_pad) <= vmem_budget:
            nb = cand
            break
    # v7x megacore: only split across the 2 TCs if each still gets a fat block.
    if is_v7 and nb == 1 and B % 2 == 0 and (B // 2) * K_pad >= 128:
        nb = 2
    m_rows = (B // nb) * K_pad                 # multiple of c_pad; never splits a chunk

    vmem_limit = int(min(max(2 * step_bytes(m_rows), 16 << 20), 60 << 20))

    act_spec = pl.BlockSpec((m_rows, d_model), lambda b: (b, 0))
    w_specs = [pl.BlockSpec(w.shape, lambda b, n=w.ndim: (0,) * n) for w in weights]

    kernel = partial(_decoder_kernel, h=h, p=p_dim, c_pad=c_pad,
                     kv_len=chunk_size,
                     scale=1.0 / math.sqrt(chunk_size),   # MultiHeadAttentionChunk scaling
                     eps=eps, compute_dtype=compute_dtype)
    out2d = pl.pallas_call(
        kernel,
        out_shape=jax.ShapeDtypeStruct((B * K_pad, d_model), x.dtype),
        grid_spec=pltpu.PrefetchScalarGridSpec(
            num_scalar_prefetch=0,
            grid=(nb,),
            in_specs=[act_spec, act_spec] + w_specs,
            out_specs=act_spec),
        compiler_params=pltpu.CompilerParams(
            dimension_semantics=("parallel",),
            vmem_limit_bytes=vmem_limit),
    )(x2d, mem2d, *weights)

    if c_pad != chunk_size:
        out = out2d.reshape(B, n_chunk, c_pad, d_model)[:, :, :chunk_size, :]
        return out.reshape(B, K, d_model)
    return out2d.reshape(B, K, d_model)


# ----------------------------------------------------------------------------
# Pure-JAX reference (f32) and param init
# ----------------------------------------------------------------------------
def decoder_ref(x, memory, params, *, h, q, v, chunk_size, eps=1e-5):
    B, K, d_model = x.shape
    same_chunk = (jnp.arange(K) // chunk_size)[:, None] == \
                 (jnp.arange(K) // chunk_size)[None, :]
    scale = 1.0 / math.sqrt(chunk_size)

    def mha(query, key, value, pfx):
        Qp = query @ params[pfx + "_wq"] + params[pfx + "_bq"]
        Kp = key @ params[pfx + "_wk"] + params[pfx + "_bk"]
        Vp = value @ params[pfx + "_wv"] + params[pfx + "_bv"]
        Qh = Qp.reshape(B, K, h, q).transpose(0, 2, 1, 3)
        Kh = Kp.reshape(B, K, h, q).transpose(0, 2, 1, 3)
        Vh = Vp.reshape(B, K, h, v).transpose(0, 2, 1, 3)
        s = jnp.einsum("bhkq,bhlq->bhkl", Qh, Kh) * scale
        s = jnp.where(same_chunk, s, -jnp.inf)
        p = jax.nn.softmax(s, axis=-1)
        a = jnp.einsum("bhkl,bhlv->bhkv", p, Vh)
        a = a.transpose(0, 2, 1, 3).reshape(B, K, h * v)
        return a @ params[pfx + "_wo"] + params[pfx + "_bo"]

    def ln(xx, g, b):
        mu = xx.mean(-1, keepdims=True)
        var = ((xx - mu) ** 2).mean(-1, keepdims=True)
        return (xx - mu) / jnp.sqrt(var + eps) * g + b

    x1 = ln(mha(x, x, x, "sa") + x, params["ln1_g"], params["ln1_b"])
    x2 = ln(mha(x1, memory, memory, "ed") + x1, params["ln2_g"], params["ln2_b"])
    h1 = jnp.maximum(x2 @ params["ff_w1"] + params["ff_b1"], 0.0)
    ff = h1 @ params["ff_w2"] + params["ff_b2"]
    return ln(ff + x2, params["ln3_g"], params["ln3_b"])


def init_params(key, d_model, q, v, h, d_ff):
    def linear(k, fan_in, fan_out):
        k1, k2 = jax.random.split(k)
        bound = 1.0 / math.sqrt(fan_in)
        w = jax.random.uniform(k1, (fan_in, fan_out), jnp.float32, -bound, bound)
        b = jax.random.uniform(k2, (1, fan_out), jnp.float32, -bound, bound)
        return w, b

    keys = jax.random.split(key, 10)
    p = {}
    p["sa_wq"], p["sa_bq"] = linear(keys[0], d_model, q * h)
    p["sa_wk"], p["sa_bk"] = linear(keys[1], d_model, q * h)
    p["sa_wv"], p["sa_bv"] = linear(keys[2], d_model, v * h)
    p["sa_wo"], p["sa_bo"] = linear(keys[3], v * h, d_model)
    p["ed_wq"], p["ed_bq"] = linear(keys[4], d_model, q * h)
    p["ed_wk"], p["ed_bk"] = linear(keys[5], d_model, q * h)
    p["ed_wv"], p["ed_bv"] = linear(keys[6], d_model, v * h)
    p["ed_wo"], p["ed_bo"] = linear(keys[7], v * h, d_model)
    p["ff_w1"], p["ff_b1"] = linear(keys[8], d_model, d_ff)
    p["ff_w2"], p["ff_b2"] = linear(keys[9], d_ff, d_model)
    for i in (1, 2, 3):
        p[f"ln{i}_g"] = jnp.ones((1, d_model), jnp.float32)   # torch LayerNorm default
        p[f"ln{i}_b"] = jnp.zeros((1, d_model), jnp.float32)
    return p


if __name__ == "__main__":
    B, K, d_model = 2, 16, 32
    q = v = 8
    h = 4
    d_ff = 2048          # PositionwiseFeedForward default hidden size

    key = jax.random.PRNGKey(0)
    kx, kmem, kp = jax.random.split(key, 3)
    x = jax.random.normal(kx, (B, K, d_model), jnp.float32)
    memory = jax.random.normal(kmem, (B, K, d_model), jnp.float32)
    params = init_params(kp, d_model, q, v, h, d_ff)

    # 1) default mixed-precision (bf16 MXU operands), 8-aligned chunks
    chunk_size = 8
    out = jax.block_until_ready(
        decoder_forward(x, memory, params, h=h, q=q, v=v, chunk_size=chunk_size))
    ref = decoder_ref(x, memory, params, h=h, q=q, v=v, chunk_size=chunk_size)
    assert out.shape == (B, K, d_model)
    err_bf16 = float(jnp.max(jnp.abs(out - ref)))
    assert err_bf16 < 6e-2, f"bf16 path: max abs err {err_bf16}"

    # 2) pure-f32 path (tight semantic check of the same kernel)
    out32 = jax.block_until_ready(
        decoder_forward(x, memory, params, h=h, q=q, v=v, chunk_size=chunk_size,
                        compute_dtype=jnp.float32))
    err_f32 = float(jnp.max(jnp.abs(out32 - ref)))
    assert err_f32 < 1e-2, f"f32 path: max abs err {err_f32}"

    # 3) chunk_size not a multiple of 8 -> padded-chunk path (masked key columns)
    out_pad = jax.block_until_ready(
        decoder_forward(x, memory, params, h=h, q=q, v=v, chunk_size=4,
                        compute_dtype=jnp.float32))
    ref_pad = decoder_ref(x, memory, params, h=h, q=q, v=v, chunk_size=4)
    err_pad = float(jnp.max(jnp.abs(out_pad - ref_pad)))
    assert err_pad < 1e-2, f"padded-chunk path: max abs err {err_pad}"

    print("KERNEL_OK")
</pallas_src>

<mosaic_0001>
module attributes {stable_mosaic.version = 11 : i64} {
  func.func @_decoder_kernel(%arg0: i32, %arg1: memref<32x32xf32, #tpu.memory_space<vmem>>, %arg2: memref<32x32xf32, #tpu.memory_space<vmem>>, %arg3: memref<2x32x96xbf16, #tpu.memory_space<vmem>>, %arg4: memref<2x1x96xf32, #tpu.memory_space<vmem>>, %arg5: memref<2x32x32xbf16, #tpu.memory_space<vmem>>, %arg6: memref<32x2048xbf16, #tpu.memory_space<vmem>>, %arg7: memref<1x2048xf32, #tpu.memory_space<vmem>>, %arg8: memref<2048x32xbf16, #tpu.memory_space<vmem>>, %arg9: memref<9x1x32xf32, #tpu.memory_space<vmem>>, %arg10: memref<32x32xf32, #tpu.memory_space<vmem>>) attributes {dimension_semantics = [#tpu.dimension_semantics<parallel>], iteration_bounds = array<i64: 1>, scalar_prefetch = 0 : i64, scratch_operands = 0 : i64, tpu.core_type = #tpu.core_type<tc>, window_params = [{transform_indices = @transform_0, window_bounds = array<i64: 32, 32>}, {transform_indices = @transform_1, window_bounds = array<i64: 32, 32>}, {pipeline_mode = #tpu.pipeline_mode<synchronous>, transform_indices = @transform_2, window_bounds = array<i64: 2, 32, 96>}, {pipeline_mode = #tpu.pipeline_mode<synchronous>, transform_indices = @transform_3, window_bounds = array<i64: 2, 1, 96>}, {pipeline_mode = #tpu.pipeline_mode<synchronous>, transform_indices = @transform_4, window_bounds = array<i64: 2, 32, 32>}, {pipeline_mode = #tpu.pipeline_mode<synchronous>, transform_indices = @transform_5, window_bounds = array<i64: 32, 2048>}, {pipeline_mode = #tpu.pipeline_mode<synchronous>, transform_indices = @transform_6, window_bounds = array<i64: 1, 2048>}, {pipeline_mode = #tpu.pipeline_mode<synchronous>, transform_indices = @transform_7, window_bounds = array<i64: 2048, 32>}, {pipeline_mode = #tpu.pipeline_mode<synchronous>, transform_indices = @transform_8, window_bounds = array<i64: 9, 1, 32>}, {transform_indices = @transform_9, window_bounds = array<i64: 32, 32>}]} {
    %c0 = arith.constant 0 : index
    %c0_0 = arith.constant 0 : index
    %0 = vector.load %arg1[%c0, %c0_0] : memref<32x32xf32, #tpu.memory_space<vmem>>, vector<32x32xf32>
    %c0_1 = arith.constant 0 : index
    %c0_2 = arith.constant 0 : index
    %1 = vector.load %arg2[%c0_1, %c0_2] : memref<32x32xf32, #tpu.memory_space<vmem>>, vector<32x32xf32>
    %c0_3 = arith.constant 0 : index
    %c0_4 = arith.constant 0 : index
    %c0_5 = arith.constant 0 : index
    %2 = vector.load %arg9[%c0_3, %c0_4, %c0_5] : memref<9x1x32xf32, #tpu.memory_space<vmem>>, vector<9x1x32xf32>
    %c0_6 = arith.constant 0 : index
    %c0_7 = arith.constant 0 : index
    %c0_8 = arith.constant 0 : index
    %3 = vector.load %arg3[%c0_6, %c0_7, %c0_8] : memref<2x32x96xbf16, #tpu.memory_space<vmem>>, vector<1x32x96xbf16>
    %4 = vector.shape_cast %3 : vector<1x32x96xbf16> to vector<32x96xbf16>
    %c0_9 = arith.constant 0 : index
    %c0_10 = arith.constant 0 : index
    %c0_11 = arith.constant 0 : index
    %5 = vector.load %arg4[%c0_9, %c0_10, %c0_11] : memref<2x1x96xf32, #tpu.memory_space<vmem>>, vector<1x1x96xf32>
    %6 = vector.shape_cast %5 : vector<1x1x96xf32> to vector<1x96xf32>
    %7 = arith.truncf %0 : vector<32x32xf32> to vector<32x32xbf16>
    %cst = arith.constant dense<0.000000e+00> : vector<32x96xf32>
    %8 = tpu.matmul %7, %4, %cst {dimension_numbers = #tpu.dot_dimension_numbers<[1], [0], [0], [1], [0, 0, 1, 1], [], []>} : vector<32x32xbf16>, vector<32x96xbf16>, vector<32x96xf32> -> vector<32x96xf32>
    %9 = vector.broadcast %6 : vector<1x96xf32> to vector<32x96xf32>
    %10 = arith.addf %8, %9 : vector<32x96xf32>
    %11 = vector.extract_strided_slice %10 {offsets = [0, 0], sizes = [32, 32], strides = [1, 1]} : vector<32x96xf32> to vector<32x32xf32>
    %12 = vector.extract_strided_slice %10 {offsets = [0, 32], sizes = [32, 64], strides = [1, 1]} : vector<32x96xf32> to vector<32x64xf32>
    %13 = vector.shape_cast %11 : vector<32x32xf32> to vector<4x8x32xf32>
    %14 = vector.extract_strided_slice %12 {offsets = [0, 0], sizes = [32, 32], strides = [1, 1]} : vector<32x64xf32> to vector<32x32xf32>
    %15 = vector.shape_cast %14 : vector<32x32xf32> to vector<4x8x32xf32>
    %16 = vector.extract_strided_slice %12 {offsets = [0, 32], sizes = [32, 32], strides = [1, 1]} : vector<32x64xf32> to vector<32x32xf32>
    %17 = vector.shape_cast %16 : vector<32x32xf32> to vector<4x8x32xf32>
    %18 = vector.extract_strided_slice %13 {offsets = [0, 0, 0], sizes = [4, 8, 8], strides = [1, 1, 1]} : vector<4x8x32xf32> to vector<4x8x8xf32>
    %19 = vector.extract_strided_slice %15 {offsets = [0, 0, 0], sizes = [4, 8, 8], strides = [1, 1, 1]} : vector<4x8x32xf32> to vector<4x8x8xf32>
    "tpu.trace_start"() <{level = 10 : i32, message = "ncd,nkd->nck"}> : () -> ()
    %cst_12 = arith.constant dense<0.000000e+00> : vector<4x8x8xf32>
    %20 = tpu.matmul %18, %19, %cst_12 {dimension_numbers = #tpu.dot_dimension_numbers<[2], [2], [1], [1], [0, 0, 0, 1, 1, 1], [0], [0]>} : vector<4x8x8xf32>, vector<4x8x8xf32>, vector<4x8x8xf32> -> vector<4x8x8xf32>
    "tpu.trace_stop"() : () -> ()
    %cst_13 = arith.constant 0.353553385 : f32
    %21 = vector.broadcast %cst_13 : f32 to vector<4x8x8xf32>
    %22 = arith.mulf %20, %21 : vector<4x8x8xf32>
    %cst_14 = arith.constant dense<0xFF800000> : vector<4x8xf32>
    %23 = vector.multi_reduction <maximumf>, %22, %cst_14 [2] : vector<4x8x8xf32> to vector<4x8xf32>
    %24 = vector.shape_cast %23 : vector<4x8xf32> to vector<4x8x1xf32>
    %25 = vector.broadcast %24 : vector<4x8x1xf32> to vector<4x8x8xf32>
    %26 = arith.subf %22, %25 : vector<4x8x8xf32>
    %27 = math.exp %26 : vector<4x8x8xf32>
    %cst_15 = arith.constant dense<0.000000e+00> : vector<4x8xf32>
    %28 = vector.multi_reduction <add>, %27, %cst_15 [2] : vector<4x8x8xf32> to vector<4x8xf32>
    %29 = vector.shape_cast %28 : vector<4x8xf32> to vector<4x8x1xf32>
    %30 = tpu.reciprocal %29 {approx = true} : vector<4x8x1xf32> -> vector<4x8x1xf32>
    %31 = vector.broadcast %30 : vector<4x8x1xf32> to vector<4x8x8xf32>
    %32 = arith.mulf %27, %31 : vector<4x8x8xf32>
    %33 = vector.extract_strided_slice %17 {offsets = [0, 0, 0], sizes = [4, 8, 8], strides = [1, 1, 1]} : vector<4x8x32xf32> to vector<4x8x8xf32>
    "tpu.trace_start"() <{level = 10 : i32, message = "nck,nkd->ncd"}> : () -> ()
    %cst_16 = arith.constant dense<0.000000e+00> : vector<4x8x8xf32>
    %34 = tpu.matmul %32, %33, %cst_16 {dimension_numbers = #tpu.dot_dimension_numbers<[2], [1], [1], [2], [0, 0, 0, 1, 1, 2], [0], [0]>} : vector<4x8x8xf32>, vector<4x8x8xf32>, vector<4x8x8xf32> -> vector<4x8x8xf32>
    "tpu.trace_stop"() : () -> ()
    %35 = vector.extract_strided_slice %13 {offsets = [0, 0, 8], sizes = [4, 8, 8], strides = [1, 1, 1]} : vector<4x8x32xf32> to vector<4x8x8xf32>
    %36 = vector.extract_strided_slice %15 {offsets = [0, 0, 8], sizes = [4, 8, 8], strides = [1, 1, 1]} : vector<4x8x32xf32> to vector<4x8x8xf32>
    "tpu.trace_start"() <{level = 10 : i32, message = "ncd,nkd->nck"}> : () -> ()
    %cst_17 = arith.constant dense<0.000000e+00> : vector<4x8x8xf32>
    %37 = tpu.matmul %35, %36, %cst_17 {dimension_numbers = #tpu.dot_dimension_numbers<[2], [2], [1], [1], [0, 0, 0, 1, 1, 1], [0], [0]>} : vector<4x8x8xf32>, vector<4x8x8xf32>, vector<4x8x8xf32> -> vector<4x8x8xf32>
    "tpu.trace_stop"() : () -> ()
    %cst_18 = arith.constant 0.353553385 : f32
    %38 = vector.broadcast %cst_18 : f32 to vector<4x8x8xf32>
    %39 = arith.mulf %37, %38 : vector<4x8x8xf32>
    %cst_19 = arith.constant dense<0xFF800000> : vector<4x8xf32>
    %40 = vector.multi_reduction <maximumf>, %39, %cst_19 [2] : vector<4x8x8xf32> to vector<4x8xf32>
    %41 = vector.shape_cast %40 : vector<4x8xf32> to vector<4x8x1xf32>
    %42 = vector.broadcast %41 : vector<4x8x1xf32> to vector<4x8x8xf32>
    %43 = arith.subf %39, %42 : vector<4x8x8xf32>
    %44 = math.exp %43 : vector<4x8x8xf32>
    %cst_20 = arith.constant dense<0.000000e+00> : vector<4x8xf32>
    %45 = vector.multi_reduction <add>, %44, %cst_20 [2] : vector<4x8x8xf32> to vector<4x8xf32>
    %46 = vector.shape_cast %45 : vector<4x8xf32> to vector<4x8x1xf32>
    %47 = tpu.reciprocal %46 {approx = true} : vector<4x8x1xf32> -> vector<4x8x1xf32>
    %48 = vector.broadcast %47 : vector<4x8x1xf32> to vector<4x8x8xf32>
    %49 = arith.mulf %44, %48 : vector<4x8x8xf32>
    %50 = vector.extract_strided_slice %17 {offsets = [0, 0, 8], sizes = [4, 8, 8], strides = [1, 1, 1]} : vector<4x8x32xf32> to vector<4x8x8xf32>
    "tpu.trace_start"() <{level = 10 : i32, message = "nck,nkd->ncd"}> : () -> ()
    %cst_21 = arith.constant dense<0.000000e+00> : vector<4x8x8xf32>
    %51 = tpu.matmul %49, %50, %cst_21 {dimension_numbers = #tpu.dot_dimension_numbers<[2], [1], [1], [2], [0, 0, 0, 1, 1, 2], [0], [0]>} : vector<4x8x8xf32>, vector<4x8x8xf32>, vector<4x8x8xf32> -> vector<4x8x8xf32>
    "tpu.trace_stop"() : () -> ()
    %52 = vector.extract_strided_slice %13 {offsets = [0, 0, 16], sizes = [4, 8, 8], strides = [1, 1, 1]} : vector<4x8x32xf32> to vector<4x8x8xf32>
    %53 = vector.extract_strided_slice %15 {offsets = [0, 0, 16], sizes = [4, 8, 8], strides = [1, 1, 1]} : vector<4x8x32xf32> to vector<4x8x8xf32>
    "tpu.trace_start"() <{level = 10 : i32, message = "ncd,nkd->nck"}> : () -> ()
    %cst_22 = arith.constant dense<0.000000e+00> : vector<4x8x8xf32>
    %54 = tpu.matmul %52, %53, %cst_22 {dimension_numbers = #tpu.dot_dimension_numbers<[2], [2], [1], [1], [0, 0, 0, 1, 1, 1], [0], [0]>} : vector<4x8x8xf32>, vector<4x8x8xf32>, vector<4x8x8xf32> -> vector<4x8x8xf32>
    "tpu.trace_stop"() : () -> ()
    %cst_23 = arith.constant 0.353553385 : f32
    %55 = vector.broadcast %cst_23 : f32 to vector<4x8x8xf32>
    %56 = arith.mulf %54, %55 : vector<4x8x8xf32>
    %cst_24 = arith.constant dense<0xFF800000> : vector<4x8xf32>
    %57 = vector.multi_reduction <maximumf>, %56, %cst_24 [2] : vector<4x8x8xf32> to vector<4x8xf32>
    %58 = vector.shape_cast %57 : vector<4x8xf32> to vector<4x8x1xf32>
    %59 = vector.broadcast %58 : vector<4x8x1xf32> to vector<4x8x8xf32>
    %60 = arith.subf %56, %59 : vector<4x8x8xf32>
    %61 = math.exp %60 : vector<4x8x8xf32>
    %cst_25 = arith.constant dense<0.000000e+00> : vector<4x8xf32>
    %62 = vector.multi_reduction <add>, %61, %cst_25 [2] : vector<4x8x8xf32> to vector<4x8xf32>
    %63 = vector.shape_cast %62 : vector<4x8xf32> to vector<4x8x1xf32>
    %64 = tpu.reciprocal %63 {approx = true} : vector<4x8x1xf32> -> vector<4x8x1xf32>
    %65 = vector.broadcast %64 : vector<4x8x1xf32> to vector<4x8x8xf32>
    %66 = arith.mulf %61, %65 : vector<4x8x8xf32>
    %67 = vector.extract_strided_slice %17 {offsets = [0, 0, 16], sizes = [4, 8, 8], strides = [1, 1, 1]} : vector<4x8x32xf32> to vector<4x8x8xf32>
    "tpu.trace_start"() <{level = 10 : i32, message = "nck,nkd->ncd"}> : () -> ()
    %cst_26 = arith.constant dense<0.000000e+00> : vector<4x8x8xf32>
    %68 = tpu.matmul %66, %67, %cst_26 {dimension_numbers = #tpu.dot_dimension_numbers<[2], [1], [1], [2], [0, 0, 0, 1, 1, 2], [0], [0]>} : vector<4x8x8xf32>, vector<4x8x8xf32>, vector<4x8x8xf32> -> vector<4x8x8xf32>
    "tpu.trace_stop"() : () -> ()
    %69 = vector.extract_strided_slice %13 {offsets = [0, 0, 24], sizes = [4, 8, 8], strides = [1, 1, 1]} : vector<4x8x32xf32> to vector<4x8x8xf32>
    %70 = vector.extract_strided_slice %15 {offsets = [0, 0, 24], sizes = [4, 8, 8], strides = [1, 1, 1]} : vector<4x8x32xf32> to vector<4x8x8xf32>
    "tpu.trace_start"() <{level = 10 : i32, message = "ncd,nkd->nck"}> : () -> ()
    %cst_27 = arith.constant dense<0.000000e+00> : vector<4x8x8xf32>
    %71 = tpu.matmul %69, %70, %cst_27 {dimension_numbers = #tpu.dot_dimension_numbers<[2], [2], [1], [1], [0, 0, 0, 1, 1, 1], [0], [0]>} : vector<4x8x8xf32>, vector<4x8x8xf32>, vector<4x8x8xf32> -> vector<4x8x8xf32>
    "tpu.trace_stop"() : () -> ()
    %cst_28 = arith.constant 0.353553385 : f32
    %72 = vector.broadcast %cst_28 : f32 to vector<4x8x8xf32>
    %73 = arith.mulf %71, %72 : vector<4x8x8xf32>
    %cst_29 = arith.constant dense<0xFF800000> : vector<4x8xf32>
    %74 = vector.multi_reduction <maximumf>, %73, %cst_29 [2] : vector<4x8x8xf32> to vector<4x8xf32>
    %75 = vector.shape_cast %74 : vector<4x8xf32> to vector<4x8x1xf32>
    %76 = vector.broadcast %75 : vector<4x8x1xf32> to vector<4x8x8xf32>
    %77 = arith.subf %73, %76 : vector<4x8x8xf32>
    %78 = math.exp %77 : vector<4x8x8xf32>
    %cst_30 = arith.constant dense<0.000000e+00> : vector<4x8xf32>
    %79 = vector.multi_reduction <add>, %78, %cst_30 [2] : vector<4x8x8xf32> to vector<4x8xf32>
    %80 = vector.shape_cast %79 : vector<4x8xf32> to vector<4x8x1xf32>
    %81 = tpu.reciprocal %80 {approx = true} : vector<4x8x1xf32> -> vector<4x8x1xf32>
    %82 = vector.broadcast %81 : vector<4x8x1xf32> to vector<4x8x8xf32>
    %83 = arith.mulf %78, %82 : vector<4x8x8xf32>
    %84 = vector.extract_strided_slice %17 {offsets = [0, 0, 24], sizes = [4, 8, 8], strides = [1, 1, 1]} : vector<4x8x32xf32> to vector<4x8x8xf32>
    "tpu.trace_start"() <{level = 10 : i32, message = "nck,nkd->ncd"}> : () -> ()
    %cst_31 = arith.constant dense<0.000000e+00> : vector<4x8x8xf32>
    %85 = tpu.matmul %83, %84, %cst_31 {dimension_numbers = #tpu.dot_dimension_numbers<[2], [1], [1], [2], [0, 0, 0, 1, 1, 2], [0], [0]>} : vector<4x8x8xf32>, vector<4x8x8xf32>, vector<4x8x8xf32> -> vector<4x8x8xf32>
    "tpu.trace_stop"() : () -> ()
    %86 = tpu.concatenate %34, %51, %68, %85 in 2 : vector<4x8x8xf32>, vector<4x8x8xf32>, vector<4x8x8xf32>, vector<4x8x8xf32> -> vector<4x8x32xf32>
    %87 = vector.shape_cast %86 : vector<4x8x32xf32> to vector<32x32xf32>
    %c0_32 = arith.constant 0 : index
    %c0_33 = arith.constant 0 : index
    %c0_34 = arith.constant 0 : index
    %88 = vector.load %arg5[%c0_32, %c0_33, %c0_34] : memref<2x32x32xbf16, #tpu.memory_space<vmem>>, vector<1x32x32xbf16>
    %89 = vector.shape_cast %88 : vector<1x32x32xbf16> to vector<32x32xbf16>
    %90 = arith.truncf %87 : vector<32x32xf32> to vector<32x32xbf16>
    %cst_35 = arith.constant dense<0.000000e+00> : vector<32x32xf32>
    %91 = tpu.matmul %90, %89, %cst_35 {dimension_numbers = #tpu.dot_dimension_numbers<[1], [0], [0], [1], [0, 0, 1, 1], [], []>} : vector<32x32xbf16>, vector<32x32xbf16>, vector<32x32xf32> -> vector<32x32xf32>
    %92 = vector.extract_strided_slice %2 {offsets = [6, 0, 0], sizes = [1, 1, 32], strides = [1, 1, 1]} : vector<9x1x32xf32> to vector<1x1x32xf32>
    %93 = vector.shape_cast %92 : vector<1x1x32xf32> to vector<1x32xf32>
    %94 = vector.broadcast %93 : vector<1x32xf32> to vector<32x32xf32>
    %95 = arith.addf %91, %94 : vector<32x32xf32>
    %96 = arith.addf %95, %0 : vector<32x32xf32>
    %97 = vector.extract_strided_slice %2 {offsets = [0, 0, 0], sizes = [1, 1, 32], strides = [1, 1, 1]} : vector<9x1x32xf32> to vector<1x1x32xf32>
    %98 = vector.shape_cast %97 : vector<1x1x32xf32> to vector<1x32xf32>
    %99 = vector.extract_strided_slice %2 {offsets = [1, 0, 0], sizes = [1, 1, 32], strides = [1, 1, 1]} : vector<9x1x32xf32> to vector<1x1x32xf32>
    %100 = vector.shape_cast %99 : vector<1x1x32xf32> to vector<1x32xf32>
    %cst_36 = arith.constant dense<0.000000e+00> : vector<32xf32>
    %101 = vector.multi_reduction <add>, %96, %cst_36 [1] : vector<32x32xf32> to vector<32xf32>
    %102 = vector.shape_cast %101 : vector<32xf32> to vector<32x1xf32>
    %cst_37 = arith.constant 3.200000e+01 : f32
    %103 = vector.broadcast %cst_37 : f32 to vector<32x1xf32>
    %104 = arith.divf %102, %103 : vector<32x1xf32>
    %105 = arith.mulf %96, %96 : vector<32x32xf32>
    %cst_38 = arith.constant dense<0.000000e+00> : vector<32xf32>
    %106 = vector.multi_reduction <add>, %105, %cst_38 [1] : vector<32x32xf32> to vector<32xf32>
    %107 = vector.shape_cast %106 : vector<32xf32> to vector<32x1xf32>
    %cst_39 = arith.constant 3.200000e+01 : f32
    %108 = vector.broadcast %cst_39 : f32 to vector<32x1xf32>
    %109 = arith.divf %107, %108 : vector<32x1xf32>
    %110 = arith.mulf %104, %104 : vector<32x1xf32>
    %111 = arith.subf %109, %110 : vector<32x1xf32>
    %112 = vector.broadcast %104 : vector<32x1xf32> to vector<32x32xf32>
    %113 = arith.subf %96, %112 : vector<32x32xf32>
    %cst_40 = arith.constant 9.99999974E-6 : f32
    %114 = vector.broadcast %cst_40 : f32 to vector<32x1xf32>
    %115 = arith.addf %111, %114 : vector<32x1xf32>
    %116 = math.rsqrt %115 : vector<32x1xf32>
    %117 = vector.broadcast %116 : vector<32x1xf32> to vector<32x32xf32>
    %118 = arith.mulf %113, %117 : vector<32x32xf32>
    %119 = vector.broadcast %98 : vector<1x32xf32> to vector<32x32xf32>
    %120 = arith.mulf %118, %119 : vector<32x32xf32>
    %121 = vector.broadcast %100 : vector<1x32xf32> to vector<32x32xf32>
    %122 = arith.addf %120, %121 : vector<32x32xf32>
    %c1 = arith.constant 1 : index
    %c0_41 = arith.constant 0 : index
    %c0_42 = arith.constant 0 : index
    %123 = vector.load %arg3[%c1, %c0_41, %c0_42] : memref<2x32x96xbf16, #tpu.memory_space<vmem>>, vector<1x32x96xbf16>
    %124 = vector.shape_cast %123 : vector<1x32x96xbf16> to vector<32x96xbf16>
    %c1_43 = arith.constant 1 : index
    %c0_44 = arith.constant 0 : index
    %c0_45 = arith.constant 0 : index
    %125 = vector.load %arg4[%c1_43, %c0_44, %c0_45] : memref<2x1x96xf32, #tpu.memory_space<vmem>>, vector<1x1x96xf32>
    %126 = vector.shape_cast %125 : vector<1x1x96xf32> to vector<1x96xf32>
    %127 = arith.truncf %122 : vector<32x32xf32> to vector<32x32xbf16>
    %128 = arith.truncf %1 : vector<32x32xf32> to vector<32x32xbf16>
    %129 = vector.extract_strided_slice %124 {offsets = [0, 0], sizes = [32, 32], strides = [1, 1]} : vector<32x96xbf16> to vector<32x32xbf16>
    %cst_46 = arith.constant dense<0.000000e+00> : vector<32x32xf32>
    %130 = tpu.matmul %127, %129, %cst_46 {dimension_numbers = #tpu.dot_dimension_numbers<[1], [0], [0], [1], [0, 0, 1, 1], [], []>} : vector<32x32xbf16>, vector<32x32xbf16>, vector<32x32xf32> -> vector<32x32xf32>
    %131 = vector.extract_strided_slice %126 {offsets = [0, 0], sizes = [1, 32], strides = [1, 1]} : vector<1x96xf32> to vector<1x32xf32>
    %132 = vector.broadcast %131 : vector<1x32xf32> to vector<32x32xf32>
    %133 = arith.addf %130, %132 : vector<32x32xf32>
    %134 = vector.extract_strided_slice %124 {offsets = [0, 32], sizes = [32, 64], strides = [1, 1]} : vector<32x96xbf16> to vector<32x64xbf16>
    %cst_47 = arith.constant dense<0.000000e+00> : vector<32x64xf32>
    %135 = tpu.matmul %128, %134, %cst_47 {dimension_numbers = #tpu.dot_dimension_numbers<[1], [0], [0], [1], [0, 0, 1, 1], [], []>} : vector<32x32xbf16>, vector<32x64xbf16>, vector<32x64xf32> -> vector<32x64xf32>
    %136 = vector.extract_strided_slice %126 {offsets = [0, 32], sizes = [1, 64], strides = [1, 1]} : vector<1x96xf32> to vector<1x64xf32>
    %137 = vector.broadcast %136 : vector<1x64xf32> to vector<32x64xf32>
    %138 = arith.addf %135, %137 : vector<32x64xf32>
    %139 = vector.shape_cast %133 : vector<32x32xf32> to vector<4x8x32xf32>
    %140 = vector.extract_strided_slice %138 {offsets = [0, 0], sizes = [32, 32], strides = [1, 1]} : vector<32x64xf32> to vector<32x32xf32>
    %141 = vector.shape_cast %140 : vector<32x32xf32> to vector<4x8x32xf32>
    %142 = vector.extract_strided_slice %138 {offsets = [0, 32], sizes = [32, 32], strides = [1, 1]} : vector<32x64xf32> to vector<32x32xf32>
    %143 = vector.shape_cast %142 : vector<32x32xf32> to vector<4x8x32xf32>
    %144 = vector.extract_strided_slice %139 {offsets = [0, 0, 0], sizes = [4, 8, 8], strides = [1, 1, 1]} : vector<4x8x32xf32> to vector<4x8x8xf32>
    %145 = vector.extract_strided_slice %141 {offsets = [0, 0, 0], sizes = [4, 8, 8], strides = [1, 1, 1]} : vector<4x8x32xf32> to vector<4x8x8xf32>
    "tpu.trace_start"() <{level = 10 : i32, message = "ncd,nkd->nck"}> : () -> ()
    %cst_48 = arith.constant dense<0.000000e+00> : vector<4x8x8xf32>
    %146 = tpu.matmul %144, %145, %cst_48 {dimension_numbers = #tpu.dot_dimension_numbers<[2], [2], [1], [1], [0, 0, 0, 1, 1, 1], [0], [0]>} : vector<4x8x8xf32>, vector<4x8x8xf32>, vector<4x8x8xf32> -> vector<4x8x8xf32>
    "tpu.trace_stop"() : () -> ()
    %cst_49 = arith.constant 0.353553385 : f32
    %147 = vector.broadcast %cst_49 : f32 to vector<4x8x8xf32>
    %148 = arith.mulf %146, %147 : vector<4x8x8xf32>
    %cst_50 = arith.constant dense<0xFF800000> : vector<4x8xf32>
    %149 = vector.multi_reduction <maximumf>, %148, %cst_50 [2] : vector<4x8x8xf32> to vector<4x8xf32>
    %150 = vector.shape_cast %149 : vector<4x8xf32> to vector<4x8x1xf32>
    %151 = vector.broadcast %150 : vector<4x8x1xf32> to vector<4x8x8xf32>
    %152 = arith.subf %148, %151 : vector<4x8x8xf32>
    %153 = math.exp %152 : vector<4x8x8xf32>
    %cst_51 = arith.constant dense<0.000000e+00> : vector<4x8xf32>
    %154 = vector.multi_reduction <add>, %153, %cst_51 [2] : vector<4x8x8xf32> to vector<4x8xf32>
    %155 = vector.shape_cast %154 : vector<4x8xf32> to vector<4x8x1xf32>
    %156 = tpu.reciprocal %155 {approx = true} : vector<4x8x1xf32> -> vector<4x8x1xf32>
    %157 = vector.broadcast %156 : vector<4x8x1xf32> to vector<4x8x8xf32>
    %158 = arith.mulf %153, %157 : vector<4x8x8xf32>
    %159 = vector.extract_strided_slice %143 {offsets = [0, 0, 0], sizes = [4, 8, 8], strides = [1, 1, 1]} : vector<4x8x32xf32> to vector<4x8x8xf32>
    "tpu.trace_start"() <{level = 10 : i32, message = "nck,nkd->ncd"}> : () -> ()
    %cst_52 = arith.constant dense<0.000000e+00> : vector<4x8x8xf32>
    %160 = tpu.matmul %158, %159, %cst_52 {dimension_numbers = #tpu.dot_dimension_numbers<[2], [1], [1], [2], [0, 0, 0, 1, 1, 2], [0], [0]>} : vector<4x8x8xf32>, vector<4x8x8xf32>, vector<4x8x8xf32> -> vector<4x8x8xf32>
    "tpu.trace_stop"() : () -> ()
    %161 = vector.extract_strided_slice %139 {offsets = [0, 0, 8], sizes = [4, 8, 8], strides = [1, 1, 1]} : vector<4x8x32xf32> to vector<4x8x8xf32>
    %162 = vector.extract_strided_slice %141 {offsets = [0, 0, 8], sizes = [4, 8, 8], strides = [1, 1, 1]} : vector<4x8x32xf32> to vector<4x8x8xf32>
    "tpu.trace_start"() <{level = 10 : i32, message = "ncd,nkd->nck"}> : () -> ()
    %cst_53 = arith.constant dense<0.000000e+00> : vector<4x8x8xf32>
    %163 = tpu.matmul %161, %162, %cst_53 {dimension_numbers = #tpu.dot_dimension_numbers<[2], [2], [1], [1], [0, 0, 0, 1, 1, 1], [0], [0]>} : vector<4x8x8xf32>, vector<4x8x8xf32>, vector<4x8x8xf32> -> vector<4x8x8xf32>
    "tpu.trace_stop"() : () -> ()
    %cst_54 = arith.constant 0.353553385 : f32
    %164 = vector.broadcast %cst_54 : f32 to vector<4x8x8xf32>
    %165 = arith.mulf %163, %164 : vector<4x8x8xf32>
    %cst_55 = arith.constant dense<0xFF800000> : vector<4x8xf32>
    %166 = vector.multi_reduction <maximumf>, %165, %cst_55 [2] : vector<4x8x8xf32> to vector<4x8xf32>
    %167 = vector.shape_cast %166 : vector<4x8xf32> to vector<4x8x1xf32>
    %168 = vector.broadcast %167 : vector<4x8x1xf32> to vector<4x8x8xf32>
    %169 = arith.subf %165, %168 : vector<4x8x8xf32>
    %170 = math.exp %169 : vector<4x8x8xf32>
    %cst_56 = arith.constant dense<0.000000e+00> : vector<4x8xf32>
    %171 = vector.multi_reduction <add>, %170, %cst_56 [2] : vector<4x8x8xf32> to vector<4x8xf32>
    %172 = vector.shape_cast %171 : vector<4x8xf32> to vector<4x8x1xf32>
    %173 = tpu.reciprocal %172 {approx = true} : vector<4x8x1xf32> -> vector<4x8x1xf32>
    %174 = vector.broadcast %173 : vector<4x8x1xf32> to vector<4x8x8xf32>
    %175 = arith.mulf %170, %174 : vector<4x8x8xf32>
    %176 = vector.extract_strided_slice %143 {offsets = [0, 0, 8], sizes = [4, 8, 8], strides = [1, 1, 1]} : vector<4x8x32xf32> to vector<4x8x8xf32>
    "tpu.trace_start"() <{level = 10 : i32, message = "nck,nkd->ncd"}> : () -> ()
    %cst_57 = arith.constant dense<0.000000e+00> : vector<4x8x8xf32>
    %177 = tpu.matmul %175, %176, %cst_57 {dimension_numbers = #tpu.dot_dimension_numbers<[2], [1], [1], [2], [0, 0, 0, 1, 1, 2], [0], [0]>} : vector<4x8x8xf32>, vector<4x8x8xf32>, vector<4x8x8xf32> -> vector<4x8x8xf32>
    "tpu.trace_stop"() : () -> ()
    %178 = vector.extract_strided_slice %139 {offsets = [0, 0, 16], sizes = [4, 8, 8], strides = [1, 1, 1]} : vector<4x8x32xf32> to vector<4x8x8xf32>
    %179 = vector.extract_strided_slice %141 {offsets = [0, 0, 16], sizes = [4, 8, 8], strides = [1, 1, 1]} : vector<4x8x32xf32> to vector<4x8x8xf32>
    "tpu.trace_start"() <{level = 10 : i32, message = "ncd,nkd->nck"}> : () -> ()
    %cst_58 = arith.constant dense<0.000000e+00> : vector<4x8x8xf32>
    %180 = tpu.matmul %178, %179, %cst_58 {dimension_numbers = #tpu.dot_dimension_numbers<[2], [2], [1], [1], [0, 0, 0, 1, 1, 1], [0], [0]>} : vector<4x8x8xf32>, vector<4x8x8xf32>, vector<4x8x8xf32> -> vector<4x8x8xf32>
    "tpu.trace_stop"() : () -> ()
    %cst_59 = arith.constant 0.353553385 : f32
    %181 = vector.broadcast %cst_59 : f32 to vector<4x8x8xf32>
    %182 = arith.mulf %180, %181 : vector<4x8x8xf32>
    %cst_60 = arith.constant dense<0xFF800000> : vector<4x8xf32>
    %183 = vector.multi_reduction <maximumf>, %182, %cst_60 [2] : vector<4x8x8xf32> to vector<4x8xf32>
    %184 = vector.shape_cast %183 : vector<4x8xf32> to vector<4x8x1xf32>
    %185 = vector.broadcast %184 : vector<4x8x1xf32> to vector<4x8x8xf32>
    %186 = arith.subf %182, %185 : vector<4x8x8xf32>
    %187 = math.exp %186 : vector<4x8x8xf32>
    %cst_61 = arith.constant dense<0.000000e+00> : vector<4x8xf32>
    %188 = vector.multi_reduction <add>, %187, %cst_61 [2] : vector<4x8x8xf32> to vector<4x8xf32>
    %189 = vector.shape_cast %188 : vector<4x8xf32> to vector<4x8x1xf32>
    %190 = tpu.reciprocal %189 {approx = true} : vector<4x8x1xf32> -> vector<4x8x1xf32>
    %191 = vector.broadcast %190 : vector<4x8x1xf32> to vector<4x8x8xf32>
    %192 = arith.mulf %187, %191 : vector<4x8x8xf32>
    %193 = vector.extract_strided_slice %143 {offsets = [0, 0, 16], sizes = [4, 8, 8], strides = [1, 1, 1]} : vector<4x8x32xf32> to vector<4x8x8xf32>
    "tpu.trace_start"() <{level = 10 : i32, message = "nck,nkd->ncd"}> : () -> ()
    %cst_62 = arith.constant dense<0.000000e+00> : vector<4x8x8xf32>
    %194 = tpu.matmul %192, %193, %cst_62 {dimension_numbers = #tpu.dot_dimension_numbers<[2], [1], [1], [2], [0, 0, 0, 1, 1, 2], [0], [0]>} : vector<4x8x8xf32>, vector<4x8x8xf32>, vector<4x8x8xf32> -> vector<4x8x8xf32>
    "tpu.trace_stop"() : () -> ()
    %195 = vector.extract_strided_slice %139 {offsets = [0, 0, 24], sizes = [4, 8, 8], strides = [1, 1, 1]} : vector<4x8x32xf32> to vector<4x8x8xf32>
    %196 = vector.extract_strided_slice %141 {offsets = [0, 0, 24], sizes = [4, 8, 8], strides = [1, 1, 1]} : vector<4x8x32xf32> to vector<4x8x8xf32>
    "tpu.trace_start"() <{level = 10 : i32, message = "ncd,nkd->nck"}> : () -> ()
    %cst_63 = arith.constant dense<0.000000e+00> : vector<4x8x8xf32>
    %197 = tpu.matmul %195, %196, %cst_63 {dimension_numbers = #tpu.dot_dimension_numbers<[2], [2], [1], [1], [0, 0, 0, 1, 1, 1], [0], [0]>} : vector<4x8x8xf32>, vector<4x8x8xf32>, vector<4x8x8xf32> -> vector<4x8x8xf32>
    "tpu.trace_stop"() : () -> ()
    %cst_64 = arith.constant 0.353553385 : f32
    %198 = vector.broadcast %cst_64 : f32 to vector<4x8x8xf32>
    %199 = arith.mulf %197, %198 : vector<4x8x8xf32>
    %cst_65 = arith.constant dense<0xFF800000> : vector<4x8xf32>
    %200 = vector.multi_reduction <maximumf>, %199, %cst_65 [2] : vector<4x8x8xf32> to vector<4x8xf32>
    %201 = vector.shape_cast %200 : vector<4x8xf32> to vector<4x8x1xf32>
    %202 = vector.broadcast %201 : vector<4x8x1xf32> to vector<4x8x8xf32>
    %203 = arith.subf %199, %202 : vector<4x8x8xf32>
    %204 = math.exp %203 : vector<4x8x8xf32>
    %cst_66 = arith.constant dense<0.000000e+00> : vector<4x8xf32>
    %205 = vector.multi_reduction <add>, %204, %cst_66 [2] : vector<4x8x8xf32> to vector<4x8xf32>
    %206 = vector.shape_cast %205 : vector<4x8xf32> to vector<4x8x1xf32>
    %207 = tpu.reciprocal %206 {approx = true} : vector<4x8x1xf32> -> vector<4x8x1xf32>
    %208 = vector.broadcast %207 : vector<4x8x1xf32> to vector<4x8x8xf32>
    %209 = arith.mulf %204, %208 : vector<4x8x8xf32>
    %210 = vector.extract_strided_slice %143 {offsets = [0, 0, 24], sizes = [4, 8, 8], strides = [1, 1, 1]} : vector<4x8x32xf32> to vector<4x8x8xf32>
    "tpu.trace_start"() <{level = 10 : i32, message = "nck,nkd->ncd"}> : () -> ()
    %cst_67 = arith.constant dense<0.000000e+00> : vector<4x8x8xf32>
    %211 = tpu.matmul %209, %210, %cst_67 {dimension_numbers = #tpu.dot_dimension_numbers<[2], [1], [1], [2], [0, 0, 0, 1, 1, 2], [0], [0]>} : vector<4x8x8xf32>, vector<4x8x8xf32>, vector<4x8x8xf32> -> vector<4x8x8xf32>
    "tpu.trace_stop"() : () -> ()
    %212 = tpu.concatenate %160, %177, %194, %211 in 2 : vector<4x8x8xf32>, vector<4x8x8xf32>, vector<4x8x8xf32>, vector<4x8x8xf32> -> vector<4x8x32xf32>
    %213 = vector.shape_cast %212 : vector<4x8x32xf32> to vector<32x32xf32>
    %c1_68 = arith.constant 1 : index
    %c0_69 = arith.constant 0 : index
    %c0_70 = arith.constant 0 : index
    %214 = vector.load %arg5[%c1_68, %c0_69, %c0_70] : memref<2x32x32xbf16, #tpu.memory_space<vmem>>, vector<1x32x32xbf16>
    %215 = vector.shape_cast %214 : vector<1x32x32xbf16> to vector<32x32xbf16>
    %216 = arith.truncf %213 : vector<32x32xf32> to vector<32x32xbf16>
    %cst_71 = arith.constant dense<0.000000e+00> : vector<32x32xf32>
    %217 = tpu.matmul %216, %215, %cst_71 {dimension_numbers = #tpu.dot_dimension_numbers<[1], [0], [0], [1], [0, 0, 1, 1], [], []>} : vector<32x32xbf16>, vector<32x32xbf16>, vector<32x32xf32> -> vector<32x32xf32>
    %218 = vector.extract_strided_slice %2 {offsets = [7, 0, 0], sizes = [1, 1, 32], strides = [1, 1, 1]} : vector<9x1x32xf32> to vector<1x1x32xf32>
    %219 = vector.shape_cast %218 : vector<1x1x32xf32> to vector<1x32xf32>
    %220 = vector.broadcast %219 : vector<1x32xf32> to vector<32x32xf32>
    %221 = arith.addf %217, %220 : vector<32x32xf32>
    %222 = arith.addf %221, %122 : vector<32x32xf32>
    %223 = vector.extract_strided_slice %2 {offsets = [2, 0, 0], sizes = [1, 1, 32], strides = [1, 1, 1]} : vector<9x1x32xf32> to vector<1x1x32xf32>
    %224 = vector.shape_cast %223 : vector<1x1x32xf32> to vector<1x32xf32>
    %225 = vector.extract_strided_slice %2 {offsets = [3, 0, 0], sizes = [1, 1, 32], strides = [1, 1, 1]} : vector<9x1x32xf32> to vector<1x1x32xf32>
    %226 = vector.shape_cast %225 : vector<1x1x32xf32> to vector<1x32xf32>
    %cst_72 = arith.constant dense<0.000000e+00> : vector<32xf32>
    %227 = vector.multi_reduction <add>, %222, %cst_72 [1] : vector<32x32xf32> to vector<32xf32>
    %228 = vector.shape_cast %227 : vector<32xf32> to vector<32x1xf32>
    %cst_73 = arith.constant 3.200000e+01 : f32
    %229 = vector.broadcast %cst_73 : f32 to vector<32x1xf32>
    %230 = arith.divf %228, %229 : vector<32x1xf32>
    %231 = arith.mulf %222, %222 : vector<32x32xf32>
    %cst_74 = arith.constant dense<0.000000e+00> : vector<32xf32>
    %232 = vector.multi_reduction <add>, %231, %cst_74 [1] : vector<32x32xf32> to vector<32xf32>
    %233 = vector.shape_cast %232 : vector<32xf32> to vector<32x1xf32>
    %cst_75 = arith.constant 3.200000e+01 : f32
    %234 = vector.broadcast %cst_75 : f32 to vector<32x1xf32>
    %235 = arith.divf %233, %234 : vector<32x1xf32>
    %236 = arith.mulf %230, %230 : vector<32x1xf32>
    %237 = arith.subf %235, %236 : vector<32x1xf32>
    %238 = vector.broadcast %230 : vector<32x1xf32> to vector<32x32xf32>
    %239 = arith.subf %222, %238 : vector<32x32xf32>
    %cst_76 = arith.constant 9.99999974E-6 : f32
    %240 = vector.broadcast %cst_76 : f32 to vector<32x1xf32>
    %241 = arith.addf %237, %240 : vector<32x1xf32>
    %242 = math.rsqrt %241 : vector<32x1xf32>
    %243 = vector.broadcast %242 : vector<32x1xf32> to vector<32x32xf32>
    %244 = arith.mulf %239, %243 : vector<32x32xf32>
    %245 = vector.broadcast %224 : vector<1x32xf32> to vector<32x32xf32>
    %246 = arith.mulf %244, %245 : vector<32x32xf32>
    %247 = vector.broadcast %226 : vector<1x32xf32> to vector<32x32xf32>
    %248 = arith.addf %246, %247 : vector<32x32xf32>
    %249 = arith.truncf %248 : vector<32x32xf32> to vector<32x32xbf16>
    %c0_77 = arith.constant 0 : index
    %c0_78 = arith.constant 0 : index
    %250 = vector.load %arg6[%c0_77, %c0_78] : memref<32x2048xbf16, #tpu.memory_space<vmem>>, vector<32x2048xbf16>
    %cst_79 = arith.constant dense<0.000000e+00> : vector<32x2048xf32>
    %251 = tpu.matmul %249, %250, %cst_79 {dimension_numbers = #tpu.dot_dimension_numbers<[1], [0], [0], [1], [0, 0, 1, 1], [], []>} : vector<32x32xbf16>, vector<32x2048xbf16>, vector<32x2048xf32> -> vector<32x2048xf32>
    %c0_80 = arith.constant 0 : index
    %c0_81 = arith.constant 0 : index
    %252 = vector.load %arg7[%c0_80, %c0_81] : memref<1x2048xf32, #tpu.memory_space<vmem>>, vector<1x2048xf32>
    %253 = vector.broadcast %252 : vector<1x2048xf32> to vector<32x2048xf32>
    %254 = arith.addf %251, %253 : vector<32x2048xf32>
    %cst_82 = arith.constant 0.000000e+00 : f32
    %255 = vector.broadcast %cst_82 : f32 to vector<32x2048xf32>
    %256 = arith.maximumf %254, %255 : vector<32x2048xf32>
    %257 = arith.truncf %256 : vector<32x2048xf32> to vector<32x2048xbf16>
    %c0_83 = arith.constant 0 : index
    %c0_84 = arith.constant 0 : index
    %258 = vector.load %arg8[%c0_83, %c0_84] : memref<2048x32xbf16, #tpu.memory_space<vmem>>, vector<2048x32xbf16>
    %cst_85 = arith.constant dense<0.000000e+00> : vector<32x32xf32>
    %259 = tpu.matmul %257, %258, %cst_85 {dimension_numbers = #tpu.dot_dimension_numbers<[1], [0], [0], [1], [0, 0, 1, 1], [], []>} : vector<32x2048xbf16>, vector<2048x32xbf16>, vector<32x32xf32> -> vector<32x32xf32>
    %260 = vector.extract_strided_slice %2 {offsets = [8, 0, 0], sizes = [1, 1, 32], strides = [1, 1, 1]} : vector<9x1x32xf32> to vector<1x1x32xf32>
    %261 = vector.shape_cast %260 : vector<1x1x32xf32> to vector<1x32xf32>
    %262 = vector.broadcast %261 : vector<1x32xf32> to vector<32x32xf32>
    %263 = arith.addf %259, %262 : vector<32x32xf32>
    %264 = arith.addf %263, %248 : vector<32x32xf32>
    %265 = vector.extract_strided_slice %2 {offsets = [4, 0, 0], sizes = [1, 1, 32], strides = [1, 1, 1]} : vector<9x1x32xf32> to vector<1x1x32xf32>
    %266 = vector.shape_cast %265 : vector<1x1x32xf32> to vector<1x32xf32>
    %267 = vector.extract_strided_slice %2 {offsets = [5, 0, 0], sizes = [1, 1, 32], strides = [1, 1, 1]} : vector<9x1x32xf32> to vector<1x1x32xf32>
    %268 = vector.shape_cast %267 : vector<1x1x32xf32> to vector<1x32xf32>
    %cst_86 = arith.constant dense<0.000000e+00> : vector<32xf32>
    %269 = vector.multi_reduction <add>, %264, %cst_86 [1] : vector<32x32xf32> to vector<32xf32>
    %270 = vector.shape_cast %269 : vector<32xf32> to vector<32x1xf32>
    %cst_87 = arith.constant 3.200000e+01 : f32
    %271 = vector.broadcast %cst_87 : f32 to vector<32x1xf32>
    %272 = arith.divf %270, %271 : vector<32x1xf32>
    %273 = arith.mulf %264, %264 : vector<32x32xf32>
    %cst_88 = arith.constant dense<0.000000e+00> : vector<32xf32>
    %274 = vector.multi_reduction <add>, %273, %cst_88 [1] : vector<32x32xf32> to vector<32xf32>
    %275 = vector.shape_cast %274 : vector<32xf32> to vector<32x1xf32>
    %cst_89 = arith.constant 3.200000e+01 : f32
    %276 = vector.broadcast %cst_89 : f32 to vector<32x1xf32>
    %277 = arith.divf %275, %276 : vector<32x1xf32>
    %278 = arith.mulf %272, %272 : vector<32x1xf32>
    %279 = arith.subf %277, %278 : vector<32x1xf32>
    %280 = vector.broadcast %272 : vector<32x1xf32> to vector<32x32xf32>
    %281 = arith.subf %264, %280 : vector<32x32xf32>
    %cst_90 = arith.constant 9.99999974E-6 : f32
    %282 = vector.broadcast %cst_90 : f32 to vector<32x1xf32>
    %283 = arith.addf %279, %282 : vector<32x1xf32>
    %284 = math.rsqrt %283 : vector<32x1xf32>
    %285 = vector.broadcast %284 : vector<32x1xf32> to vector<32x32xf32>
    %286 = arith.mulf %281, %285 : vector<32x32xf32>
    %287 = vector.broadcast %266 : vector<1x32xf32> to vector<32x32xf32>
    %288 = arith.mulf %286, %287 : vector<32x32xf32>
    %289 = vector.broadcast %268 : vector<1x32xf32> to vector<32x32xf32>
    %290 = arith.addf %288, %289 : vector<32x32xf32>
    %c0_91 = arith.constant 0 : index
    %c0_92 = arith.constant 0 : index
    %291 = vector.load %arg10[%c0_91, %c0_92] : memref<32x32xf32, #tpu.memory_space<vmem>>, vector<32x32xf32>
    tpu.vector_store %arg10[%c0_91, %c0_92], %290 {strides = array<i32>} : memref<32x32xf32, #tpu.memory_space<vmem>>, vector<32x32xf32>,
    return
  }
  func.func @transform_0(%arg0: i32) -> (i32, i32) {
    %c0_i32 = arith.constant 0 : i32
    %c0_i32_0 = arith.constant 0 : i32
    return %arg0, %c0_i32 : i32, i32
  }
  func.func @transform_1(%arg0: i32) -> (i32, i32) {
    %c0_i32 = arith.constant 0 : i32
    %c0_i32_0 = arith.constant 0 : i32
    return %arg0, %c0_i32 : i32, i32
  }
  func.func @transform_2(%arg0: i32) -> (i32, i32, i32) {
    %c0_i32 = arith.constant 0 : i32
    %c0_i32_0 = arith.constant 0 : i32
    %c0_i32_1 = arith.constant 0 : i32
    %c0_i32_2 = arith.constant 0 : i32
    return %c0_i32, %c0_i32_0, %c0_i32_1 : i32, i32, i32
  }
  func.func @transform_3(%arg0: i32) -> (i32, i32, i32) {
    %c0_i32 = arith.constant 0 : i32
    %c0_i32_0 = arith.constant 0 : i32
    %c0_i32_1 = arith.constant 0 : i32
    %c0_i32_2 = arith.constant 0 : i32
    return %c0_i32, %c0_i32_0, %c0_i32_1 : i32, i32, i32
  }
  func.func @transform_4(%arg0: i32) -> (i32, i32, i32) {
    %c0_i32 = arith.constant 0 : i32
    %c0_i32_0 = arith.constant 0 : i32
    %c0_i32_1 = arith.constant 0 : i32
    %c0_i32_2 = arith.constant 0 : i32
    return %c0_i32, %c0_i32_0, %c0_i32_1 : i32, i32, i32
  }
  func.func @transform_5(%arg0: i32) -> (i32, i32) {
    %c0_i32 = arith.constant 0 : i32
    %c0_i32_0 = arith.constant 0 : i32
    %c0_i32_1 = arith.constant 0 : i32
    return %c0_i32, %c0_i32_0 : i32, i32
  }
  func.func @transform_6(%arg0: i32) -> (i32, i32) {
    %c0_i32 = arith.constant 0 : i32
    %c0_i32_0 = arith.constant 0 : i32
    %c0_i32_1 = arith.constant 0 : i32
    return %c0_i32, %c0_i32_0 : i32, i32
  }
  func.func @transform_7(%arg0: i32) -> (i32, i32) {
    %c0_i32 = arith.constant 0 : i32
    %c0_i32_0 = arith.constant 0 : i32
    %c0_i32_1 = arith.constant 0 : i32
    return %c0_i32, %c0_i32_0 : i32, i32
  }
  func.func @transform_8(%arg0: i32) -> (i32, i32, i32) {
    %c0_i32 = arith.constant 0 : i32
    %c0_i32_0 = arith.constant 0 : i32
    %c0_i32_1 = arith.constant 0 : i32
    %c0_i32_2 = arith.constant 0 : i32
    return %c0_i32, %c0_i32_0, %c0_i32_1 : i32, i32, i32
  }
  func.func @transform_9(%arg0: i32) -> (i32, i32) {
    %c0_i32 = arith.constant 0 : i32
    %c0_i32_0 = arith.constant 0 : i32
    return %arg0, %c0_i32 : i32, i32
  }
}

</mosaic_0001>

<llo_original>
// kernel: tpu_custom_call.1
$region0: #{tpu_custom_call.1}
  #allocation0 [shape = 'u32[]', space=smem, size = 0x4, offset = 0x4, fixed_abs, tag = 'smem constant byte address 0x4 - core index']
  #allocation1 [shape = 'u32[72,128]{1,0:T(1,128)}', space=vmem, size = 0x9000, scoped, tag = 'internal scratch']
  %s0 = inlined_call_operand.vmem [shape: f32[32,32], index: 0, kind: input, shape index: {}]
  %s1 = inlined_call_operand.vmem [shape: f32[32,32], index: 1, kind: input, shape index: {}]
  %s2 = inlined_call_operand.vmem [shape: bf16[2,32,96], index: 2, kind: input, shape index: {}]
  %s3 = inlined_call_operand.vmem [shape: f32[2,1,96], index: 3, kind: input, shape index: {}]
  %s4 = inlined_call_operand.vmem [shape: bf16[2,32,32], index: 4, kind: input, shape index: {}]
  %s5 = inlined_call_operand.vmem [shape: bf16[32,2048], index: 5, kind: input, shape index: {}]
  %s6 = inlined_call_operand.vmem [shape: f32[1,2048], index: 6, kind: input, shape index: {}]
  %s7 = inlined_call_operand.vmem [shape: bf16[2048,32], index: 7, kind: input, shape index: {}]
  %s8 = inlined_call_operand.vmem [shape: f32[9,1,32], index: 8, kind: input, shape index: {}]
  %s9 = inlined_call_operand.hbm [shape: f32[32,32], index: 9, kind: output, shape index: {}]
  %s10 = sld [smem:[#allocation0]]
  $region46: #{tpu_custom_call.1} parent=0
    _
  %s12 = ssub.s32 1, %s10
  %s13 = scalar_select 0, %s12, %s10
  $region1: #{tpu_custom_call.1} parent=0
    #allocation2 [shape = 'u8[16384]{0}', space=vmem, size = 0x4000, scoped, tag = 'output window, operand 0, single buffered']
    #allocation3 [shape = 's32[1]{0}', space=sflag, size = 0x4, scoped, tag = 'scoped memory for tpu_custom_call.1']
    %14 = vsyncpa [#allocation3], 0
    // Predicated region
    $region2: #{tpu_custom_call.1} parent=1 // pred_check
      _
    $region3: #{tpu_custom_call.1} parent=1 // pred_check_branch
      %16 = sbr.rel (0) target = $region5
    $region4: #{tpu_custom_call.1} parent=1 // pred_region
      _
    $region5: #{tpu_custom_call.1} parent=1 // pred_fallthru
      _
    // Predicated region
    $region6: #{tpu_custom_call.1} parent=1 // pred_check
      _
    $region7: #{tpu_custom_call.1} parent=1 // pred_check_branch
      %18 = sbr.rel (0) target = $region9
    $region8: #{tpu_custom_call.1} parent=1 // pred_region
      _
    $region9: #{tpu_custom_call.1} parent=1 // pred_fallthru
      _
    // Predicated region
    $region10: #{tpu_custom_call.1} parent=1 // pred_check
      _
    $region11: #{tpu_custom_call.1} parent=1 // pred_check_branch
      %20 = sbr.rel (0) target = $region13
    $region12: #{tpu_custom_call.1} parent=1 // pred_region
      _
    $region13: #{tpu_custom_call.1} parent=1 // pred_fallthru
      _
    // Predicated region
    $region14: #{tpu_custom_call.1} parent=1 // pred_check
      _
    $region15: #{tpu_custom_call.1} parent=1 // pred_check_branch
      %22 = sbr.rel (0) target = $region17
    $region16: #{tpu_custom_call.1} parent=1 // pred_region
      _
    $region17: #{tpu_custom_call.1} parent=1 // pred_fallthru
      _
    // Predicated region
    $region18: #{tpu_custom_call.1} parent=1 // pred_check
      _
    $region19: #{tpu_custom_call.1} parent=1 // pred_check_branch
      %24 = sbr.rel (0) target = $region21
    $region20: #{tpu_custom_call.1} parent=1 // pred_region
      _
    $region21: #{tpu_custom_call.1} parent=1 // pred_fallthru
      _
    // Predicated region
    $region22: #{tpu_custom_call.1} parent=1 // pred_check
      _
    $region23: #{tpu_custom_call.1} parent=1 // pred_check_branch
      %26 = sbr.rel (0) target = $region25
    $region24: #{tpu_custom_call.1} parent=1 // pred_region
      _
    $region25: #{tpu_custom_call.1} parent=1 // pred_fallthru
      _
    // Predicated region
    $region26: #{tpu_custom_call.1} parent=1 // pred_check
      _
    $region27: #{tpu_custom_call.1} parent=1 // pred_check_branch
      %28 = sbr.rel (0) target = $region29
    $region28: #{tpu_custom_call.1} parent=1 // pred_region
      _
    $region29: #{tpu_custom_call.1} parent=1 // pred_fallthru
      _
    // Predicated region
    $region30: #{tpu_custom_call.1} parent=1 // pred_check
      _
    $region31: #{tpu_custom_call.1} parent=1 // pred_check_branch
      %30 = sbr.rel (0) target = $region33
    $region32: #{tpu_custom_call.1} parent=1 // pred_region
      _
    $region33: #{tpu_custom_call.1} parent=1 // pred_fallthru
      _
    // Predicated region
    $region34: #{tpu_custom_call.1} parent=1 // pred_check
      _
    $region35: #{tpu_custom_call.1} parent=1 // pred_check_branch
      %32 = sbr.rel (0) target = $region37
    $region36: #{tpu_custom_call.1} parent=1 // pred_region
      _
    $region37: #{tpu_custom_call.1} parent=1 // pred_fallthru
      _
    %v34 = vld [vmem:[%s0] sm:$0xff]
    %v35 = vld [vmem:[%s0 + $0x8] sm:$0xff]
    %v36 = vld [vmem:[%s0 + $0x10] sm:$0xff]
    %v37 = vld [vmem:[%s0 + $0x18] sm:$0xff]
    %v38 = vld [vmem:[%s1] sm:$0xff]
    %v39 = vld [vmem:[%s1 + $0x8] sm:$0xff]
    %v40 = vld [vmem:[%s1 + $0x10] sm:$0xff]
    %v41 = vld [vmem:[%s1 + $0x18] sm:$0xff]
    %v42 = vld [vmem:[%s8] sm:$0x1]
    %v43 = vld [vmem:[%s8 + $0x1] sm:$0x1]
    %v44 = vld [vmem:[%s8 + $0x2] sm:$0x1]
    %v45 = vld [vmem:[%s8 + $0x3] sm:$0x1]
    %v46 = vld [vmem:[%s8 + $0x4] sm:$0x1]
    %v47 = vld [vmem:[%s8 + $0x5] sm:$0x1]
    %v48 = vld [vmem:[%s8 + $0x6] sm:$0x1]
    %v49 = vld [vmem:[%s8 + $0x7] sm:$0x1]
    %v50 = vld [vmem:[%s8 + $0x8] sm:$0x1]
    %v51 = vld [vmem:[%s2] sm:$0xf]
    %v52 = vld [vmem:[%s2 + $0x4] sm:$0xf]
    %v53 = vld [vmem:[%s2 + $0x8] sm:$0xf]
    %v54 = vld [vmem:[%s2 + $0xc] sm:$0xf]
    %v55 = vld [vmem:[%s3] sm:$0x1]
    %v56 = vpack.c.bf16 %v35, %v34
    %v57 = vpack.c.bf16 %v37, %v36
    %v59 = vperm.slane %v55, 0
    %v65 = vunpack.c.l.b16 %v51
    %v66 = vunpack.c.l.b16 %v52
    %v67 = vunpack.c.l.b16 %v53
    %v68 = vunpack.c.l.b16 %v54
    %v69 = vpack.c.b16 %v66, %v65
    %v70 = vpack.c.b16 %v68, %v67
    %vm73 = vcmask 261120
    %v75 = vsel %vm73, %v56, 0
    %v78 = vsel %vm73, %v57, 0
    %80 = vmatpush.bf16.msra.mxu0 0
    %81 = vmatpush.bf16.msra.mxu0 0
    %82 = vmatpush.bf16.msra.mxu0 0
    %83 = vmatpush.bf16.msra.mxu0 0
    %84 = vmatpush.bf16.msra.mxu0 0
    %85 = vmatpush.bf16.msra.mxu0 0
    %86 = vmatpush.bf16.msra.mxu0 %v70
    %87 = vmatpush.bf16.msra.mxu0 %v69
    %88 = vmatmul.bf16.gmra.mxu0 %v75
    %v89 = vpop.f32.mrf.mxu0
    %v90 = vadd.f32 %v59, %v89
    %v91 = vpop.f32.mrf.mxu0
    %v92 = vadd.f32 %v59, %v91
    %93 = vmatmul.bf16.gmra.mxu0 %v78
    %v94 = vpop.f32.mrf.mxu0
    %v95 = vadd.f32 %v59, %v94
    %v96 = vpop.f32.mrf.mxu0
    %v97 = vadd.f32 %v59, %v96
    %98 = vdwg.mxu0
    %100 = vrot.lane.b32.xlu0 %v90, 96
    %v101 = vpop.permute.xlu0 %100
    %vm102 = vcmask 64512
    %v103 = vsel %vm102, %v90, 0
    %v105 = vsel %vm102, %v101, 0
    %107 = vmatpush.xpose.msra.mxu0 0.0
    %108 = vmatpush.xpose.msra.mxu0 0.0
    %109 = vmatpush.xpose.msra.mxu0 0.0
    %110 = vmatpush.xpose.msra.mxu0 0.0
    %111 = vmatpush.xpose.msra.mxu0 0.0
    %112 = vmatpush.xpose.msra.mxu0 0.0
    %113 = vmatpush.xpose.msra.mxu0 0.0
    %114 = vmatpush.xpose.msra.mxu0 0.0
    %115 = vmatpush.xpose.msra.mxu0 0.0
    %116 = vmatpush.xpose.msra.mxu0 0.0
    %117 = vmatpush.xpose.msra.mxu0 0.0
    %118 = vmatpush.xpose.msra.mxu0 0.0
    %119 = vmatpush.xpose.msra.mxu0 0.0
    %120 = vmatpush.xpose.msra.mxu0 0.0
    %121 = vmatpush.xpose.msra.mxu0 0.0
    %122 = vmatpush.xpose.msra.mxu0 %v105
    %123 = vmatmul.f32.gmra.mxu0 %v103
    %v124 = vpop.f32.mrf.mxu0
    %v125 = vadd.f32 0.0, %v124
    %126 = vdwg.mxu0
    %128 = vrot.lane.b32.xlu0 %v92, 96
    %v129 = vpop.permute.xlu0 %128
    %v130 = vsel %vm102, %v92, 0
    %v132 = vsel %vm102, %v129, 0
    %134 = vmatpush.xpose.msra.mxu0 0.0
    %135 = vmatpush.xpose.msra.mxu0 0.0
    %136 = vmatpush.xpose.msra.mxu0 0.0
    %137 = vmatpush.xpose.msra.mxu0 0.0
    %138 = vmatpush.xpose.msra.mxu0 0.0
    %139 = vmatpush.xpose.msra.mxu0 0.0
    %140 = vmatpush.xpose.msra.mxu0 0.0
    %141 = vmatpush.xpose.msra.mxu0 0.0
    %142 = vmatpush.xpose.msra.mxu0 0.0
    %143 = vmatpush.xpose.msra.mxu0 0.0
    %144 = vmatpush.xpose.msra.mxu0 0.0
    %145 = vmatpush.xpose.msra.mxu0 0.0
    %146 = vmatpush.xpose.msra.mxu0 0.0
    %147 = vmatpush.xpose.msra.mxu0 0.0
    %148 = vmatpush.xpose.msra.mxu0 0.0
    %149 = vmatpush.xpose.msra.mxu0 %v132
    %150 = vmatmul.f32.gmra.mxu0 %v130
    %v151 = vpop.f32.mrf.mxu0
    %v152 = vadd.f32 0.0, %v151
    %153 = vdwg.mxu0
    %155 = vrot.lane.b32.xlu0 %v95, 96
    %v156 = vpop.permute.xlu0 %155
    %v157 = vsel %vm102, %v95, 0
    %v159 = vsel %vm102, %v156, 0
    %161 = vmatpush.xpose.msra.mxu0 0.0
    %162 = vmatpush.xpose.msra.mxu0 0.0
    %163 = vmatpush.xpose.msra.mxu0 0.0
    %164 = vmatpush.xpose.msra.mxu0 0.0
    %165 = vmatpush.xpose.msra.mxu0 0.0
    %166 = vmatpush.xpose.msra.mxu0 0.0
    %167 = vmatpush.xpose.msra.mxu0 0.0
    %168 = vmatpush.xpose.msra.mxu0 0.0
    %169 = vmatpush.xpose.msra.mxu0 0.0
    %170 = vmatpush.xpose.msra.mxu0 0.0
    %171 = vmatpush.xpose.msra.mxu0 0.0
    %172 = vmatpush.xpose.msra.mxu0 0.0
    %173 = vmatpush.xpose.msra.mxu0 0.0
    %174 = vmatpush.xpose.msra.mxu0 0.0
    %175 = vmatpush.xpose.msra.mxu0 0.0
    %176 = vmatpush.xpose.msra.mxu0 %v159
    %177 = vmatmul.f32.gmra.mxu0 %v157
    %v178 = vpop.f32.mrf.mxu0
    %v179 = vadd.f32 0.0, %v178
    %180 = vdwg.mxu0
    %182 = vrot.lane.b32.xlu0 %v97, 96
    %v183 = vpop.permute.xlu0 %182
    %v184 = vsel %vm102, %v97, 0
    %v186 = vsel %vm102, %v183, 0
    %188 = vmatpush.xpose.msra.mxu0 0.0
    %189 = vmatpush.xpose.msra.mxu0 0.0
    %190 = vmatpush.xpose.msra.mxu0 0.0
    %191 = vmatpush.xpose.msra.mxu0 0.0
    %192 = vmatpush.xpose.msra.mxu0 0.0
    %193 = vmatpush.xpose.msra.mxu0 0.0
    %194 = vmatpush.xpose.msra.mxu0 0.0
    %195 = vmatpush.xpose.msra.mxu0 0.0
    %196 = vmatpush.xpose.msra.mxu0 0.0
    %197 = vmatpush.xpose.msra.mxu0 0.0
    %198 = vmatpush.xpose.msra.mxu0 0.0
    %199 = vmatpush.xpose.msra.mxu0 0.0
    %200 = vmatpush.xpose.msra.mxu0 0.0
    %201 = vmatpush.xpose.msra.mxu0 0.0
    %202 = vmatpush.xpose.msra.mxu0 0.0
    %203 = vmatpush.xpose.msra.mxu0 %v186
    %204 = vmatmul.f32.gmra.mxu0 %v184
    %v205 = vpop.f32.mrf.mxu0
    %v206 = vadd.f32 0.0, %v205
    %207 = vdwg.mxu0
    %v208 = vmul.f32 %v125, 0.35355338
    %v209 = vmul.f32 %v152, 0.35355338
    %v210 = vmul.f32 %v179, 0.35355338
    %v211 = vmul.f32 %v206, 0.35355338
    %v212 = vsel %vm102, %v208, -inf
    %213 = vmax.xlane.f32.xlu0 %v212
    %v214 = vpop.xlane.xlu0 %213
    %v215 = vsel %vm102, %v209, -inf
    %216 = vmax.xlane.f32.xlu0 %v215
    %v217 = vpop.xlane.xlu0 %216
    %v218 = vsel %vm102, %v210, -inf
    %219 = vmax.xlane.f32.xlu0 %v218
    %v220 = vpop.xlane.xlu0 %219
    %v221 = vsel %vm102, %v211, -inf
    %222 = vmax.xlane.f32.xlu0 %v221
    %v223 = vpop.xlane.xlu0 %222
    %v224 = vsub.f32 %v208, %v214
    %v225 = vsub.f32 %v209, %v217
    %v226 = vsub.f32 %v210, %v220
    %v227 = vsub.f32 %v211, %v223
    %v228 = vmul.f32 %v224, 1.442695
    %v229 = vpow.pop %v228
    %v230 = vmul.f32 %v225, 1.442695
    %v231 = vpow.pop %v230
    %v232 = vmul.f32 %v226, 1.442695
    %v233 = vpow.pop %v232
    %v234 = vmul.f32 %v227, 1.442695
    %v235 = vpow.pop %v234
    %v236 = vsel %vm102, %v229, 0.0
    %237 = vadd.xlane.f32.xlu0 %v236
    %v238 = vpop.xlane.xlu0 %237
    %v239 = vsel %vm102, %v231, 0.0
    %240 = vadd.xlane.f32.xlu0 %v239
    %v241 = vpop.xlane.xlu0 %240
    %v242 = vsel %vm102, %v233, 0.0
    %243 = vadd.xlane.f32.xlu0 %v242
    %v244 = vpop.xlane.xlu0 %243
    %v245 = vsel %vm102, %v235, 0.0
    %246 = vadd.xlane.f32.xlu0 %v245
    %v247 = vpop.xlane.xlu0 %246
    %v248 = vrcp.pop %v238
    %v249 = vrcp.pop %v241
    %v250 = vrcp.pop %v244
    %v251 = vrcp.pop %v247
    %v252 = vmul.f32 %v229, %v248
    %v253 = vmul.f32 %v231, %v249
    %v254 = vmul.f32 %v233, %v250
    %v255 = vmul.f32 %v235, %v251
    %256 = vrot.lane.b32.xlu0 %v90, 64
    %v257 = vpop.permute.xlu0 %256
    %v260 = vsel %vm102, %v252, 0
    %262 = vmatpush.msra.mxu0 0.0
    %263 = vmatpush.msra.mxu0 0.0
    %264 = vmatpush.msra.mxu0 0.0
    %265 = vmatpush.msra.mxu0 0.0
    %266 = vmatpush.msra.mxu0 0.0
    %267 = vmatpush.msra.mxu0 0.0
    %268 = vmatpush.msra.mxu0 0.0
    %269 = vmatpush.msra.mxu0 0.0
    %270 = vmatpush.msra.mxu0 0.0
    %271 = vmatpush.msra.mxu0 0.0
    %272 = vmatpush.msra.mxu0 0.0
    %273 = vmatpush.msra.mxu0 0.0
    %274 = vmatpush.msra.mxu0 0.0
    %275 = vmatpush.msra.mxu0 0.0
    %276 = vmatpush.msra.mxu0 0.0
    %277 = vmatpush.msra.mxu0 %v257
    %278 = vmatmul.f32.gmra.mxu0 %v260
    %v279 = vpop.f32.mrf.mxu0
    %v280 = vadd.f32 0.0, %v279
    %281 = vdwg.mxu0
    %282 = vrot.lane.b32.xlu0 %v92, 64
    %v283 = vpop.permute.xlu0 %282
    %v286 = vsel %vm102, %v253, 0
    %288 = vmatpush.msra.mxu0 0.0
    %289 = vmatpush.msra.mxu0 0.0
    %290 = vmatpush.msra.mxu0 0.0
    %291 = vmatpush.msra.mxu0 0.0
    %292 = vmatpush.msra.mxu0 0.0
    %293 = vmatpush.msra.mxu0 0.0
    %294 = vmatpush.msra.mxu0 0.0
    %295 = vmatpush.msra.mxu0 0.0
    %296 = vmatpush.msra.mxu0 0.0
    %297 = vmatpush.msra.mxu0 0.0
    %298 = vmatpush.msra.mxu0 0.0
    %299 = vmatpush.msra.mxu0 0.0
    %300 = vmatpush.msra.mxu0 0.0
    %301 = vmatpush.msra.mxu0 0.0
    %302 = vmatpush.msra.mxu0 0.0
    %303 = vmatpush.msra.mxu0 %v283
    %304 = vmatmul.f32.gmra.mxu0 %v286
    %v305 = vpop.f32.mrf.mxu0
    %v306 = vadd.f32 0.0, %v305
    %307 = vdwg.mxu0
    %308 = vrot.lane.b32.xlu0 %v95, 64
    %v309 = vpop.permute.xlu0 %308
    %v312 = vsel %vm102, %v254, 0
    %314 = vmatpush.msra.mxu0 0.0
    %315 = vmatpush.msra.mxu0 0.0
    %316 = vmatpush.msra.mxu0 0.0
    %317 = vmatpush.msra.mxu0 0.0
    %318 = vmatpush.msra.mxu0 0.0
    %319 = vmatpush.msra.mxu0 0.0
    %320 = vmatpush.msra.mxu0 0.0
    %321 = vmatpush.msra.mxu0 0.0
    %322 = vmatpush.msra.mxu0 0.0
    %323 = vmatpush.msra.mxu0 0.0
    %324 = vmatpush.msra.mxu0 0.0
    %325 = vmatpush.msra.mxu0 0.0
    %326 = vmatpush.msra.mxu0 0.0
    %327 = vmatpush.msra.mxu0 0.0
    %328 = vmatpush.msra.mxu0 0.0
    %329 = vmatpush.msra.mxu0 %v309
    %330 = vmatmul.f32.gmra.mxu0 %v312
    %v331 = vpop.f32.mrf.mxu0
    %v332 = vadd.f32 0.0, %v331
    %333 = vdwg.mxu0
    %334 = vrot.lane.b32.xlu0 %v97, 64
    %v335 = vpop.permute.xlu0 %334
    %v338 = vsel %vm102, %v255, 0
    %340 = vmatpush.msra.mxu0 0.0
    %341 = vmatpush.msra.mxu0 0.0
    %342 = vmatpush.msra.mxu0 0.0
    %343 = vmatpush.msra.mxu0 0.0
    %344 = vmatpush.msra.mxu0 0.0
    %345 = vmatpush.msra.mxu0 0.0
    %346 = vmatpush.msra.mxu0 0.0
    %347 = vmatpush.msra.mxu0 0.0
    %348 = vmatpush.msra.mxu0 0.0
    %349 = vmatpush.msra.mxu0 0.0
    %350 = vmatpush.msra.mxu0 0.0
    %351 = vmatpush.msra.mxu0 0.0
    %352 = vmatpush.msra.mxu0 0.0
    %353 = vmatpush.msra.mxu0 0.0
    %354 = vmatpush.msra.mxu0 0.0
    %355 = vmatpush.msra.mxu0 %v335
    %356 = vmatmul.f32.gmra.mxu0 %v338
    %v357 = vpop.f32.mrf.mxu0
    %v358 = vadd.f32 0.0, %v357
    %359 = vdwg.mxu0
    %360 = vrot.lane.b32.xlu0 %v90, 120
    %v361 = vpop.permute.xlu0 %360
    %362 = vrot.lane.b32.xlu0 %v90, 88
    %v363 = vpop.permute.xlu0 %362
    %v364 = vsel %vm102, %v361, 0
    %v366 = vsel %vm102, %v363, 0
    %368 = vmatpush.xpose.msra.mxu0 0.0
    %369 = vmatpush.xpose.msra.mxu0 0.0
    %370 = vmatpush.xpose.msra.mxu0 0.0
    %371 = vmatpush.xpose.msra.mxu0 0.0
    %372 = vmatpush.xpose.msra.mxu0 0.0
    %373 = vmatpush.xpose.msra.mxu0 0.0
    %374 = vmatpush.xpose.msra.mxu0 0.0
    %375 = vmatpush.xpose.msra.mxu0 0.0
    %376 = vmatpush.xpose.msra.mxu0 0.0
    %377 = vmatpush.xpose.msra.mxu0 0.0
    %378 = vmatpush.xpose.msra.mxu0 0.0
    %379 = vmatpush.xpose.msra.mxu0 0.0
    %380 = vmatpush.xpose.msra.mxu0 0.0
    %381 = vmatpush.xpose.msra.mxu0 0.0
    %382 = vmatpush.xpose.msra.mxu0 0.0
    %383 = vmatpush.xpose.msra.mxu0 %v366
    %384 = vmatmul.f32.gmra.mxu0 %v364
    %v385 = vpop.f32.mrf.mxu0
    %v386 = vadd.f32 0.0, %v385
    %387 = vdwg.mxu0
    %388 = vrot.lane.b32.xlu0 %v92, 120
    %v389 = vpop.permute.xlu0 %388
    %390 = vrot.lane.b32.xlu0 %v92, 88
    %v391 = vpop.permute.xlu0 %390
    %v392 = vsel %vm102, %v389, 0
    %v394 = vsel %vm102, %v391, 0
    %396 = vmatpush.xpose.msra.mxu0 0.0
    %397 = vmatpush.xpose.msra.mxu0 0.0
    %398 = vmatpush.xpose.msra.mxu0 0.0
    %399 = vmatpush.xpose.msra.mxu0 0.0
    %400 = vmatpush.xpose.msra.mxu0 0.0
    %401 = vmatpush.xpose.msra.mxu0 0.0
    %402 = vmatpush.xpose.msra.mxu0 0.0
    %403 = vmatpush.xpose.msra.mxu0 0.0
    %404 = vmatpush.xpose.msra.mxu0 0.0
    %405 = vmatpush.xpose.msra.mxu0 0.0
    %406 = vmatpush.xpose.msra.mxu0 0.0
    %407 = vmatpush.xpose.msra.mxu0 0.0
    %408 = vmatpush.xpose.msra.mxu0 0.0
    %409 = vmatpush.xpose.msra.mxu0 0.0
    %410 = vmatpush.xpose.msra.mxu0 0.0
    %411 = vmatpush.xpose.msra.mxu0 %v394
    %412 = vmatmul.f32.gmra.mxu0 %v392
    %v413 = vpop.f32.mrf.mxu0
    %v414 = vadd.f32 0.0, %v413
    %415 = vdwg.mxu0
    %416 = vrot.lane.b32.xlu0 %v95, 120
    %v417 = vpop.permute.xlu0 %416
    %418 = vrot.lane.b32.xlu0 %v95, 88
    %v419 = vpop.permute.xlu0 %418
    %v420 = vsel %vm102, %v417, 0
    %v422 = vsel %vm102, %v419, 0
    %424 = vmatpush.xpose.msra.mxu0 0.0
    %425 = vmatpush.xpose.msra.mxu0 0.0
    %426 = vmatpush.xpose.msra.mxu0 0.0
    %427 = vmatpush.xpose.msra.mxu0 0.0
    %428 = vmatpush.xpose.msra.mxu0 0.0
    %429 = vmatpush.xpose.msra.mxu0 0.0
    %430 = vmatpush.xpose.msra.mxu0 0.0
    %431 = vmatpush.xpose.msra.mxu0 0.0
    %432 = vmatpush.xpose.msra.mxu0 0.0
    %433 = vmatpush.xpose.msra.mxu0 0.0
    %434 = vmatpush.xpose.msra.mxu0 0.0
    %435 = vmatpush.xpose.msra.mxu0 0.0
    %436 = vmatpush.xpose.msra.mxu0 0.0
    %437 = vmatpush.xpose.msra.mxu0 0.0
    %438 = vmatpush.xpose.msra.mxu0 0.0
    %439 = vmatpush.xpose.msra.mxu0 %v422
    %440 = vmatmul.f32.gmra.mxu0 %v420
    %v441 = vpop.f32.mrf.mxu0
    %v442 = vadd.f32 0.0, %v441
    %443 = vdwg.mxu0
    %444 = vrot.lane.b32.xlu0 %v97, 120
    %v445 = vpop.permute.xlu0 %444
    %446 = vrot.lane.b32.xlu0 %v97, 88
    %v447 = vpop.permute.xlu0 %446
    %v448 = vsel %vm102, %v445, 0
    %v450 = vsel %vm102, %v447, 0
    %452 = vmatpush.xpose.msra.mxu0 0.0
    %453 = vmatpush.xpose.msra.mxu0 0.0
    %454 = vmatpush.xpose.msra.mxu0 0.0
    %455 = vmatpush.xpose.msra.mxu0 0.0
    %456 = vmatpush.xpose.msra.mxu0 0.0
    %457 = vmatpush.xpose.msra.mxu0 0.0
    %458 = vmatpush.xpose.msra.mxu0 0.0
    %459 = vmatpush.xpose.msra.mxu0 0.0
    %460 = vmatpush.xpose.msra.mxu0 0.0
    %461 = vmatpush.xpose.msra.mxu0 0.0
    %462 = vmatpush.xpose.msra.mxu0 0.0
    %463 = vmatpush.xpose.msra.mxu0 0.0
    %464 = vmatpush.xpose.msra.mxu0 0.0
    %465 = vmatpush.xpose.msra.mxu0 0.0
    %466 = vmatpush.xpose.msra.mxu0 0.0
    %467 = vmatpush.xpose.msra.mxu0 %v450
    %468 = vmatmul.f32.gmra.mxu0 %v448
    %v469 = vpop.f32.mrf.mxu0
    %v470 = vadd.f32 0.0, %v469
    %471 = vdwg.mxu0
    %v472 = vmul.f32 %v386, 0.35355338
    %v473 = vmul.f32 %v414, 0.35355338
    %v474 = vmul.f32 %v442, 0.35355338
    %v475 = vmul.f32 %v470, 0.35355338
    %v476 = vsel %vm102, %v472, -inf
    %477 = vmax.xlane.f32.xlu0 %v476
    %v478 = vpop.xlane.xlu0 %477
    %v479 = vsel %vm102, %v473, -inf
    %480 = vmax.xlane.f32.xlu0 %v479
    %v481 = vpop.xlane.xlu0 %480
    %v482 = vsel %vm102, %v474, -inf
    %483 = vmax.xlane.f32.xlu0 %v482
    %v484 = vpop.xlane.xlu0 %483
    %v485 = vsel %vm102, %v475, -inf
    %486 = vmax.xlane.f32.xlu0 %v485
    %v487 = vpop.xlane.xlu0 %486
    %v488 = vsub.f32 %v472, %v478
    %v489 = vsub.f32 %v473, %v481
    %v490 = vsub.f32 %v474, %v484
    %v491 = vsub.f32 %v475, %v487
    %v492 = vmul.f32 %v488, 1.442695
    %v493 = vpow.pop %v492
    %v494 = vmul.f32 %v489, 1.442695
    %v495 = vpow.pop %v494
    %v496 = vmul.f32 %v490, 1.442695
    %v497 = vpow.pop %v496
    %v498 = vmul.f32 %v491, 1.442695
    %v499 = vpow.pop %v498
    %v500 = vsel %vm102, %v493, 0.0
    %501 = vadd.xlane.f32.xlu0 %v500
    %v502 = vpop.xlane.xlu0 %501
    %v503 = vsel %vm102, %v495, 0.0
    %504 = vadd.xlane.f32.xlu0 %v503
    %v505 = vpop.xlane.xlu0 %504
    %v506 = vsel %vm102, %v497, 0.0
    %507 = vadd.xlane.f32.xlu0 %v506
    %v508 = vpop.xlane.xlu0 %507
    %v509 = vsel %vm102, %v499, 0.0
    %510 = vadd.xlane.f32.xlu0 %v509
    %v511 = vpop.xlane.xlu0 %510
    %v512 = vrcp.pop %v502
    %v513 = vrcp.pop %v505
    %v514 = vrcp.pop %v508
    %v515 = vrcp.pop %v511
    %v516 = vmul.f32 %v493, %v512
    %v517 = vmul.f32 %v495, %v513
    %v518 = vmul.f32 %v497, %v514
    %v519 = vmul.f32 %v499, %v515
    %520 = vrot.lane.b32.xlu0 %v90, 56
    %v521 = vpop.permute.xlu0 %520
    %v524 = vsel %vm102, %v516, 0
    %526 = vmatpush.msra.mxu0 0.0
    %527 = vmatpush.msra.mxu0 0.0
    %528 = vmatpush.msra.mxu0 0.0
    %529 = vmatpush.msra.mxu0 0.0
    %530 = vmatpush.msra.mxu0 0.0
    %531 = vmatpush.msra.mxu0 0.0
    %532 = vmatpush.msra.mxu0 0.0
    %533 = vmatpush.msra.mxu0 0.0
    %534 = vmatpush.msra.mxu0 0.0
    %535 = vmatpush.msra.mxu0 0.0
    %536 = vmatpush.msra.mxu0 0.0
    %537 = vmatpush.msra.mxu0 0.0
    %538 = vmatpush.msra.mxu0 0.0
    %539 = vmatpush.msra.mxu0 0.0
    %540 = vmatpush.msra.mxu0 0.0
    %541 = vmatpush.msra.mxu0 %v521
    %542 = vmatmul.f32.gmra.mxu0 %v524
    %v543 = vpop.f32.mrf.mxu0
    %v544 = vadd.f32 0.0, %v543
    %545 = vdwg.mxu0
    %546 = vrot.lane.b32.xlu0 %v92, 56
    %v547 = vpop.permute.xlu0 %546
    %v550 = vsel %vm102, %v517, 0
    %552 = vmatpush.msra.mxu0 0.0
    %553 = vmatpush.msra.mxu0 0.0
    %554 = vmatpush.msra.mxu0 0.0
    %555 = vmatpush.msra.mxu0 0.0
    %556 = vmatpush.msra.mxu0 0.0
    %557 = vmatpush.msra.mxu0 0.0
    %558 = vmatpush.msra.mxu0 0.0
    %559 = vmatpush.msra.mxu0 0.0
    %560 = vmatpush.msra.mxu0 0.0
    %561 = vmatpush.msra.mxu0 0.0
    %562 = vmatpush.msra.mxu0 0.0
    %563 = vmatpush.msra.mxu0 0.0
    %564 = vmatpush.msra.mxu0 0.0
    %565 = vmatpush.msra.mxu0 0.0
    %566 = vmatpush.msra.mxu0 0.0
    %567 = vmatpush.msra.mxu0 %v547
    %568 = vmatmul.f32.gmra.mxu0 %v550
    %v569 = vpop.f32.mrf.mxu0
    %v570 = vadd.f32 0.0, %v569
    %571 = vdwg.mxu0
    %572 = vrot.lane.b32.xlu0 %v95, 56
    %v573 = vpop.permute.xlu0 %572
    %v576 = vsel %vm102, %v518, 0
    %578 = vmatpush.msra.mxu0 0.0
    %579 = vmatpush.msra.mxu0 0.0
    %580 = vmatpush.msra.mxu0 0.0
    %581 = vmatpush.msra.mxu0 0.0
    %582 = vmatpush.msra.mxu0 0.0
    %583 = vmatpush.msra.mxu0 0.0
    %584 = vmatpush.msra.mxu0 0.0
    %585 = vmatpush.msra.mxu0 0.0
    %586 = vmatpush.msra.mxu0 0.0
    %587 = vmatpush.msra.mxu0 0.0
    %588 = vmatpush.msra.mxu0 0.0
    %589 = vmatpush.msra.mxu0 0.0
    %590 = vmatpush.msra.mxu0 0.0
    %591 = vmatpush.msra.mxu0 0.0
    %592 = vmatpush.msra.mxu0 0.0
    %593 = vmatpush.msra.mxu0 %v573
    %594 = vmatmul.f32.gmra.mxu0 %v576
    %v595 = vpop.f32.mrf.mxu0
    %v596 = vadd.f32 0.0, %v595
    %597 = vdwg.mxu0
    %598 = vrot.lane.b32.xlu0 %v97, 56
    %v599 = vpop.permute.xlu0 %598
    %v602 = vsel %vm102, %v519, 0
    %604 = vmatpush.msra.mxu0 0.0
    %605 = vmatpush.msra.mxu0 0.0
    %606 = vmatpush.msra.mxu0 0.0
    %607 = vmatpush.msra.mxu0 0.0
    %608 = vmatpush.msra.mxu0 0.0
    %609 = vmatpush.msra.mxu0 0.0
    %610 = vmatpush.msra.mxu0 0.0
    %611 = vmatpush.msra.mxu0 0.0
    %612 = vmatpush.msra.mxu0 0.0
    %613 = vmatpush.msra.mxu0 0.0
    %614 = vmatpush.msra.mxu0 0.0
    %615 = vmatpush.msra.mxu0 0.0
    %616 = vmatpush.msra.mxu0 0.0
    %617 = vmatpush.msra.mxu0 0.0
    %618 = vmatpush.msra.mxu0 0.0
    %619 = vmatpush.msra.mxu0 %v599
    %620 = vmatmul.f32.gmra.mxu0 %v602
    %v621 = vpop.f32.mrf.mxu0
    %v622 = vadd.f32 0.0, %v621
    %623 = vdwg.mxu0
    %624 = vrot.lane.b32.xlu0 %v90, 112
    %v625 = vpop.permute.xlu0 %624
    %626 = vrot.lane.b32.xlu0 %v90, 80
    %v627 = vpop.permute.xlu0 %626
    %v628 = vsel %vm102, %v625, 0
    %v630 = vsel %vm102, %v627, 0
    %632 = vmatpush.xpose.msra.mxu0 0.0
    %633 = vmatpush.xpose.msra.mxu0 0.0
    %634 = vmatpush.xpose.msra.mxu0 0.0
    %635 = vmatpush.xpose.msra.mxu0 0.0
    %636 = vmatpush.xpose.msra.mxu0 0.0
    %637 = vmatpush.xpose.msra.mxu0 0.0
    %638 = vmatpush.xpose.msra.mxu0 0.0
    %639 = vmatpush.xpose.msra.mxu0 0.0
    %640 = vmatpush.xpose.msra.mxu0 0.0
    %641 = vmatpush.xpose.msra.mxu0 0.0
    %642 = vmatpush.xpose.msra.mxu0 0.0
    %643 = vmatpush.xpose.msra.mxu0 0.0
    %644 = vmatpush.xpose.msra.mxu0 0.0
    %645 = vmatpush.xpose.msra.mxu0 0.0
    %646 = vmatpush.xpose.msra.mxu0 0.0
    %647 = vmatpush.xpose.msra.mxu0 %v630
    %648 = vmatmul.f32.gmra.mxu0 %v628
    %v649 = vpop.f32.mrf.mxu0
    %v650 = vadd.f32 0.0, %v649
    %651 = vdwg.mxu0
    %652 = vrot.lane.b32.xlu0 %v92, 112
    %v653 = vpop.permute.xlu0 %652
    %654 = vrot.lane.b32.xlu0 %v92, 80
    %v655 = vpop.permute.xlu0 %654
    %v656 = vsel %vm102, %v653, 0
    %v658 = vsel %vm102, %v655, 0
    %660 = vmatpush.xpose.msra.mxu0 0.0
    %661 = vmatpush.xpose.msra.mxu0 0.0
    %662 = vmatpush.xpose.msra.mxu0 0.0
    %663 = vmatpush.xpose.msra.mxu0 0.0
    %664 = vmatpush.xpose.msra.mxu0 0.0
    %665 = vmatpush.xpose.msra.mxu0 0.0
    %666 = vmatpush.xpose.msra.mxu0 0.0
    %667 = vmatpush.xpose.msra.mxu0 0.0
    %668 = vmatpush.xpose.msra.mxu0 0.0
    %669 = vmatpush.xpose.msra.mxu0 0.0
    %670 = vmatpush.xpose.msra.mxu0 0.0
    %671 = vmatpush.xpose.msra.mxu0 0.0
    %672 = vmatpush.xpose.msra.mxu0 0.0
    %673 = vmatpush.xpose.msra.mxu0 0.0
    %674 = vmatpush.xpose.msra.mxu0 0.0
    %675 = vmatpush.xpose.msra.mxu0 %v658
    %676 = vmatmul.f32.gmra.mxu0 %v656
    %v677 = vpop.f32.mrf.mxu0
    %v678 = vadd.f32 0.0, %v677
    %679 = vdwg.mxu0
    %680 = vrot.lane.b32.xlu0 %v95, 112
    %v681 = vpop.permute.xlu0 %680
    %682 = vrot.lane.b32.xlu0 %v95, 80
    %v683 = vpop.permute.xlu0 %682
    %v684 = vsel %vm102, %v681, 0
    %v686 = vsel %vm102, %v683, 0
    %688 = vmatpush.xpose.msra.mxu0 0.0
    %689 = vmatpush.xpose.msra.mxu0 0.0
    %690 = vmatpush.xpose.msra.mxu0 0.0
    %691 = vmatpush.xpose.msra.mxu0 0.0
    %692 = vmatpush.xpose.msra.mxu0 0.0
    %693 = vmatpush.xpose.msra.mxu0 0.0
    %694 = vmatpush.xpose.msra.mxu0 0.0
    %695 = vmatpush.xpose.msra.mxu0 0.0
    %696 = vmatpush.xpose.msra.mxu0 0.0
    %697 = vmatpush.xpose.msra.mxu0 0.0
    %698 = vmatpush.xpose.msra.mxu0 0.0
    %699 = vmatpush.xpose.msra.mxu0 0.0
    %700 = vmatpush.xpose.msra.mxu0 0.0
    %701 = vmatpush.xpose.msra.mxu0 0.0
    %702 = vmatpush.xpose.msra.mxu0 0.0
    %703 = vmatpush.xpose.msra.mxu0 %v686
    %704 = vmatmul.f32.gmra.mxu0 %v684
    %v705 = vpop.f32.mrf.mxu0
    %v706 = vadd.f32 0.0, %v705
    %707 = vdwg.mxu0
    %708 = vrot.lane.b32.xlu0 %v97, 112
    %v709 = vpop.permute.xlu0 %708
    %710 = vrot.lane.b32.xlu0 %v97, 80
    %v711 = vpop.permute.xlu0 %710
    %v712 = vsel %vm102, %v709, 0
    %v714 = vsel %vm102, %v711, 0
    %716 = vmatpush.xpose.msra.mxu0 0.0
    %717 = vmatpush.xpose.msra.mxu0 0.0
    %718 = vmatpush.xpose.msra.mxu0 0.0
    %719 = vmatpush.xpose.msra.mxu0 0.0
    %720 = vmatpush.xpose.msra.mxu0 0.0
    %721 = vmatpush.xpose.msra.mxu0 0.0
    %722 = vmatpush.xpose.msra.mxu0 0.0
    %723 = vmatpush.xpose.msra.mxu0 0.0
    %724 = vmatpush.xpose.msra.mxu0 0.0
    %725 = vmatpush.xpose.msra.mxu0 0.0
    %726 = vmatpush.xpose.msra.mxu0 0.0
    %727 = vmatpush.xpose.msra.mxu0 0.0
    %728 = vmatpush.xpose.msra.mxu0 0.0
    %729 = vmatpush.xpose.msra.mxu0 0.0
    %730 = vmatpush.xpose.msra.mxu0 0.0
    %731 = vmatpush.xpose.msra.mxu0 %v714
    %732 = vmatmul.f32.gmra.mxu0 %v712
    %v733 = vpop.f32.mrf.mxu0
    %v734 = vadd.f32 0.0, %v733
    %735 = vdwg.mxu0
    %v736 = vmul.f32 %v650, 0.35355338
    %v737 = vmul.f32 %v678, 0.35355338
    %v738 = vmul.f32 %v706, 0.35355338
    %v739 = vmul.f32 %v734, 0.35355338
    %v740 = vsel %vm102, %v736, -inf
    %741 = vmax.xlane.f32.xlu0 %v740
    %v742 = vpop.xlane.xlu0 %741
    %v743 = vsel %vm102, %v737, -inf
    %744 = vmax.xlane.f32.xlu0 %v743
    %v745 = vpop.xlane.xlu0 %744
    %v746 = vsel %vm102, %v738, -inf
    %747 = vmax.xlane.f32.xlu0 %v746
    %v748 = vpop.xlane.xlu0 %747
    %v749 = vsel %vm102, %v739, -inf
    %750 = vmax.xlane.f32.xlu0 %v749
    %v751 = vpop.xlane.xlu0 %750
    %v752 = vsub.f32 %v736, %v742
    %v753 = vsub.f32 %v737, %v745
    %v754 = vsub.f32 %v738, %v748
    %v755 = vsub.f32 %v739, %v751
    %v756 = vmul.f32 %v752, 1.442695
    %v757 = vpow.pop %v756
    %v758 = vmul.f32 %v753, 1.442695
    %v759 = vpow.pop %v758
    %v760 = vmul.f32 %v754, 1.442695
    %v761 = vpow.pop %v760
    %v762 = vmul.f32 %v755, 1.442695
    %v763 = vpow.pop %v762
    %v764 = vsel %vm102, %v757, 0.0
    %765 = vadd.xlane.f32.xlu0 %v764
    %v766 = vpop.xlane.xlu0 %765
    %v767 = vsel %vm102, %v759, 0.0
    %768 = vadd.xlane.f32.xlu0 %v767
    %v769 = vpop.xlane.xlu0 %768
    %v770 = vsel %vm102, %v761, 0.0
    %771 = vadd.xlane.f32.xlu0 %v770
    %v772 = vpop.xlane.xlu0 %771
    %v773 = vsel %vm102, %v763, 0.0
    %774 = vadd.xlane.f32.xlu0 %v773
    %v775 = vpop.xlane.xlu0 %774
    %v776 = vrcp.pop %v766
    %v777 = vrcp.pop %v769
    %v778 = vrcp.pop %v772
    %v779 = vrcp.pop %v775
    %v780 = vmul.f32 %v757, %v776
    %v781 = vmul.f32 %v759, %v777
    %v782 = vmul.f32 %v761, %v778
    %v783 = vmul.f32 %v763, %v779
    %784 = vrot.lane.b32.xlu0 %v90, 48
    %v785 = vpop.permute.xlu0 %784
    %v788 = vsel %vm102, %v780, 0
    %790 = vmatpush.msra.mxu0 0.0
    %791 = vmatpush.msra.mxu0 0.0
    %792 = vmatpush.msra.mxu0 0.0
    %793 = vmatpush.msra.mxu0 0.0
    %794 = vmatpush.msra.mxu0 0.0
    %795 = vmatpush.msra.mxu0 0.0
    %796 = vmatpush.msra.mxu0 0.0
    %797 = vmatpush.msra.mxu0 0.0
    %798 = vmatpush.msra.mxu0 0.0
    %799 = vmatpush.msra.mxu0 0.0
    %800 = vmatpush.msra.mxu0 0.0
    %801 = vmatpush.msra.mxu0 0.0
    %802 = vmatpush.msra.mxu0 0.0
    %803 = vmatpush.msra.mxu0 0.0
    %804 = vmatpush.msra.mxu0 0.0
    %805 = vmatpush.msra.mxu0 %v785
    %806 = vmatmul.f32.gmra.mxu0 %v788
    %v807 = vpop.f32.mrf.mxu0
    %v808 = vadd.f32 0.0, %v807
    %809 = vdwg.mxu0
    %810 = vrot.lane.b32.xlu0 %v92, 48
    %v811 = vpop.permute.xlu0 %810
    %v814 = vsel %vm102, %v781, 0
    %816 = vmatpush.msra.mxu0 0.0
    %817 = vmatpush.msra.mxu0 0.0
    %818 = vmatpush.msra.mxu0 0.0
    %819 = vmatpush.msra.mxu0 0.0
    %820 = vmatpush.msra.mxu0 0.0
    %821 = vmatpush.msra.mxu0 0.0
    %822 = vmatpush.msra.mxu0 0.0
    %823 = vmatpush.msra.mxu0 0.0
    %824 = vmatpush.msra.mxu0 0.0
    %825 = vmatpush.msra.mxu0 0.0
    %826 = vmatpush.msra.mxu0 0.0
    %827 = vmatpush.msra.mxu0 0.0
    %828 = vmatpush.msra.mxu0 0.0
    %829 = vmatpush.msra.mxu0 0.0
    %830 = vmatpush.msra.mxu0 0.0
    %831 = vmatpush.msra.mxu0 %v811
    %832 = vmatmul.f32.gmra.mxu0 %v814
    %v833 = vpop.f32.mrf.mxu0
    %v834 = vadd.f32 0.0, %v833
    %835 = vdwg.mxu0
    %836 = vrot.lane.b32.xlu0 %v95, 48
    %v837 = vpop.permute.xlu0 %836
    %v840 = vsel %vm102, %v782, 0
    %842 = vmatpush.msra.mxu0 0.0
    %843 = vmatpush.msra.mxu0 0.0
    %844 = vmatpush.msra.mxu0 0.0
    %845 = vmatpush.msra.mxu0 0.0
    %846 = vmatpush.msra.mxu0 0.0
    %847 = vmatpush.msra.mxu0 0.0
    %848 = vmatpush.msra.mxu0 0.0
    %849 = vmatpush.msra.mxu0 0.0
    %850 = vmatpush.msra.mxu0 0.0
    %851 = vmatpush.msra.mxu0 0.0
    %852 = vmatpush.msra.mxu0 0.0
    %853 = vmatpush.msra.mxu0 0.0
    %854 = vmatpush.msra.mxu0 0.0
    %855 = vmatpush.msra.mxu0 0.0
    %856 = vmatpush.msra.mxu0 0.0
    %857 = vmatpush.msra.mxu0 %v837
    %858 = vmatmul.f32.gmra.mxu0 %v840
    %v859 = vpop.f32.mrf.mxu0
    %v860 = vadd.f32 0.0, %v859
    %861 = vdwg.mxu0
    %862 = vrot.lane.b32.xlu0 %v97, 48
    %v863 = vpop.permute.xlu0 %862
    %v866 = vsel %vm102, %v783, 0
    %868 = vmatpush.msra.mxu0 0.0
    %869 = vmatpush.msra.mxu0 0.0
    %870 = vmatpush.msra.mxu0 0.0
    %871 = vmatpush.msra.mxu0 0.0
    %872 = vmatpush.msra.mxu0 0.0
    %873 = vmatpush.msra.mxu0 0.0
    %874 = vmatpush.msra.mxu0 0.0
    %875 = vmatpush.msra.mxu0 0.0
    %876 = vmatpush.msra.mxu0 0.0
    %877 = vmatpush.msra.mxu0 0.0
    %878 = vmatpush.msra.mxu0 0.0
    %879 = vmatpush.msra.mxu0 0.0
    %880 = vmatpush.msra.mxu0 0.0
    %881 = vmatpush.msra.mxu0 0.0
    %882 = vmatpush.msra.mxu0 0.0
    %883 = vmatpush.msra.mxu0 %v863
    %884 = vmatmul.f32.gmra.mxu0 %v866
    %v885 = vpop.f32.mrf.mxu0
    %v886 = vadd.f32 0.0, %v885
    %887 = vdwg.mxu0
    %888 = vrot.lane.b32.xlu0 %v90, 104
    %v889 = vpop.permute.xlu0 %888
    %890 = vrot.lane.b32.xlu0 %v90, 72
    %v891 = vpop.permute.xlu0 %890
    %v892 = vsel %vm102, %v889, 0
    %v894 = vsel %vm102, %v891, 0
    %896 = vmatpush.xpose.msra.mxu0 0.0
    %897 = vmatpush.xpose.msra.mxu0 0.0
    %898 = vmatpush.xpose.msra.mxu0 0.0
    %899 = vmatpush.xpose.msra.mxu0 0.0
    %900 = vmatpush.xpose.msra.mxu0 0.0
    %901 = vmatpush.xpose.msra.mxu0 0.0
    %902 = vmatpush.xpose.msra.mxu0 0.0
    %903 = vmatpush.xpose.msra.mxu0 0.0
    %904 = vmatpush.xpose.msra.mxu0 0.0
    %905 = vmatpush.xpose.msra.mxu0 0.0
    %906 = vmatpush.xpose.msra.mxu0 0.0
    %907 = vmatpush.xpose.msra.mxu0 0.0
    %908 = vmatpush.xpose.msra.mxu0 0.0
    %909 = vmatpush.xpose.msra.mxu0 0.0
    %910 = vmatpush.xpose.msra.mxu0 0.0
    %911 = vmatpush.xpose.msra.mxu0 %v894
    %912 = vmatmul.f32.gmra.mxu0 %v892
    %v913 = vpop.f32.mrf.mxu0
    %v914 = vadd.f32 0.0, %v913
    %915 = vdwg.mxu0
    %916 = vrot.lane.b32.xlu0 %v92, 104
    %v917 = vpop.permute.xlu0 %916
    %918 = vrot.lane.b32.xlu0 %v92, 72
    %v919 = vpop.permute.xlu0 %918
    %v920 = vsel %vm102, %v917, 0
    %v922 = vsel %vm102, %v919, 0
    %924 = vmatpush.xpose.msra.mxu0 0.0
    %925 = vmatpush.xpose.msra.mxu0 0.0
    %926 = vmatpush.xpose.msra.mxu0 0.0
    %927 = vmatpush.xpose.msra.mxu0 0.0
    %928 = vmatpush.xpose.msra.mxu0 0.0
    %929 = vmatpush.xpose.msra.mxu0 0.0
    %930 = vmatpush.xpose.msra.mxu0 0.0
    %931 = vmatpush.xpose.msra.mxu0 0.0
    %932 = vmatpush.xpose.msra.mxu0 0.0
    %933 = vmatpush.xpose.msra.mxu0 0.0
    %934 = vmatpush.xpose.msra.mxu0 0.0
    %935 = vmatpush.xpose.msra.mxu0 0.0
    %936 = vmatpush.xpose.msra.mxu0 0.0
    %937 = vmatpush.xpose.msra.mxu0 0.0
    %938 = vmatpush.xpose.msra.mxu0 0.0
    %939 = vmatpush.xpose.msra.mxu0 %v922
    %940 = vmatmul.f32.gmra.mxu0 %v920
    %v941 = vpop.f32.mrf.mxu0
    %v942 = vadd.f32 0.0, %v941
    %943 = vdwg.mxu0
    %944 = vrot.lane.b32.xlu0 %v95, 104
    %v945 = vpop.permute.xlu0 %944
    %946 = vrot.lane.b32.xlu0 %v95, 72
    %v947 = vpop.permute.xlu0 %946
    %v948 = vsel %vm102, %v945, 0
    %v950 = vsel %vm102, %v947, 0
    %952 = vmatpush.xpose.msra.mxu0 0.0
    %953 = vmatpush.xpose.msra.mxu0 0.0
    %954 = vmatpush.xpose.msra.mxu0 0.0
    %955 = vmatpush.xpose.msra.mxu0 0.0
    %956 = vmatpush.xpose.msra.mxu0 0.0
    %957 = vmatpush.xpose.msra.mxu0 0.0
    %958 = vmatpush.xpose.msra.mxu0 0.0
    %959 = vmatpush.xpose.msra.mxu0 0.0
    %960 = vmatpush.xpose.msra.mxu0 0.0
    %961 = vmatpush.xpose.msra.mxu0 0.0
    %962 = vmatpush.xpose.msra.mxu0 0.0
    %963 = vmatpush.xpose.msra.mxu0 0.0
    %964 = vmatpush.xpose.msra.mxu0 0.0
    %965 = vmatpush.xpose.msra.mxu0 0.0
    %966 = vmatpush.xpose.msra.mxu0 0.0
    %967 = vmatpush.xpose.msra.mxu0 %v950
    %968 = vmatmul.f32.gmra.mxu0 %v948
    %v969 = vpop.f32.mrf.mxu0
    %v970 = vadd.f32 0.0, %v969
    %971 = vdwg.mxu0
    %972 = vrot.lane.b32.xlu0 %v97, 104
    %v973 = vpop.permute.xlu0 %972
    %974 = vrot.lane.b32.xlu0 %v97, 72
    %v975 = vpop.permute.xlu0 %974
    %v976 = vsel %vm102, %v973, 0
    %v978 = vsel %vm102, %v975, 0
    %980 = vmatpush.xpose.msra.mxu0 0.0
    %981 = vmatpush.xpose.msra.mxu0 0.0
    %982 = vmatpush.xpose.msra.mxu0 0.0
    %983 = vmatpush.xpose.msra.mxu0 0.0
    %984 = vmatpush.xpose.msra.mxu0 0.0
    %985 = vmatpush.xpose.msra.mxu0 0.0
    %986 = vmatpush.xpose.msra.mxu0 0.0
    %987 = vmatpush.xpose.msra.mxu0 0.0
    %988 = vmatpush.xpose.msra.mxu0 0.0
    %989 = vmatpush.xpose.msra.mxu0 0.0
    %990 = vmatpush.xpose.msra.mxu0 0.0
    %991 = vmatpush.xpose.msra.mxu0 0.0
    %992 = vmatpush.xpose.msra.mxu0 0.0
    %993 = vmatpush.xpose.msra.mxu0 0.0
    %994 = vmatpush.xpose.msra.mxu0 0.0
    %995 = vmatpush.xpose.msra.mxu0 %v978
    %996 = vmatmul.f32.gmra.mxu0 %v976
    %v997 = vpop.f32.mrf.mxu0
    %v998 = vadd.f32 0.0, %v997
    %999 = vdwg.mxu0
    %v1000 = vmul.f32 %v914, 0.35355338
    %v1001 = vmul.f32 %v942, 0.35355338
    %v1002 = vmul.f32 %v970, 0.35355338
    %v1003 = vmul.f32 %v998, 0.35355338
    %v1004 = vsel %vm102, %v1000, -inf
    %1005 = vmax.xlane.f32.xlu0 %v1004
    %v1006 = vpop.xlane.xlu0 %1005
    %v1007 = vsel %vm102, %v1001, -inf
    %1008 = vmax.xlane.f32.xlu0 %v1007
    %v1009 = vpop.xlane.xlu0 %1008
    %v1010 = vsel %vm102, %v1002, -inf
    %1011 = vmax.xlane.f32.xlu0 %v1010
    %v1012 = vpop.xlane.xlu0 %1011
    %v1013 = vsel %vm102, %v1003, -inf
    %1014 = vmax.xlane.f32.xlu0 %v1013
    %v1015 = vpop.xlane.xlu0 %1014
    %v1016 = vsub.f32 %v1000, %v1006
    %v1017 = vsub.f32 %v1001, %v1009
    %v1018 = vsub.f32 %v1002, %v1012
    %v1019 = vsub.f32 %v1003, %v1015
    %v1020 = vmul.f32 %v1016, 1.442695
    %v1021 = vpow.pop %v1020
    %v1022 = vmul.f32 %v1017, 1.442695
    %v1023 = vpow.pop %v1022
    %v1024 = vmul.f32 %v1018, 1.442695
    %v1025 = vpow.pop %v1024
    %v1026 = vmul.f32 %v1019, 1.442695
    %v1027 = vpow.pop %v1026
    %v1028 = vsel %vm102, %v1021, 0.0
    %1029 = vadd.xlane.f32.xlu0 %v1028
    %v1030 = vpop.xlane.xlu0 %1029
    %v1031 = vsel %vm102, %v1023, 0.0
    %1032 = vadd.xlane.f32.xlu0 %v1031
    %v1033 = vpop.xlane.xlu0 %1032
    %v1034 = vsel %vm102, %v1025, 0.0
    %1035 = vadd.xlane.f32.xlu0 %v1034
    %v1036 = vpop.xlane.xlu0 %1035
    %v1037 = vsel %vm102, %v1027, 0.0
    %1038 = vadd.xlane.f32.xlu0 %v1037
    %v1039 = vpop.xlane.xlu0 %1038
    %v1040 = vrcp.pop %v1030
    %v1041 = vrcp.pop %v1033
    %v1042 = vrcp.pop %v1036
    %v1043 = vrcp.pop %v1039
    %v1044 = vmul.f32 %v1021, %v1040
    %v1045 = vmul.f32 %v1023, %v1041
    %v1046 = vmul.f32 %v1025, %v1042
    %v1047 = vmul.f32 %v1027, %v1043
    %1048 = vrot.lane.b32.xlu0 %v90, 40
    %v1049 = vpop.permute.xlu0 %1048
    %v1052 = vsel %vm102, %v1044, 0
    %1054 = vmatpush.msra.mxu0 0.0
    %1055 = vmatpush.msra.mxu0 0.0
    %1056 = vmatpush.msra.mxu0 0.0
    %1057 = vmatpush.msra.mxu0 0.0
    %1058 = vmatpush.msra.mxu0 0.0
    %1059 = vmatpush.msra.mxu0 0.0
    %1060 = vmatpush.msra.mxu0 0.0
    %1061 = vmatpush.msra.mxu0 0.0
    %1062 = vmatpush.msra.mxu0 0.0
    %1063 = vmatpush.msra.mxu0 0.0
    %1064 = vmatpush.msra.mxu0 0.0
    %1065 = vmatpush.msra.mxu0 0.0
    %1066 = vmatpush.msra.mxu0 0.0
    %1067 = vmatpush.msra.mxu0 0.0
    %1068 = vmatpush.msra.mxu0 0.0
    %1069 = vmatpush.msra.mxu0 %v1049
    %1070 = vmatmul.f32.gmra.mxu0 %v1052
    %v1071 = vpop.f32.mrf.mxu0
    %v1072 = vadd.f32 0.0, %v1071
    %1073 = vdwg.mxu0
    %1074 = vrot.lane.b32.xlu0 %v92, 40
    %v1075 = vpop.permute.xlu0 %1074
    %v1078 = vsel %vm102, %v1045, 0
    %1080 = vmatpush.msra.mxu0 0.0
    %1081 = vmatpush.msra.mxu0 0.0
    %1082 = vmatpush.msra.mxu0 0.0
    %1083 = vmatpush.msra.mxu0 0.0
    %1084 = vmatpush.msra.mxu0 0.0
    %1085 = vmatpush.msra.mxu0 0.0
    %1086 = vmatpush.msra.mxu0 0.0
    %1087 = vmatpush.msra.mxu0 0.0
    %1088 = vmatpush.msra.mxu0 0.0
    %1089 = vmatpush.msra.mxu0 0.0
    %1090 = vmatpush.msra.mxu0 0.0
    %1091 = vmatpush.msra.mxu0 0.0
    %1092 = vmatpush.msra.mxu0 0.0
    %1093 = vmatpush.msra.mxu0 0.0
    %1094 = vmatpush.msra.mxu0 0.0
    %1095 = vmatpush.msra.mxu0 %v1075
    %1096 = vmatmul.f32.gmra.mxu0 %v1078
    %v1097 = vpop.f32.mrf.mxu0
    %v1098 = vadd.f32 0.0, %v1097
    %1099 = vdwg.mxu0
    %1100 = vrot.lane.b32.xlu0 %v95, 40
    %v1101 = vpop.permute.xlu0 %1100
    %v1104 = vsel %vm102, %v1046, 0
    %1106 = vmatpush.msra.mxu0 0.0
    %1107 = vmatpush.msra.mxu0 0.0
    %1108 = vmatpush.msra.mxu0 0.0
    %1109 = vmatpush.msra.mxu0 0.0
    %1110 = vmatpush.msra.mxu0 0.0
    %1111 = vmatpush.msra.mxu0 0.0
    %1112 = vmatpush.msra.mxu0 0.0
    %1113 = vmatpush.msra.mxu0 0.0
    %1114 = vmatpush.msra.mxu0 0.0
    %1115 = vmatpush.msra.mxu0 0.0
    %1116 = vmatpush.msra.mxu0 0.0
    %1117 = vmatpush.msra.mxu0 0.0
    %1118 = vmatpush.msra.mxu0 0.0
    %1119 = vmatpush.msra.mxu0 0.0
    %1120 = vmatpush.msra.mxu0 0.0
    %1121 = vmatpush.msra.mxu0 %v1101
    %1122 = vmatmul.f32.gmra.mxu0 %v1104
    %v1123 = vpop.f32.mrf.mxu0
    %v1124 = vadd.f32 0.0, %v1123
    %1125 = vdwg.mxu0
    %1126 = vrot.lane.b32.xlu0 %v97, 40
    %v1127 = vpop.permute.xlu0 %1126
    %v1130 = vsel %vm102, %v1047, 0
    %1132 = vmatpush.msra.mxu0 0.0
    %1133 = vmatpush.msra.mxu0 0.0
    %1134 = vmatpush.msra.mxu0 0.0
    %1135 = vmatpush.msra.mxu0 0.0
    %1136 = vmatpush.msra.mxu0 0.0
    %1137 = vmatpush.msra.mxu0 0.0
    %1138 = vmatpush.msra.mxu0 0.0
    %1139 = vmatpush.msra.mxu0 0.0
    %1140 = vmatpush.msra.mxu0 0.0
    %1141 = vmatpush.msra.mxu0 0.0
    %1142 = vmatpush.msra.mxu0 0.0
    %1143 = vmatpush.msra.mxu0 0.0
    %1144 = vmatpush.msra.mxu0 0.0
    %1145 = vmatpush.msra.mxu0 0.0
    %1146 = vmatpush.msra.mxu0 0.0
    %1147 = vmatpush.msra.mxu0 %v1127
    %1148 = vmatmul.f32.gmra.mxu0 %v1130
    %v1149 = vpop.f32.mrf.mxu0
    %v1150 = vadd.f32 0.0, %v1149
    %1151 = vdwg.mxu0
    %1156 = vrot.lane.b32.xlu0 %v544, 8
    %v1157 = vpop.permute.xlu0 %1156
    %1158 = vrot.lane.b32.xlu0 %v570, 8
    %v1159 = vpop.permute.xlu0 %1158
    %1160 = vrot.lane.b32.xlu0 %v596, 8
    %v1161 = vpop.permute.xlu0 %1160
    %1162 = vrot.lane.b32.xlu0 %v622, 8
    %v1163 = vpop.permute.xlu0 %1162
    %1172 = vrot.lane.b32.xlu0 %v808, 16
    %v1173 = vpop.permute.xlu0 %1172
    %1174 = vrot.lane.b32.xlu0 %v834, 16
    %v1175 = vpop.permute.xlu0 %1174
    %1176 = vrot.lane.b32.xlu0 %v860, 16
    %v1177 = vpop.permute.xlu0 %1176
    %1178 = vrot.lane.b32.xlu0 %v886, 16
    %v1179 = vpop.permute.xlu0 %1178
    %1188 = vrot.lane.b32.xlu0 %v1072, 24
    %v1189 = vpop.permute.xlu0 %1188
    %1190 = vrot.lane.b32.xlu0 %v1098, 24
    %v1191 = vpop.permute.xlu0 %1190
    %1192 = vrot.lane.b32.xlu0 %v1124, 24
    %v1193 = vpop.permute.xlu0 %1192
    %1194 = vrot.lane.b32.xlu0 %v1150, 24
    %v1195 = vpop.permute.xlu0 %1194
    %v1200 = vsel %vm102, %v280, %v1157
    %v1201 = vsel %vm102, %v306, %v1159
    %v1202 = vsel %vm102, %v332, %v1161
    %v1203 = vsel %vm102, %v358, %v1163
    %vm1204 = vcmask 130048
    %v1205 = vsel %vm1204, %v1200, %v1173
    %v1206 = vsel %vm1204, %v1201, %v1175
    %v1207 = vsel %vm1204, %v1202, %v1177
    %v1208 = vsel %vm1204, %v1203, %v1179
    %vm1209 = vcmask 195584
    %v1210 = vsel %vm1209, %v1205, %v1189
    %v1211 = vsel %vm1209, %v1206, %v1191
    %v1212 = vsel %vm1209, %v1207, %v1193
    %v1213 = vsel %vm1209, %v1208, %v1195
    %v1214 = vld [vmem:[%s4] sm:$0xf]
    %v1215 = vld [vmem:[%s4 + $0x4] sm:$0xf]
    %v1216 = vld [vmem:[%s4 + $0x8] sm:$0xf]
    %v1217 = vld [vmem:[%s4 + $0xc] sm:$0xf]
    %v1218 = vpack.c.bf16 %v1211, %v1210
    %v1219 = vpack.c.bf16 %v1213, %v1212
    %v1221 = vperm.slane %v48, 0
    %v1227 = vunpack.c.l.b16 %v1214
    %v1228 = vunpack.c.l.b16 %v1215
    %v1229 = vunpack.c.l.b16 %v1216
    %v1230 = vunpack.c.l.b16 %v1217
    %v1231 = vpack.c.b16 %v1228, %v1227
    %v1232 = vpack.c.b16 %v1230, %v1229
    %v1236 = vsel %vm73, %v1218, 0
    %v1239 = vsel %vm73, %v1219, 0
    %1241 = vmatpush.bf16.msra.mxu0 0
    %1242 = vmatpush.bf16.msra.mxu0 0
    %1243 = vmatpush.bf16.msra.mxu0 0
    %1244 = vmatpush.bf16.msra.mxu0 0
    %1245 = vmatpush.bf16.msra.mxu0 0
    %1246 = vmatpush.bf16.msra.mxu0 0
    %1247 = vmatpush.bf16.msra.mxu0 %v1232
    %1248 = vmatpush.bf16.msra.mxu0 %v1231
    %1249 = vmatmul.bf16.gmra.mxu0 %v1236
    %v1250 = vpop.f32.mrf.mxu0
    %v1251 = vadd.f32 %v1221, %v1250
    %v1252 = vpop.f32.mrf.mxu0
    %v1253 = vadd.f32 %v1221, %v1252
    %1254 = vmatmul.bf16.gmra.mxu0 %v1239
    %v1255 = vpop.f32.mrf.mxu0
    %v1256 = vadd.f32 %v1221, %v1255
    %v1257 = vpop.f32.mrf.mxu0
    %v1258 = vadd.f32 %v1221, %v1257
    %1259 = vdwg.mxu0
    %v1260 = vadd.f32 %v1251, %v34
    %v1261 = vadd.f32 %v1253, %v35
    %v1262 = vadd.f32 %v1256, %v36
    %v1263 = vadd.f32 %v1258, %v37
    %v1264 = vsel %vm73, %v1260, 0.0
    %1265 = vadd.xlane.f32.xlu0 %v1264
    %v1266 = vpop.xlane.xlu0 %1265
    %v1267 = vsel %vm73, %v1261, 0.0
    %1268 = vadd.xlane.f32.xlu0 %v1267
    %v1269 = vpop.xlane.xlu0 %1268
    %v1270 = vsel %vm73, %v1262, 0.0
    %1271 = vadd.xlane.f32.xlu0 %v1270
    %v1272 = vpop.xlane.xlu0 %1271
    %v1273 = vsel %vm73, %v1263, 0.0
    %1274 = vadd.xlane.f32.xlu0 %v1273
    %v1275 = vpop.xlane.xlu0 %1274
    %v1276 = vrcp.pop 32.0
    %v1277 = vmul.f32 32.0, %v1276
    %v1278 = vsub.f32 1.0, %v1277
    %v1279 = vmul.f32 %v1276, %v1278
    %v1280 = vadd.f32 %v1276, %v1279
    %vm1281 = vweird.f32 %v1276
    %v1282 = vsel %vm1281, %v1276, %v1280
    %v1283 = vmul.f32 %v1266, %v1282
    %v1284 = vmul.f32 %v1269, %v1282
    %v1285 = vmul.f32 %v1272, %v1282
    %v1286 = vmul.f32 %v1275, %v1282
    %v1287 = vmul.f32 %v1260, %v1260
    %v1288 = vmul.f32 %v1261, %v1261
    %v1289 = vmul.f32 %v1262, %v1262
    %v1290 = vmul.f32 %v1263, %v1263
    %v1291 = vsel %vm73, %v1287, 0.0
    %1292 = vadd.xlane.f32.xlu0 %v1291
    %v1293 = vpop.xlane.xlu0 %1292
    %v1294 = vsel %vm73, %v1288, 0.0
    %1295 = vadd.xlane.f32.xlu0 %v1294
    %v1296 = vpop.xlane.xlu0 %1295
    %v1297 = vsel %vm73, %v1289, 0.0
    %1298 = vadd.xlane.f32.xlu0 %v1297
    %v1299 = vpop.xlane.xlu0 %1298
    %v1300 = vsel %vm73, %v1290, 0.0
    %1301 = vadd.xlane.f32.xlu0 %v1300
    %v1302 = vpop.xlane.xlu0 %1301
    %v1303 = vmul.f32 %v1293, %v1282
    %v1304 = vmul.f32 %v1296, %v1282
    %v1305 = vmul.f32 %v1299, %v1282
    %v1306 = vmul.f32 %v1302, %v1282
    %v1307 = vmul.f32 %v1283, %v1283
    %v1308 = vmul.f32 %v1284, %v1284
    %v1309 = vmul.f32 %v1285, %v1285
    %v1310 = vmul.f32 %v1286, %v1286
    %v1311 = vsub.f32 %v1303, %v1307
    %v1312 = vsub.f32 %v1304, %v1308
    %v1313 = vsub.f32 %v1305, %v1309
    %v1314 = vsub.f32 %v1306, %v1310
    %v1315 = vsub.f32 %v1260, %v1283
    %v1316 = vsub.f32 %v1261, %v1284
    %v1317 = vsub.f32 %v1262, %v1285
    %v1318 = vsub.f32 %v1263, %v1286
    %v1319 = vadd.f32 %v1311, 1e-05
    %v1320 = vadd.f32 %v1312, 1e-05
    %v1321 = vadd.f32 %v1313, 1e-05
    %v1322 = vadd.f32 %v1314, 1e-05
    %v1323 = vrsqrt.pop %v1319
    %v1324 = vmul.f32 %v1323, %v1319
    %v1325 = vmul.f32 %v1324, %v1323
    %v1326 = vmul.f32 0.5, %v1325
    %v1327 = vsub.f32 1.5, %v1326
    %v1328 = vmul.f32 %v1323, %v1327
    %vm1329 = vweird.f32 %v1319
    %vm1330 = vweird.f32 %v1323
    %vm1331 = vmor %vm1329, %vm1330
    %v1332 = vsel %vm1331, %v1323, %v1328
    %v1333 = vrsqrt.pop %v1320
    %v1334 = vmul.f32 %v1333, %v1320
    %v1335 = vmul.f32 %v1334, %v1333
    %v1336 = vmul.f32 0.5, %v1335
    %v1337 = vsub.f32 1.5, %v1336
    %v1338 = vmul.f32 %v1333, %v1337
    %vm1339 = vweird.f32 %v1320
    %vm1340 = vweird.f32 %v1333
    %vm1341 = vmor %vm1339, %vm1340
    %v1342 = vsel %vm1341, %v1333, %v1338
    %v1343 = vrsqrt.pop %v1321
    %v1344 = vmul.f32 %v1343, %v1321
    %v1345 = vmul.f32 %v1344, %v1343
    %v1346 = vmul.f32 0.5, %v1345
    %v1347 = vsub.f32 1.5, %v1346
    %v1348 = vmul.f32 %v1343, %v1347
    %vm1349 = vweird.f32 %v1321
    %vm1350 = vweird.f32 %v1343
    %vm1351 = vmor %vm1349, %vm1350
    %v1352 = vsel %vm1351, %v1343, %v1348
    %v1353 = vrsqrt.pop %v1322
    %v1354 = vmul.f32 %v1353, %v1322
    %v1355 = vmul.f32 %v1354, %v1353
    %v1356 = vmul.f32 0.5, %v1355
    %v1357 = vsub.f32 1.5, %v1356
    %v1358 = vmul.f32 %v1353, %v1357
    %vm1359 = vweird.f32 %v1322
    %vm1360 = vweird.f32 %v1353
    %vm1361 = vmor %vm1359, %vm1360
    %v1362 = vsel %vm1361, %v1353, %v1358
    %v1363 = vmul.f32 %v1315, %v1332
    %v1364 = vmul.f32 %v1316, %v1342
    %v1365 = vmul.f32 %v1317, %v1352
    %v1366 = vmul.f32 %v1318, %v1362
    %v1368 = vperm.slane %v42, 0
    %v1370 = vmul.f32 %v1363, %v1368
    %v1371 = vmul.f32 %v1364, %v1368
    %v1372 = vmul.f32 %v1365, %v1368
    %v1373 = vmul.f32 %v1366, %v1368
    %v1375 = vperm.slane %v43, 0
    %v1377 = vadd.f32 %v1370, %v1375
    %v1378 = vadd.f32 %v1371, %v1375
    %v1379 = vadd.f32 %v1372, %v1375
    %v1380 = vadd.f32 %v1373, %v1375
    %s1381 = scalar_lea.vmem %s2, 16
    %v1382 = vld [vmem:[%s1381] sm:$0xf]
    %v1383 = vld [vmem:[%s1381 + $0x4] sm:$0xf]
    %v1384 = vld [vmem:[%s1381 + $0x8] sm:$0xf]
    %v1385 = vld [vmem:[%s1381 + $0xc] sm:$0xf]
    %s1386 = scalar_lea.vmem %s3, 1
    %v1387 = vld [vmem:[%s1386] sm:$0x1]
    %v1388 = vpack.c.bf16 %v1378, %v1377
    %v1389 = vpack.c.bf16 %v1380, %v1379
    %v1390 = vpack.c.bf16 %v39, %v38
    %v1391 = vpack.c.bf16 %v41, %v40
    %v1393 = vperm.slane %v1387, 0
    %v1399 = vunpack.c.l.b16 %v1382
    %v1400 = vunpack.c.l.b16 %v1383
    %v1401 = vunpack.c.l.b16 %v1384
    %v1402 = vunpack.c.l.b16 %v1385
    %v1403 = vpack.c.b16 %v1400, %v1399
    %v1404 = vpack.c.b16 %v1402, %v1401
    %v1408 = vsel %vm73, %v1388, 0
    %v1411 = vsel %vm73, %v1389, 0
    %1413 = vmatpush.bf16.msra.mxu0 0
    %1414 = vmatpush.bf16.msra.mxu0 0
    %1415 = vmatpush.bf16.msra.mxu0 0
    %1416 = vmatpush.bf16.msra.mxu0 0
    %1417 = vmatpush.bf16.msra.mxu0 0
    %1418 = vmatpush.bf16.msra.mxu0 0
    %1419 = vmatpush.bf16.msra.mxu0 %v1404
    %1420 = vmatpush.bf16.msra.mxu0 %v1403
    %1421 = vmatmul.bf16.gmra.mxu0 %v1408
    %v1422 = vpop.f32.mrf.mxu0
    %v1423 = vadd.f32 %v1393, %v1422
    %v1424 = vpop.f32.mrf.mxu0
    %v1425 = vadd.f32 %v1393, %v1424
    %1426 = vmatmul.bf16.gmra.mxu0 %v1411
    %v1427 = vpop.f32.mrf.mxu0
    %v1428 = vadd.f32 %v1393, %v1427
    %v1429 = vpop.f32.mrf.mxu0
    %v1430 = vadd.f32 %v1393, %v1429
    %1431 = vdwg.mxu0
    %1432 = vrot.lane.b32.xlu0 %v1403, 96
    %v1433 = vpop.permute.xlu0 %1432
    %1434 = vrot.lane.b32.xlu0 %v1404, 96
    %v1435 = vpop.permute.xlu0 %1434
    %1438 = vrot.lane.b32.xlu0 %v1393, 96
    %v1439 = vpop.permute.xlu0 %1438
    %v1442 = vsel %vm73, %v1390, 0
    %v1445 = vsel %vm73, %v1391, 0
    %1447 = vmatpush.bf16.msra.mxu0 0
    %1448 = vmatpush.bf16.msra.mxu0 0
    %1449 = vmatpush.bf16.msra.mxu0 0
    %1450 = vmatpush.bf16.msra.mxu0 0
    %1451 = vmatpush.bf16.msra.mxu0 0
    %1452 = vmatpush.bf16.msra.mxu0 0
    %1453 = vmatpush.bf16.msra.mxu0 %v1435
    %1454 = vmatpush.bf16.msra.mxu0 %v1433
    %1455 = vmatmul.bf16.gmra.mxu0 %v1442
    %v1456 = vpop.f32.mrf.mxu0
    %v1457 = vadd.f32 %v1439, %v1456
    %v1458 = vpop.f32.mrf.mxu0
    %v1459 = vadd.f32 %v1439, %v1458
    %1460 = vmatmul.bf16.gmra.mxu0 %v1445
    %v1461 = vpop.f32.mrf.mxu0
    %v1462 = vadd.f32 %v1439, %v1461
    %v1463 = vpop.f32.mrf.mxu0
    %v1464 = vadd.f32 %v1439, %v1463
    %1465 = vdwg.mxu0
    %v1467 = vsel %vm102, %v1423, 0
    %v1470 = vsel %vm102, %v1457, 0
    %1472 = vmatpush.xpose.msra.mxu0 0.0
    %1473 = vmatpush.xpose.msra.mxu0 0.0
    %1474 = vmatpush.xpose.msra.mxu0 0.0
    %1475 = vmatpush.xpose.msra.mxu0 0.0
    %1476 = vmatpush.xpose.msra.mxu0 0.0
    %1477 = vmatpush.xpose.msra.mxu0 0.0
    %1478 = vmatpush.xpose.msra.mxu0 0.0
    %1479 = vmatpush.xpose.msra.mxu0 0.0
    %1480 = vmatpush.xpose.msra.mxu0 0.0
    %1481 = vmatpush.xpose.msra.mxu0 0.0
    %1482 = vmatpush.xpose.msra.mxu0 0.0
    %1483 = vmatpush.xpose.msra.mxu0 0.0
    %1484 = vmatpush.xpose.msra.mxu0 0.0
    %1485 = vmatpush.xpose.msra.mxu0 0.0
    %1486 = vmatpush.xpose.msra.mxu0 0.0
    %1487 = vmatpush.xpose.msra.mxu0 %v1470
    %1488 = vmatmul.f32.gmra.mxu0 %v1467
    %v1489 = vpop.f32.mrf.mxu0
    %v1490 = vadd.f32 0.0, %v1489
    %1491 = vdwg.mxu0
    %v1493 = vsel %vm102, %v1425, 0
    %v1496 = vsel %vm102, %v1459, 0
    %1498 = vmatpush.xpose.msra.mxu0 0.0
    %1499 = vmatpush.xpose.msra.mxu0 0.0
    %1500 = vmatpush.xpose.msra.mxu0 0.0
    %1501 = vmatpush.xpose.msra.mxu0 0.0
    %1502 = vmatpush.xpose.msra.mxu0 0.0
    %1503 = vmatpush.xpose.msra.mxu0 0.0
    %1504 = vmatpush.xpose.msra.mxu0 0.0
    %1505 = vmatpush.xpose.msra.mxu0 0.0
    %1506 = vmatpush.xpose.msra.mxu0 0.0
    %1507 = vmatpush.xpose.msra.mxu0 0.0
    %1508 = vmatpush.xpose.msra.mxu0 0.0
    %1509 = vmatpush.xpose.msra.mxu0 0.0
    %1510 = vmatpush.xpose.msra.mxu0 0.0
    %1511 = vmatpush.xpose.msra.mxu0 0.0
    %1512 = vmatpush.xpose.msra.mxu0 0.0
    %1513 = vmatpush.xpose.msra.mxu0 %v1496
    %1514 = vmatmul.f32.gmra.mxu0 %v1493
    %v1515 = vpop.f32.mrf.mxu0
    %v1516 = vadd.f32 0.0, %v1515
    %1517 = vdwg.mxu0
    %v1519 = vsel %vm102, %v1428, 0
    %v1522 = vsel %vm102, %v1462, 0
    %1524 = vmatpush.xpose.msra.mxu0 0.0
    %1525 = vmatpush.xpose.msra.mxu0 0.0
    %1526 = vmatpush.xpose.msra.mxu0 0.0
    %1527 = vmatpush.xpose.msra.mxu0 0.0
    %1528 = vmatpush.xpose.msra.mxu0 0.0
    %1529 = vmatpush.xpose.msra.mxu0 0.0
    %1530 = vmatpush.xpose.msra.mxu0 0.0
    %1531 = vmatpush.xpose.msra.mxu0 0.0
    %1532 = vmatpush.xpose.msra.mxu0 0.0
    %1533 = vmatpush.xpose.msra.mxu0 0.0
    %1534 = vmatpush.xpose.msra.mxu0 0.0
    %1535 = vmatpush.xpose.msra.mxu0 0.0
    %1536 = vmatpush.xpose.msra.mxu0 0.0
    %1537 = vmatpush.xpose.msra.mxu0 0.0
    %1538 = vmatpush.xpose.msra.mxu0 0.0
    %1539 = vmatpush.xpose.msra.mxu0 %v1522
    %1540 = vmatmul.f32.gmra.mxu0 %v1519
    %v1541 = vpop.f32.mrf.mxu0
    %v1542 = vadd.f32 0.0, %v1541
    %1543 = vdwg.mxu0
    %v1545 = vsel %vm102, %v1430, 0
    %v1548 = vsel %vm102, %v1464, 0
    %1550 = vmatpush.xpose.msra.mxu0 0.0
    %1551 = vmatpush.xpose.msra.mxu0 0.0
    %1552 = vmatpush.xpose.msra.mxu0 0.0
    %1553 = vmatpush.xpose.msra.mxu0 0.0
    %1554 = vmatpush.xpose.msra.mxu0 0.0
    %1555 = vmatpush.xpose.msra.mxu0 0.0
    %1556 = vmatpush.xpose.msra.mxu0 0.0
    %1557 = vmatpush.xpose.msra.mxu0 0.0
    %1558 = vmatpush.xpose.msra.mxu0 0.0
    %1559 = vmatpush.xpose.msra.mxu0 0.0
    %1560 = vmatpush.xpose.msra.mxu0 0.0
    %1561 = vmatpush.xpose.msra.mxu0 0.0
    %1562 = vmatpush.xpose.msra.mxu0 0.0
    %1563 = vmatpush.xpose.msra.mxu0 0.0
    %1564 = vmatpush.xpose.msra.mxu0 0.0
    %1565 = vmatpush.xpose.msra.mxu0 %v1548
    %1566 = vmatmul.f32.gmra.mxu0 %v1545
    %v1567 = vpop.f32.mrf.mxu0
    %v1568 = vadd.f32 0.0, %v1567
    %1569 = vdwg.mxu0
    %v1570 = vmul.f32 %v1490, 0.35355338
    %v1571 = vmul.f32 %v1516, 0.35355338
    %v1572 = vmul.f32 %v1542, 0.35355338
    %v1573 = vmul.f32 %v1568, 0.35355338
    %v1574 = vsel %vm102, %v1570, -inf
    %1575 = vmax.xlane.f32.xlu0 %v1574
    %v1576 = vpop.xlane.xlu0 %1575
    %v1577 = vsel %vm102, %v1571, -inf
    %1578 = vmax.xlane.f32.xlu0 %v1577
    %v1579 = vpop.xlane.xlu0 %1578
    %v1580 = vsel %vm102, %v1572, -inf
    %1581 = vmax.xlane.f32.xlu0 %v1580
    %v1582 = vpop.xlane.xlu0 %1581
    %v1583 = vsel %vm102, %v1573, -inf
    %1584 = vmax.xlane.f32.xlu0 %v1583
    %v1585 = vpop.xlane.xlu0 %1584
    %v1586 = vsub.f32 %v1570, %v1576
    %v1587 = vsub.f32 %v1571, %v1579
    %v1588 = vsub.f32 %v1572, %v1582
    %v1589 = vsub.f32 %v1573, %v1585
    %v1590 = vmul.f32 %v1586, 1.442695
    %v1591 = vpow.pop %v1590
    %v1592 = vmul.f32 %v1587, 1.442695
    %v1593 = vpow.pop %v1592
    %v1594 = vmul.f32 %v1588, 1.442695
    %v1595 = vpow.pop %v1594
    %v1596 = vmul.f32 %v1589, 1.442695
    %v1597 = vpow.pop %v1596
    %v1598 = vsel %vm102, %v1591, 0.0
    %1599 = vadd.xlane.f32.xlu0 %v1598
    %v1600 = vpop.xlane.xlu0 %1599
    %v1601 = vsel %vm102, %v1593, 0.0
    %1602 = vadd.xlane.f32.xlu0 %v1601
    %v1603 = vpop.xlane.xlu0 %1602
    %v1604 = vsel %vm102, %v1595, 0.0
    %1605 = vadd.xlane.f32.xlu0 %v1604
    %v1606 = vpop.xlane.xlu0 %1605
    %v1607 = vsel %vm102, %v1597, 0.0
    %1608 = vadd.xlane.f32.xlu0 %v1607
    %v1609 = vpop.xlane.xlu0 %1608
    %v1610 = vrcp.pop %v1600
    %v1611 = vrcp.pop %v1603
    %v1612 = vrcp.pop %v1606
    %v1613 = vrcp.pop %v1609
    %v1614 = vmul.f32 %v1591, %v1610
    %v1615 = vmul.f32 %v1593, %v1611
    %v1616 = vmul.f32 %v1595, %v1612
    %v1617 = vmul.f32 %v1597, %v1613
    %1618 = vrot.lane.b32.xlu0 %v1457, 96
    %v1619 = vpop.permute.xlu0 %1618
    %v1622 = vsel %vm102, %v1614, 0
    %1624 = vmatpush.msra.mxu0 0.0
    %1625 = vmatpush.msra.mxu0 0.0
    %1626 = vmatpush.msra.mxu0 0.0
    %1627 = vmatpush.msra.mxu0 0.0
    %1628 = vmatpush.msra.mxu0 0.0
    %1629 = vmatpush.msra.mxu0 0.0
    %1630 = vmatpush.msra.mxu0 0.0
    %1631 = vmatpush.msra.mxu0 0.0
    %1632 = vmatpush.msra.mxu0 0.0
    %1633 = vmatpush.msra.mxu0 0.0
    %1634 = vmatpush.msra.mxu0 0.0
    %1635 = vmatpush.msra.mxu0 0.0
    %1636 = vmatpush.msra.mxu0 0.0
    %1637 = vmatpush.msra.mxu0 0.0
    %1638 = vmatpush.msra.mxu0 0.0
    %1639 = vmatpush.msra.mxu0 %v1619
    %1640 = vmatmul.f32.gmra.mxu0 %v1622
    %v1641 = vpop.f32.mrf.mxu0
    %v1642 = vadd.f32 0.0, %v1641
    %1643 = vdwg.mxu0
    %1644 = vrot.lane.b32.xlu0 %v1459, 96
    %v1645 = vpop.permute.xlu0 %1644
    %v1648 = vsel %vm102, %v1615, 0
    %1650 = vmatpush.msra.mxu0 0.0
    %1651 = vmatpush.msra.mxu0 0.0
    %1652 = vmatpush.msra.mxu0 0.0
    %1653 = vmatpush.msra.mxu0 0.0
    %1654 = vmatpush.msra.mxu0 0.0
    %1655 = vmatpush.msra.mxu0 0.0
    %1656 = vmatpush.msra.mxu0 0.0
    %1657 = vmatpush.msra.mxu0 0.0
    %1658 = vmatpush.msra.mxu0 0.0
    %1659 = vmatpush.msra.mxu0 0.0
    %1660 = vmatpush.msra.mxu0 0.0
    %1661 = vmatpush.msra.mxu0 0.0
    %1662 = vmatpush.msra.mxu0 0.0
    %1663 = vmatpush.msra.mxu0 0.0
    %1664 = vmatpush.msra.mxu0 0.0
    %1665 = vmatpush.msra.mxu0 %v1645
    %1666 = vmatmul.f32.gmra.mxu0 %v1648
    %v1667 = vpop.f32.mrf.mxu0
    %v1668 = vadd.f32 0.0, %v1667
    %1669 = vdwg.mxu0
    %1670 = vrot.lane.b32.xlu0 %v1462, 96
    %v1671 = vpop.permute.xlu0 %1670
    %v1674 = vsel %vm102, %v1616, 0
    %1676 = vmatpush.msra.mxu0 0.0
    %1677 = vmatpush.msra.mxu0 0.0
    %1678 = vmatpush.msra.mxu0 0.0
    %1679 = vmatpush.msra.mxu0 0.0
    %1680 = vmatpush.msra.mxu0 0.0
    %1681 = vmatpush.msra.mxu0 0.0
    %1682 = vmatpush.msra.mxu0 0.0
    %1683 = vmatpush.msra.mxu0 0.0
    %1684 = vmatpush.msra.mxu0 0.0
    %1685 = vmatpush.msra.mxu0 0.0
    %1686 = vmatpush.msra.mxu0 0.0
    %1687 = vmatpush.msra.mxu0 0.0
    %1688 = vmatpush.msra.mxu0 0.0
    %1689 = vmatpush.msra.mxu0 0.0
    %1690 = vmatpush.msra.mxu0 0.0
    %1691 = vmatpush.msra.mxu0 %v1671
    %1692 = vmatmul.f32.gmra.mxu0 %v1674
    %v1693 = vpop.f32.mrf.mxu0
    %v1694 = vadd.f32 0.0, %v1693
    %1695 = vdwg.mxu0
    %1696 = vrot.lane.b32.xlu0 %v1464, 96
    %v1697 = vpop.permute.xlu0 %1696
    %v1700 = vsel %vm102, %v1617, 0
    %1702 = vmatpush.msra.mxu0 0.0
    %1703 = vmatpush.msra.mxu0 0.0
    %1704 = vmatpush.msra.mxu0 0.0
    %1705 = vmatpush.msra.mxu0 0.0
    %1706 = vmatpush.msra.mxu0 0.0
    %1707 = vmatpush.msra.mxu0 0.0
    %1708 = vmatpush.msra.mxu0 0.0
    %1709 = vmatpush.msra.mxu0 0.0
    %1710 = vmatpush.msra.mxu0 0.0
    %1711 = vmatpush.msra.mxu0 0.0
    %1712 = vmatpush.msra.mxu0 0.0
    %1713 = vmatpush.msra.mxu0 0.0
    %1714 = vmatpush.msra.mxu0 0.0
    %1715 = vmatpush.msra.mxu0 0.0
    %1716 = vmatpush.msra.mxu0 0.0
    %1717 = vmatpush.msra.mxu0 %v1697
    %1718 = vmatmul.f32.gmra.mxu0 %v1700
    %v1719 = vpop.f32.mrf.mxu0
    %v1720 = vadd.f32 0.0, %v1719
    %1721 = vdwg.mxu0
    %1722 = vrot.lane.b32.xlu0 %v1423, 120
    %v1723 = vpop.permute.xlu0 %1722
    %1724 = vrot.lane.b32.xlu0 %v1457, 120
    %v1725 = vpop.permute.xlu0 %1724
    %v1726 = vsel %vm102, %v1723, 0
    %v1728 = vsel %vm102, %v1725, 0
    %1730 = vmatpush.xpose.msra.mxu0 0.0
    %1731 = vmatpush.xpose.msra.mxu0 0.0
    %1732 = vmatpush.xpose.msra.mxu0 0.0
    %1733 = vmatpush.xpose.msra.mxu0 0.0
    %1734 = vmatpush.xpose.msra.mxu0 0.0
    %1735 = vmatpush.xpose.msra.mxu0 0.0
    %1736 = vmatpush.xpose.msra.mxu0 0.0
    %1737 = vmatpush.xpose.msra.mxu0 0.0
    %1738 = vmatpush.xpose.msra.mxu0 0.0
    %1739 = vmatpush.xpose.msra.mxu0 0.0
    %1740 = vmatpush.xpose.msra.mxu0 0.0
    %1741 = vmatpush.xpose.msra.mxu0 0.0
    %1742 = vmatpush.xpose.msra.mxu0 0.0
    %1743 = vmatpush.xpose.msra.mxu0 0.0
    %1744 = vmatpush.xpose.msra.mxu0 0.0
    %1745 = vmatpush.xpose.msra.mxu0 %v1728
    %1746 = vmatmul.f32.gmra.mxu0 %v1726
    %v1747 = vpop.f32.mrf.mxu0
    %v1748 = vadd.f32 0.0, %v1747
    %1749 = vdwg.mxu0
    %1750 = vrot.lane.b32.xlu0 %v1425, 120
    %v1751 = vpop.permute.xlu0 %1750
    %1752 = vrot.lane.b32.xlu0 %v1459, 120
    %v1753 = vpop.permute.xlu0 %1752
    %v1754 = vsel %vm102, %v1751, 0
    %v1756 = vsel %vm102, %v1753, 0
    %1758 = vmatpush.xpose.msra.mxu0 0.0
    %1759 = vmatpush.xpose.msra.mxu0 0.0
    %1760 = vmatpush.xpose.msra.mxu0 0.0
    %1761 = vmatpush.xpose.msra.mxu0 0.0
    %1762 = vmatpush.xpose.msra.mxu0 0.0
    %1763 = vmatpush.xpose.msra.mxu0 0.0
    %1764 = vmatpush.xpose.msra.mxu0 0.0
    %1765 = vmatpush.xpose.msra.mxu0 0.0
    %1766 = vmatpush.xpose.msra.mxu0 0.0
    %1767 = vmatpush.xpose.msra.mxu0 0.0
    %1768 = vmatpush.xpose.msra.mxu0 0.0
    %1769 = vmatpush.xpose.msra.mxu0 0.0
    %1770 = vmatpush.xpose.msra.mxu0 0.0
    %1771 = vmatpush.xpose.msra.mxu0 0.0
    %1772 = vmatpush.xpose.msra.mxu0 0.0
    %1773 = vmatpush.xpose.msra.mxu0 %v1756
    %1774 = vmatmul.f32.gmra.mxu0 %v1754
    %v1775 = vpop.f32.mrf.mxu0
    %v1776 = vadd.f32 0.0, %v1775
    %1777 = vdwg.mxu0
    %1778 = vrot.lane.b32.xlu0 %v1428, 120
    %v1779 = vpop.permute.xlu0 %1778
    %1780 = vrot.lane.b32.xlu0 %v1462, 120
    %v1781 = vpop.permute.xlu0 %1780
    %v1782 = vsel %vm102, %v1779, 0
    %v1784 = vsel %vm102, %v1781, 0
    %1786 = vmatpush.xpose.msra.mxu0 0.0
    %1787 = vmatpush.xpose.msra.mxu0 0.0
    %1788 = vmatpush.xpose.msra.mxu0 0.0
    %1789 = vmatpush.xpose.msra.mxu0 0.0
    %1790 = vmatpush.xpose.msra.mxu0 0.0
    %1791 = vmatpush.xpose.msra.mxu0 0.0
    %1792 = vmatpush.xpose.msra.mxu0 0.0
    %1793 = vmatpush.xpose.msra.mxu0 0.0
    %1794 = vmatpush.xpose.msra.mxu0 0.0
    %1795 = vmatpush.xpose.msra.mxu0 0.0
    %1796 = vmatpush.xpose.msra.mxu0 0.0
    %1797 = vmatpush.xpose.msra.mxu0 0.0
    %1798 = vmatpush.xpose.msra.mxu0 0.0
    %1799 = vmatpush.xpose.msra.mxu0 0.0
    %1800 = vmatpush.xpose.msra.mxu0 0.0
    %1801 = vmatpush.xpose.msra.mxu0 %v1784
    %1802 = vmatmul.f32.gmra.mxu0 %v1782
    %v1803 = vpop.f32.mrf.mxu0
    %v1804 = vadd.f32 0.0, %v1803
    %1805 = vdwg.mxu0
    %1806 = vrot.lane.b32.xlu0 %v1430, 120
    %v1807 = vpop.permute.xlu0 %1806
    %1808 = vrot.lane.b32.xlu0 %v1464, 120
    %v1809 = vpop.permute.xlu0 %1808
    %v1810 = vsel %vm102, %v1807, 0
    %v1812 = vsel %vm102, %v1809, 0
    %1814 = vmatpush.xpose.msra.mxu0 0.0
    %1815 = vmatpush.xpose.msra.mxu0 0.0
    %1816 = vmatpush.xpose.msra.mxu0 0.0
    %1817 = vmatpush.xpose.msra.mxu0 0.0
    %1818 = vmatpush.xpose.msra.mxu0 0.0
    %1819 = vmatpush.xpose.msra.mxu0 0.0
    %1820 = vmatpush.xpose.msra.mxu0 0.0
    %1821 = vmatpush.xpose.msra.mxu0 0.0
    %1822 = vmatpush.xpose.msra.mxu0 0.0
    %1823 = vmatpush.xpose.msra.mxu0 0.0
    %1824 = vmatpush.xpose.msra.mxu0 0.0
    %1825 = vmatpush.xpose.msra.mxu0 0.0
    %1826 = vmatpush.xpose.msra.mxu0 0.0
    %1827 = vmatpush.xpose.msra.mxu0 0.0
    %1828 = vmatpush.xpose.msra.mxu0 0.0
    %1829 = vmatpush.xpose.msra.mxu0 %v1812
    %1830 = vmatmul.f32.gmra.mxu0 %v1810
    %v1831 = vpop.f32.mrf.mxu0
    %v1832 = vadd.f32 0.0, %v1831
    %1833 = vdwg.mxu0
    %v1834 = vmul.f32 %v1748, 0.35355338
    %v1835 = vmul.f32 %v1776, 0.35355338
    %v1836 = vmul.f32 %v1804, 0.35355338
    %v1837 = vmul.f32 %v1832, 0.35355338
    %v1838 = vsel %vm102, %v1834, -inf
    %1839 = vmax.xlane.f32.xlu0 %v1838
    %v1840 = vpop.xlane.xlu0 %1839
    %v1841 = vsel %vm102, %v1835, -inf
    %1842 = vmax.xlane.f32.xlu0 %v1841
    %v1843 = vpop.xlane.xlu0 %1842
    %v1844 = vsel %vm102, %v1836, -inf
    %1845 = vmax.xlane.f32.xlu0 %v1844
    %v1846 = vpop.xlane.xlu0 %1845
    %v1847 = vsel %vm102, %v1837, -inf
    %1848 = vmax.xlane.f32.xlu0 %v1847
    %v1849 = vpop.xlane.xlu0 %1848
    %v1850 = vsub.f32 %v1834, %v1840
    %v1851 = vsub.f32 %v1835, %v1843
    %v1852 = vsub.f32 %v1836, %v1846
    %v1853 = vsub.f32 %v1837, %v1849
    %v1854 = vmul.f32 %v1850, 1.442695
    %v1855 = vpow.pop %v1854
    %v1856 = vmul.f32 %v1851, 1.442695
    %v1857 = vpow.pop %v1856
    %v1858 = vmul.f32 %v1852, 1.442695
    %v1859 = vpow.pop %v1858
    %v1860 = vmul.f32 %v1853, 1.442695
    %v1861 = vpow.pop %v1860
    %v1862 = vsel %vm102, %v1855, 0.0
    %1863 = vadd.xlane.f32.xlu0 %v1862
    %v1864 = vpop.xlane.xlu0 %1863
    %v1865 = vsel %vm102, %v1857, 0.0
    %1866 = vadd.xlane.f32.xlu0 %v1865
    %v1867 = vpop.xlane.xlu0 %1866
    %v1868 = vsel %vm102, %v1859, 0.0
    %1869 = vadd.xlane.f32.xlu0 %v1868
    %v1870 = vpop.xlane.xlu0 %1869
    %v1871 = vsel %vm102, %v1861, 0.0
    %1872 = vadd.xlane.f32.xlu0 %v1871
    %v1873 = vpop.xlane.xlu0 %1872
    %v1874 = vrcp.pop %v1864
    %v1875 = vrcp.pop %v1867
    %v1876 = vrcp.pop %v1870
    %v1877 = vrcp.pop %v1873
    %v1878 = vmul.f32 %v1855, %v1874
    %v1879 = vmul.f32 %v1857, %v1875
    %v1880 = vmul.f32 %v1859, %v1876
    %v1881 = vmul.f32 %v1861, %v1877
    %1882 = vrot.lane.b32.xlu0 %v1457, 88
    %v1883 = vpop.permute.xlu0 %1882
    %v1886 = vsel %vm102, %v1878, 0
    %1888 = vmatpush.msra.mxu0 0.0
    %1889 = vmatpush.msra.mxu0 0.0
    %1890 = vmatpush.msra.mxu0 0.0
    %1891 = vmatpush.msra.mxu0 0.0
    %1892 = vmatpush.msra.mxu0 0.0
    %1893 = vmatpush.msra.mxu0 0.0
    %1894 = vmatpush.msra.mxu0 0.0
    %1895 = vmatpush.msra.mxu0 0.0
    %1896 = vmatpush.msra.mxu0 0.0
    %1897 = vmatpush.msra.mxu0 0.0
    %1898 = vmatpush.msra.mxu0 0.0
    %1899 = vmatpush.msra.mxu0 0.0
    %1900 = vmatpush.msra.mxu0 0.0
    %1901 = vmatpush.msra.mxu0 0.0
    %1902 = vmatpush.msra.mxu0 0.0
    %1903 = vmatpush.msra.mxu0 %v1883
    %1904 = vmatmul.f32.gmra.mxu0 %v1886
    %v1905 = vpop.f32.mrf.mxu0
    %v1906 = vadd.f32 0.0, %v1905
    %1907 = vdwg.mxu0
    %1908 = vrot.lane.b32.xlu0 %v1459, 88
    %v1909 = vpop.permute.xlu0 %1908
    %v1912 = vsel %vm102, %v1879, 0
    %1914 = vmatpush.msra.mxu0 0.0
    %1915 = vmatpush.msra.mxu0 0.0
    %1916 = vmatpush.msra.mxu0 0.0
    %1917 = vmatpush.msra.mxu0 0.0
    %1918 = vmatpush.msra.mxu0 0.0
    %1919 = vmatpush.msra.mxu0 0.0
    %1920 = vmatpush.msra.mxu0 0.0
    %1921 = vmatpush.msra.mxu0 0.0
    %1922 = vmatpush.msra.mxu0 0.0
    %1923 = vmatpush.msra.mxu0 0.0
    %1924 = vmatpush.msra.mxu0 0.0
    %1925 = vmatpush.msra.mxu0 0.0
    %1926 = vmatpush.msra.mxu0 0.0
    %1927 = vmatpush.msra.mxu0 0.0
    %1928 = vmatpush.msra.mxu0 0.0
    %1929 = vmatpush.msra.mxu0 %v1909
    %1930 = vmatmul.f32.gmra.mxu0 %v1912
    %v1931 = vpop.f32.mrf.mxu0
    %v1932 = vadd.f32 0.0, %v1931
    %1933 = vdwg.mxu0
    %1934 = vrot.lane.b32.xlu0 %v1462, 88
    %v1935 = vpop.permute.xlu0 %1934
    %v1938 = vsel %vm102, %v1880, 0
    %1940 = vmatpush.msra.mxu0 0.0
    %1941 = vmatpush.msra.mxu0 0.0
    %1942 = vmatpush.msra.mxu0 0.0
    %1943 = vmatpush.msra.mxu0 0.0
    %1944 = vmatpush.msra.mxu0 0.0
    %1945 = vmatpush.msra.mxu0 0.0
    %1946 = vmatpush.msra.mxu0 0.0
    %1947 = vmatpush.msra.mxu0 0.0
    %1948 = vmatpush.msra.mxu0 0.0
    %1949 = vmatpush.msra.mxu0 0.0
    %1950 = vmatpush.msra.mxu0 0.0
    %1951 = vmatpush.msra.mxu0 0.0
    %1952 = vmatpush.msra.mxu0 0.0
    %1953 = vmatpush.msra.mxu0 0.0
    %1954 = vmatpush.msra.mxu0 0.0
    %1955 = vmatpush.msra.mxu0 %v1935
    %1956 = vmatmul.f32.gmra.mxu0 %v1938
    %v1957 = vpop.f32.mrf.mxu0
    %v1958 = vadd.f32 0.0, %v1957
    %1959 = vdwg.mxu0
    %1960 = vrot.lane.b32.xlu0 %v1464, 88
    %v1961 = vpop.permute.xlu0 %1960
    %v1964 = vsel %vm102, %v1881, 0
    %1966 = vmatpush.msra.mxu0 0.0
    %1967 = vmatpush.msra.mxu0 0.0
    %1968 = vmatpush.msra.mxu0 0.0
    %1969 = vmatpush.msra.mxu0 0.0
    %1970 = vmatpush.msra.mxu0 0.0
    %1971 = vmatpush.msra.mxu0 0.0
    %1972 = vmatpush.msra.mxu0 0.0
    %1973 = vmatpush.msra.mxu0 0.0
    %1974 = vmatpush.msra.mxu0 0.0
    %1975 = vmatpush.msra.mxu0 0.0
    %1976 = vmatpush.msra.mxu0 0.0
    %1977 = vmatpush.msra.mxu0 0.0
    %1978 = vmatpush.msra.mxu0 0.0
    %1979 = vmatpush.msra.mxu0 0.0
    %1980 = vmatpush.msra.mxu0 0.0
    %1981 = vmatpush.msra.mxu0 %v1961
    %1982 = vmatmul.f32.gmra.mxu0 %v1964
    %v1983 = vpop.f32.mrf.mxu0
    %v1984 = vadd.f32 0.0, %v1983
    %1985 = vdwg.mxu0
    %1986 = vrot.lane.b32.xlu0 %v1423, 112
    %v1987 = vpop.permute.xlu0 %1986
    %1988 = vrot.lane.b32.xlu0 %v1457, 112
    %v1989 = vpop.permute.xlu0 %1988
    %v1990 = vsel %vm102, %v1987, 0
    %v1992 = vsel %vm102, %v1989, 0
    %1994 = vmatpush.xpose.msra.mxu0 0.0
    %1995 = vmatpush.xpose.msra.mxu0 0.0
    %1996 = vmatpush.xpose.msra.mxu0 0.0
    %1997 = vmatpush.xpose.msra.mxu0 0.0
    %1998 = vmatpush.xpose.msra.mxu0 0.0
    %1999 = vmatpush.xpose.msra.mxu0 0.0
    %2000 = vmatpush.xpose.msra.mxu0 0.0
    %2001 = vmatpush.xpose.msra.mxu0 0.0
    %2002 = vmatpush.xpose.msra.mxu0 0.0
    %2003 = vmatpush.xpose.msra.mxu0 0.0
    %2004 = vmatpush.xpose.msra.mxu0 0.0
    %2005 = vmatpush.xpose.msra.mxu0 0.0
    %2006 = vmatpush.xpose.msra.mxu0 0.0
    %2007 = vmatpush.xpose.msra.mxu0 0.0
    %2008 = vmatpush.xpose.msra.mxu0 0.0
    %2009 = vmatpush.xpose.msra.mxu0 %v1992
    %2010 = vmatmul.f32.gmra.mxu0 %v1990
    %v2011 = vpop.f32.mrf.mxu0
    %v2012 = vadd.f32 0.0, %v2011
    %2013 = vdwg.mxu0
    %2014 = vrot.lane.b32.xlu0 %v1425, 112
    %v2015 = vpop.permute.xlu0 %2014
    %2016 = vrot.lane.b32.xlu0 %v1459, 112
    %v2017 = vpop.permute.xlu0 %2016
    %v2018 = vsel %vm102, %v2015, 0
    %v2020 = vsel %vm102, %v2017, 0
    %2022 = vmatpush.xpose.msra.mxu0 0.0
    %2023 = vmatpush.xpose.msra.mxu0 0.0
    %2024 = vmatpush.xpose.msra.mxu0 0.0
    %2025 = vmatpush.xpose.msra.mxu0 0.0
    %2026 = vmatpush.xpose.msra.mxu0 0.0
    %2027 = vmatpush.xpose.msra.mxu0 0.0
    %2028 = vmatpush.xpose.msra.mxu0 0.0
    %2029 = vmatpush.xpose.msra.mxu0 0.0
    %2030 = vmatpush.xpose.msra.mxu0 0.0
    %2031 = vmatpush.xpose.msra.mxu0 0.0
    %2032 = vmatpush.xpose.msra.mxu0 0.0
    %2033 = vmatpush.xpose.msra.mxu0 0.0
    %2034 = vmatpush.xpose.msra.mxu0 0.0
    %2035 = vmatpush.xpose.msra.mxu0 0.0
    %2036 = vmatpush.xpose.msra.mxu0 0.0
    %2037 = vmatpush.xpose.msra.mxu0 %v2020
    %2038 = vmatmul.f32.gmra.mxu0 %v2018
    %v2039 = vpop.f32.mrf.mxu0
    %v2040 = vadd.f32 0.0, %v2039
    %2041 = vdwg.mxu0
    %2042 = vrot.lane.b32.xlu0 %v1428, 112
    %v2043 = vpop.permute.xlu0 %2042
    %2044 = vrot.lane.b32.xlu0 %v1462, 112
    %v2045 = vpop.permute.xlu0 %2044
    %v2046 = vsel %vm102, %v2043, 0
    %v2048 = vsel %vm102, %v2045, 0
    %2050 = vmatpush.xpose.msra.mxu0 0.0
    %2051 = vmatpush.xpose.msra.mxu0 0.0
    %2052 = vmatpush.xpose.msra.mxu0 0.0
    %2053 = vmatpush.xpose.msra.mxu0 0.0
    %2054 = vmatpush.xpose.msra.mxu0 0.0
    %2055 = vmatpush.xpose.msra.mxu0 0.0
    %2056 = vmatpush.xpose.msra.mxu0 0.0
    %2057 = vmatpush.xpose.msra.mxu0 0.0
    %2058 = vmatpush.xpose.msra.mxu0 0.0
    %2059 = vmatpush.xpose.msra.mxu0 0.0
    %2060 = vmatpush.xpose.msra.mxu0 0.0
    %2061 = vmatpush.xpose.msra.mxu0 0.0
    %2062 = vmatpush.xpose.msra.mxu0 0.0
    %2063 = vmatpush.xpose.msra.mxu0 0.0
    %2064 = vmatpush.xpose.msra.mxu0 0.0
    %2065 = vmatpush.xpose.msra.mxu0 %v2048
    %2066 = vmatmul.f32.gmra.mxu0 %v2046
    %v2067 = vpop.f32.mrf.mxu0
    %v2068 = vadd.f32 0.0, %v2067
    %2069 = vdwg.mxu0
    %2070 = vrot.lane.b32.xlu0 %v1430, 112
    %v2071 = vpop.permute.xlu0 %2070
    %2072 = vrot.lane.b32.xlu0 %v1464, 112
    %v2073 = vpop.permute.xlu0 %2072
    %v2074 = vsel %vm102, %v2071, 0
    %v2076 = vsel %vm102, %v2073, 0
    %2078 = vmatpush.xpose.msra.mxu0 0.0
    %2079 = vmatpush.xpose.msra.mxu0 0.0
    %2080 = vmatpush.xpose.msra.mxu0 0.0
    %2081 = vmatpush.xpose.msra.mxu0 0.0
    %2082 = vmatpush.xpose.msra.mxu0 0.0
    %2083 = vmatpush.xpose.msra.mxu0 0.0
    %2084 = vmatpush.xpose.msra.mxu0 0.0
    %2085 = vmatpush.xpose.msra.mxu0 0.0
    %2086 = vmatpush.xpose.msra.mxu0 0.0
    %2087 = vmatpush.xpose.msra.mxu0 0.0
    %2088 = vmatpush.xpose.msra.mxu0 0.0
    %2089 = vmatpush.xpose.msra.mxu0 0.0
    %2090 = vmatpush.xpose.msra.mxu0 0.0
    %2091 = vmatpush.xpose.msra.mxu0 0.0
    %2092 = vmatpush.xpose.msra.mxu0 0.0
    %2093 = vmatpush.xpose.msra.mxu0 %v2076
    %2094 = vmatmul.f32.gmra.mxu0 %v2074
    %v2095 = vpop.f32.mrf.mxu0
    %v2096 = vadd.f32 0.0, %v2095
    %2097 = vdwg.mxu0
    %v2098 = vmul.f32 %v2012, 0.35355338
    %v2099 = vmul.f32 %v2040, 0.35355338
    %v2100 = vmul.f32 %v2068, 0.35355338
    %v2101 = vmul.f32 %v2096, 0.35355338
    %v2102 = vsel %vm102, %v2098, -inf
    %2103 = vmax.xlane.f32.xlu0 %v2102
    %v2104 = vpop.xlane.xlu0 %2103
    %v2105 = vsel %vm102, %v2099, -inf
    %2106 = vmax.xlane.f32.xlu0 %v2105
    %v2107 = vpop.xlane.xlu0 %2106
    %v2108 = vsel %vm102, %v2100, -inf
    %2109 = vmax.xlane.f32.xlu0 %v2108
    %v2110 = vpop.xlane.xlu0 %2109
    %v2111 = vsel %vm102, %v2101, -inf
    %2112 = vmax.xlane.f32.xlu0 %v2111
    %v2113 = vpop.xlane.xlu0 %2112
    %v2114 = vsub.f32 %v2098, %v2104
    %v2115 = vsub.f32 %v2099, %v2107
    %v2116 = vsub.f32 %v2100, %v2110
    %v2117 = vsub.f32 %v2101, %v2113
    %v2118 = vmul.f32 %v2114, 1.442695
    %v2119 = vpow.pop %v2118
    %v2120 = vmul.f32 %v2115, 1.442695
    %v2121 = vpow.pop %v2120
    %v2122 = vmul.f32 %v2116, 1.442695
    %v2123 = vpow.pop %v2122
    %v2124 = vmul.f32 %v2117, 1.442695
    %v2125 = vpow.pop %v2124
    %v2126 = vsel %vm102, %v2119, 0.0
    %2127 = vadd.xlane.f32.xlu0 %v2126
    %v2128 = vpop.xlane.xlu0 %2127
    %v2129 = vsel %vm102, %v2121, 0.0
    %2130 = vadd.xlane.f32.xlu0 %v2129
    %v2131 = vpop.xlane.xlu0 %2130
    %v2132 = vsel %vm102, %v2123, 0.0
    %2133 = vadd.xlane.f32.xlu0 %v2132
    %v2134 = vpop.xlane.xlu0 %2133
    %v2135 = vsel %vm102, %v2125, 0.0
    %2136 = vadd.xlane.f32.xlu0 %v2135
    %v2137 = vpop.xlane.xlu0 %2136
    %v2138 = vrcp.pop %v2128
    %v2139 = vrcp.pop %v2131
    %v2140 = vrcp.pop %v2134
    %v2141 = vrcp.pop %v2137
    %v2142 = vmul.f32 %v2119, %v2138
    %v2143 = vmul.f32 %v2121, %v2139
    %v2144 = vmul.f32 %v2123, %v2140
    %v2145 = vmul.f32 %v2125, %v2141
    %2146 = vrot.lane.b32.xlu0 %v1457, 80
    %v2147 = vpop.permute.xlu0 %2146
    %v2150 = vsel %vm102, %v2142, 0
    %2152 = vmatpush.msra.mxu0 0.0
    %2153 = vmatpush.msra.mxu0 0.0
    %2154 = vmatpush.msra.mxu0 0.0
    %2155 = vmatpush.msra.mxu0 0.0
    %2156 = vmatpush.msra.mxu0 0.0
    %2157 = vmatpush.msra.mxu0 0.0
    %2158 = vmatpush.msra.mxu0 0.0
    %2159 = vmatpush.msra.mxu0 0.0
    %2160 = vmatpush.msra.mxu0 0.0
    %2161 = vmatpush.msra.mxu0 0.0
    %2162 = vmatpush.msra.mxu0 0.0
    %2163 = vmatpush.msra.mxu0 0.0
    %2164 = vmatpush.msra.mxu0 0.0
    %2165 = vmatpush.msra.mxu0 0.0
    %2166 = vmatpush.msra.mxu0 0.0
    %2167 = vmatpush.msra.mxu0 %v2147
    %2168 = vmatmul.f32.gmra.mxu0 %v2150
    %v2169 = vpop.f32.mrf.mxu0
    %v2170 = vadd.f32 0.0, %v2169
    %2171 = vdwg.mxu0
    %2172 = vrot.lane.b32.xlu0 %v1459, 80
    %v2173 = vpop.permute.xlu0 %2172
    %v2176 = vsel %vm102, %v2143, 0
    %2178 = vmatpush.msra.mxu0 0.0
    %2179 = vmatpush.msra.mxu0 0.0
    %2180 = vmatpush.msra.mxu0 0.0
    %2181 = vmatpush.msra.mxu0 0.0
    %2182 = vmatpush.msra.mxu0 0.0
    %2183 = vmatpush.msra.mxu0 0.0
    %2184 = vmatpush.msra.mxu0 0.0
    %2185 = vmatpush.msra.mxu0 0.0
    %2186 = vmatpush.msra.mxu0 0.0
    %2187 = vmatpush.msra.mxu0 0.0
    %2188 = vmatpush.msra.mxu0 0.0
    %2189 = vmatpush.msra.mxu0 0.0
    %2190 = vmatpush.msra.mxu0 0.0
    %2191 = vmatpush.msra.mxu0 0.0
    %2192 = vmatpush.msra.mxu0 0.0
    %2193 = vmatpush.msra.mxu0 %v2173
    %2194 = vmatmul.f32.gmra.mxu0 %v2176
    %v2195 = vpop.f32.mrf.mxu0
    %v2196 = vadd.f32 0.0, %v2195
    %2197 = vdwg.mxu0
    %2198 = vrot.lane.b32.xlu0 %v1462, 80
    %v2199 = vpop.permute.xlu0 %2198
    %v2202 = vsel %vm102, %v2144, 0
    %2204 = vmatpush.msra.mxu0 0.0
    %2205 = vmatpush.msra.mxu0 0.0
    %2206 = vmatpush.msra.mxu0 0.0
    %2207 = vmatpush.msra.mxu0 0.0
    %2208 = vmatpush.msra.mxu0 0.0
    %2209 = vmatpush.msra.mxu0 0.0
    %2210 = vmatpush.msra.mxu0 0.0
    %2211 = vmatpush.msra.mxu0 0.0
    %2212 = vmatpush.msra.mxu0 0.0
    %2213 = vmatpush.msra.mxu0 0.0
    %2214 = vmatpush.msra.mxu0 0.0
    %2215 = vmatpush.msra.mxu0 0.0
    %2216 = vmatpush.msra.mxu0 0.0
    %2217 = vmatpush.msra.mxu0 0.0
    %2218 = vmatpush.msra.mxu0 0.0
    %2219 = vmatpush.msra.mxu0 %v2199
    %2220 = vmatmul.f32.gmra.mxu0 %v2202
    %v2221 = vpop.f32.mrf.mxu0
    %v2222 = vadd.f32 0.0, %v2221
    %2223 = vdwg.mxu0
    %2224 = vrot.lane.b32.xlu0 %v1464, 80
    %v2225 = vpop.permute.xlu0 %2224
    %v2228 = vsel %vm102, %v2145, 0
    %2230 = vmatpush.msra.mxu0 0.0
    %2231 = vmatpush.msra.mxu0 0.0
    %2232 = vmatpush.msra.mxu0 0.0
    %2233 = vmatpush.msra.mxu0 0.0
    %2234 = vmatpush.msra.mxu0 0.0
    %2235 = vmatpush.msra.mxu0 0.0
    %2236 = vmatpush.msra.mxu0 0.0
    %2237 = vmatpush.msra.mxu0 0.0
    %2238 = vmatpush.msra.mxu0 0.0
    %2239 = vmatpush.msra.mxu0 0.0
    %2240 = vmatpush.msra.mxu0 0.0
    %2241 = vmatpush.msra.mxu0 0.0
    %2242 = vmatpush.msra.mxu0 0.0
    %2243 = vmatpush.msra.mxu0 0.0
    %2244 = vmatpush.msra.mxu0 0.0
    %2245 = vmatpush.msra.mxu0 %v2225
    %2246 = vmatmul.f32.gmra.mxu0 %v2228
    %v2247 = vpop.f32.mrf.mxu0
    %v2248 = vadd.f32 0.0, %v2247
    %2249 = vdwg.mxu0
    %2250 = vrot.lane.b32.xlu0 %v1423, 104
    %v2251 = vpop.permute.xlu0 %2250
    %2252 = vrot.lane.b32.xlu0 %v1457, 104
    %v2253 = vpop.permute.xlu0 %2252
    %v2254 = vsel %vm102, %v2251, 0
    %v2256 = vsel %vm102, %v2253, 0
    %2258 = vmatpush.xpose.msra.mxu0 0.0
    %2259 = vmatpush.xpose.msra.mxu0 0.0
    %2260 = vmatpush.xpose.msra.mxu0 0.0
    %2261 = vmatpush.xpose.msra.mxu0 0.0
    %2262 = vmatpush.xpose.msra.mxu0 0.0
    %2263 = vmatpush.xpose.msra.mxu0 0.0
    %2264 = vmatpush.xpose.msra.mxu0 0.0
    %2265 = vmatpush.xpose.msra.mxu0 0.0
    %2266 = vmatpush.xpose.msra.mxu0 0.0
    %2267 = vmatpush.xpose.msra.mxu0 0.0
    %2268 = vmatpush.xpose.msra.mxu0 0.0
    %2269 = vmatpush.xpose.msra.mxu0 0.0
    %2270 = vmatpush.xpose.msra.mxu0 0.0
    %2271 = vmatpush.xpose.msra.mxu0 0.0
    %2272 = vmatpush.xpose.msra.mxu0 0.0
    %2273 = vmatpush.xpose.msra.mxu0 %v2256
    %2274 = vmatmul.f32.gmra.mxu0 %v2254
    %v2275 = vpop.f32.mrf.mxu0
    %v2276 = vadd.f32 0.0, %v2275
    %2277 = vdwg.mxu0
    %2278 = vrot.lane.b32.xlu0 %v1425, 104
    %v2279 = vpop.permute.xlu0 %2278
    %2280 = vrot.lane.b32.xlu0 %v1459, 104
    %v2281 = vpop.permute.xlu0 %2280
    %v2282 = vsel %vm102, %v2279, 0
    %v2284 = vsel %vm102, %v2281, 0
    %2286 = vmatpush.xpose.msra.mxu0 0.0
    %2287 = vmatpush.xpose.msra.mxu0 0.0
    %2288 = vmatpush.xpose.msra.mxu0 0.0
    %2289 = vmatpush.xpose.msra.mxu0 0.0
    %2290 = vmatpush.xpose.msra.mxu0 0.0
    %2291 = vmatpush.xpose.msra.mxu0 0.0
    %2292 = vmatpush.xpose.msra.mxu0 0.0
    %2293 = vmatpush.xpose.msra.mxu0 0.0
    %2294 = vmatpush.xpose.msra.mxu0 0.0
    %2295 = vmatpush.xpose.msra.mxu0 0.0
    %2296 = vmatpush.xpose.msra.mxu0 0.0
    %2297 = vmatpush.xpose.msra.mxu0 0.0
    %2298 = vmatpush.xpose.msra.mxu0 0.0
    %2299 = vmatpush.xpose.msra.mxu0 0.0
    %2300 = vmatpush.xpose.msra.mxu0 0.0
    %2301 = vmatpush.xpose.msra.mxu0 %v2284
    %2302 = vmatmul.f32.gmra.mxu0 %v2282
    %v2303 = vpop.f32.mrf.mxu0
    %v2304 = vadd.f32 0.0, %v2303
    %2305 = vdwg.mxu0
    %2306 = vrot.lane.b32.xlu0 %v1428, 104
    %v2307 = vpop.permute.xlu0 %2306
    %2308 = vrot.lane.b32.xlu0 %v1462, 104
    %v2309 = vpop.permute.xlu0 %2308
    %v2310 = vsel %vm102, %v2307, 0
    %v2312 = vsel %vm102, %v2309, 0
    %2314 = vmatpush.xpose.msra.mxu0 0.0
    %2315 = vmatpush.xpose.msra.mxu0 0.0
    %2316 = vmatpush.xpose.msra.mxu0 0.0
    %2317 = vmatpush.xpose.msra.mxu0 0.0
    %2318 = vmatpush.xpose.msra.mxu0 0.0
    %2319 = vmatpush.xpose.msra.mxu0 0.0
    %2320 = vmatpush.xpose.msra.mxu0 0.0
    %2321 = vmatpush.xpose.msra.mxu0 0.0
    %2322 = vmatpush.xpose.msra.mxu0 0.0
    %2323 = vmatpush.xpose.msra.mxu0 0.0
    %2324 = vmatpush.xpose.msra.mxu0 0.0
    %2325 = vmatpush.xpose.msra.mxu0 0.0
    %2326 = vmatpush.xpose.msra.mxu0 0.0
    %2327 = vmatpush.xpose.msra.mxu0 0.0
    %2328 = vmatpush.xpose.msra.mxu0 0.0
    %2329 = vmatpush.xpose.msra.mxu0 %v2312
    %2330 = vmatmul.f32.gmra.mxu0 %v2310
    %v2331 = vpop.f32.mrf.mxu0
    %v2332 = vadd.f32 0.0, %v2331
    %2333 = vdwg.mxu0
    %2334 = vrot.lane.b32.xlu0 %v1430, 104
    %v2335 = vpop.permute.xlu0 %2334
    %2336 = vrot.lane.b32.xlu0 %v1464, 104
    %v2337 = vpop.permute.xlu0 %2336
    %v2338 = vsel %vm102, %v2335, 0
    %v2340 = vsel %vm102, %v2337, 0
    %2342 = vmatpush.xpose.msra.mxu0 0.0
    %2343 = vmatpush.xpose.msra.mxu0 0.0
    %2344 = vmatpush.xpose.msra.mxu0 0.0
    %2345 = vmatpush.xpose.msra.mxu0 0.0
    %2346 = vmatpush.xpose.msra.mxu0 0.0
    %2347 = vmatpush.xpose.msra.mxu0 0.0
    %2348 = vmatpush.xpose.msra.mxu0 0.0
    %2349 = vmatpush.xpose.msra.mxu0 0.0
    %2350 = vmatpush.xpose.msra.mxu0 0.0
    %2351 = vmatpush.xpose.msra.mxu0 0.0
    %2352 = vmatpush.xpose.msra.mxu0 0.0
    %2353 = vmatpush.xpose.msra.mxu0 0.0
    %2354 = vmatpush.xpose.msra.mxu0 0.0
    %2355 = vmatpush.xpose.msra.mxu0 0.0
    %2356 = vmatpush.xpose.msra.mxu0 0.0
    %2357 = vmatpush.xpose.msra.mxu0 %v2340
    %2358 = vmatmul.f32.gmra.mxu0 %v2338
    %v2359 = vpop.f32.mrf.mxu0
    %v2360 = vadd.f32 0.0, %v2359
    %2361 = vdwg.mxu0
    %v2362 = vmul.f32 %v2276, 0.35355338
    %v2363 = vmul.f32 %v2304, 0.35355338
    %v2364 = vmul.f32 %v2332, 0.35355338
    %v2365 = vmul.f32 %v2360, 0.35355338
    %v2366 = vsel %vm102, %v2362, -inf
    %2367 = vmax.xlane.f32.xlu0 %v2366
    %v2368 = vpop.xlane.xlu0 %2367
    %v2369 = vsel %vm102, %v2363, -inf
    %2370 = vmax.xlane.f32.xlu0 %v2369
    %v2371 = vpop.xlane.xlu0 %2370
    %v2372 = vsel %vm102, %v2364, -inf
    %2373 = vmax.xlane.f32.xlu0 %v2372
    %v2374 = vpop.xlane.xlu0 %2373
    %v2375 = vsel %vm102, %v2365, -inf
    %2376 = vmax.xlane.f32.xlu0 %v2375
    %v2377 = vpop.xlane.xlu0 %2376
    %v2378 = vsub.f32 %v2362, %v2368
    %v2379 = vsub.f32 %v2363, %v2371
    %v2380 = vsub.f32 %v2364, %v2374
    %v2381 = vsub.f32 %v2365, %v2377
    %v2382 = vmul.f32 %v2378, 1.442695
    %v2383 = vpow.pop %v2382
    %v2384 = vmul.f32 %v2379, 1.442695
    %v2385 = vpow.pop %v2384
    %v2386 = vmul.f32 %v2380, 1.442695
    %v2387 = vpow.pop %v2386
    %v2388 = vmul.f32 %v2381, 1.442695
    %v2389 = vpow.pop %v2388
    %v2390 = vsel %vm102, %v2383, 0.0
    %2391 = vadd.xlane.f32.xlu0 %v2390
    %v2392 = vpop.xlane.xlu0 %2391
    %v2393 = vsel %vm102, %v2385, 0.0
    %2394 = vadd.xlane.f32.xlu0 %v2393
    %v2395 = vpop.xlane.xlu0 %2394
    %v2396 = vsel %vm102, %v2387, 0.0
    %2397 = vadd.xlane.f32.xlu0 %v2396
    %v2398 = vpop.xlane.xlu0 %2397
    %v2399 = vsel %vm102, %v2389, 0.0
    %2400 = vadd.xlane.f32.xlu0 %v2399
    %v2401 = vpop.xlane.xlu0 %2400
    %v2402 = vrcp.pop %v2392
    %v2403 = vrcp.pop %v2395
    %v2404 = vrcp.pop %v2398
    %v2405 = vrcp.pop %v2401
    %v2406 = vmul.f32 %v2383, %v2402
    %v2407 = vmul.f32 %v2385, %v2403
    %v2408 = vmul.f32 %v2387, %v2404
    %v2409 = vmul.f32 %v2389, %v2405
    %2410 = vrot.lane.b32.xlu0 %v1457, 72
    %v2411 = vpop.permute.xlu0 %2410
    %v2414 = vsel %vm102, %v2406, 0
    %2416 = vmatpush.msra.mxu0 0.0
    %2417 = vmatpush.msra.mxu0 0.0
    %2418 = vmatpush.msra.mxu0 0.0
    %2419 = vmatpush.msra.mxu0 0.0
    %2420 = vmatpush.msra.mxu0 0.0
    %2421 = vmatpush.msra.mxu0 0.0
    %2422 = vmatpush.msra.mxu0 0.0
    %2423 = vmatpush.msra.mxu0 0.0
    %2424 = vmatpush.msra.mxu0 0.0
    %2425 = vmatpush.msra.mxu0 0.0
    %2426 = vmatpush.msra.mxu0 0.0
    %2427 = vmatpush.msra.mxu0 0.0
    %2428 = vmatpush.msra.mxu0 0.0
    %2429 = vmatpush.msra.mxu0 0.0
    %2430 = vmatpush.msra.mxu0 0.0
    %2431 = vmatpush.msra.mxu0 %v2411
    %2432 = vmatmul.f32.gmra.mxu0 %v2414
    %v2433 = vpop.f32.mrf.mxu0
    %v2434 = vadd.f32 0.0, %v2433
    %2435 = vdwg.mxu0
    %2436 = vrot.lane.b32.xlu0 %v1459, 72
    %v2437 = vpop.permute.xlu0 %2436
    %v2440 = vsel %vm102, %v2407, 0
    %2442 = vmatpush.msra.mxu0 0.0
    %2443 = vmatpush.msra.mxu0 0.0
    %2444 = vmatpush.msra.mxu0 0.0
    %2445 = vmatpush.msra.mxu0 0.0
    %2446 = vmatpush.msra.mxu0 0.0
    %2447 = vmatpush.msra.mxu0 0.0
    %2448 = vmatpush.msra.mxu0 0.0
    %2449 = vmatpush.msra.mxu0 0.0
    %2450 = vmatpush.msra.mxu0 0.0
    %2451 = vmatpush.msra.mxu0 0.0
    %2452 = vmatpush.msra.mxu0 0.0
    %2453 = vmatpush.msra.mxu0 0.0
    %2454 = vmatpush.msra.mxu0 0.0
    %2455 = vmatpush.msra.mxu0 0.0
    %2456 = vmatpush.msra.mxu0 0.0
    %2457 = vmatpush.msra.mxu0 %v2437
    %2458 = vmatmul.f32.gmra.mxu0 %v2440
    %v2459 = vpop.f32.mrf.mxu0
    %v2460 = vadd.f32 0.0, %v2459
    %2461 = vdwg.mxu0
    %2462 = vrot.lane.b32.xlu0 %v1462, 72
    %v2463 = vpop.permute.xlu0 %2462
    %v2466 = vsel %vm102, %v2408, 0
    %2468 = vmatpush.msra.mxu0 0.0
    %2469 = vmatpush.msra.mxu0 0.0
    %2470 = vmatpush.msra.mxu0 0.0
    %2471 = vmatpush.msra.mxu0 0.0
    %2472 = vmatpush.msra.mxu0 0.0
    %2473 = vmatpush.msra.mxu0 0.0
    %2474 = vmatpush.msra.mxu0 0.0
    %2475 = vmatpush.msra.mxu0 0.0
    %2476 = vmatpush.msra.mxu0 0.0
    %2477 = vmatpush.msra.mxu0 0.0
    %2478 = vmatpush.msra.mxu0 0.0
    %2479 = vmatpush.msra.mxu0 0.0
    %2480 = vmatpush.msra.mxu0 0.0
    %2481 = vmatpush.msra.mxu0 0.0
    %2482 = vmatpush.msra.mxu0 0.0
    %2483 = vmatpush.msra.mxu0 %v2463
    %2484 = vmatmul.f32.gmra.mxu0 %v2466
    %v2485 = vpop.f32.mrf.mxu0
    %v2486 = vadd.f32 0.0, %v2485
    %2487 = vdwg.mxu0
    %2488 = vrot.lane.b32.xlu0 %v1464, 72
    %v2489 = vpop.permute.xlu0 %2488
    %v2492 = vsel %vm102, %v2409, 0
    %2494 = vmatpush.msra.mxu0 0.0
    %2495 = vmatpush.msra.mxu0 0.0
    %2496 = vmatpush.msra.mxu0 0.0
    %2497 = vmatpush.msra.mxu0 0.0
    %2498 = vmatpush.msra.mxu0 0.0
    %2499 = vmatpush.msra.mxu0 0.0
    %2500 = vmatpush.msra.mxu0 0.0
    %2501 = vmatpush.msra.mxu0 0.0
    %2502 = vmatpush.msra.mxu0 0.0
    %2503 = vmatpush.msra.mxu0 0.0
    %2504 = vmatpush.msra.mxu0 0.0
    %2505 = vmatpush.msra.mxu0 0.0
    %2506 = vmatpush.msra.mxu0 0.0
    %2507 = vmatpush.msra.mxu0 0.0
    %2508 = vmatpush.msra.mxu0 0.0
    %2509 = vmatpush.msra.mxu0 %v2489
    %2510 = vmatmul.f32.gmra.mxu0 %v2492
    %v2511 = vpop.f32.mrf.mxu0
    %v2512 = vadd.f32 0.0, %v2511
    %2513 = vdwg.mxu0
    %2518 = vrot.lane.b32.xlu0 %v1906, 8
    %v2519 = vpop.permute.xlu0 %2518
    %2520 = vrot.lane.b32.xlu0 %v1932, 8
    %v2521 = vpop.permute.xlu0 %2520
    %2522 = vrot.lane.b32.xlu0 %v1958, 8
    %v2523 = vpop.permute.xlu0 %2522
    %2524 = vrot.lane.b32.xlu0 %v1984, 8
    %v2525 = vpop.permute.xlu0 %2524
    %2534 = vrot.lane.b32.xlu0 %v2170, 16
    %v2535 = vpop.permute.xlu0 %2534
    %2536 = vrot.lane.b32.xlu0 %v2196, 16
    %v2537 = vpop.permute.xlu0 %2536
    %2538 = vrot.lane.b32.xlu0 %v2222, 16
    %v2539 = vpop.permute.xlu0 %2538
    %2540 = vrot.lane.b32.xlu0 %v2248, 16
    %v2541 = vpop.permute.xlu0 %2540
    %2550 = vrot.lane.b32.xlu0 %v2434, 24
    %v2551 = vpop.permute.xlu0 %2550
    %2552 = vrot.lane.b32.xlu0 %v2460, 24
    %v2553 = vpop.permute.xlu0 %2552
    %2554 = vrot.lane.b32.xlu0 %v2486, 24
    %v2555 = vpop.permute.xlu0 %2554
    %2556 = vrot.lane.b32.xlu0 %v2512, 24
    %v2557 = vpop.permute.xlu0 %2556
    %v2562 = vsel %vm102, %v1642, %v2519
    %v2563 = vsel %vm102, %v1668, %v2521
    %v2564 = vsel %vm102, %v1694, %v2523
    %v2565 = vsel %vm102, %v1720, %v2525
    %v2566 = vsel %vm1204, %v2562, %v2535
    %v2567 = vsel %vm1204, %v2563, %v2537
    %v2568 = vsel %vm1204, %v2564, %v2539
    %v2569 = vsel %vm1204, %v2565, %v2541
    %v2570 = vsel %vm1209, %v2566, %v2551
    %v2571 = vsel %vm1209, %v2567, %v2553
    %v2572 = vsel %vm1209, %v2568, %v2555
    %v2573 = vsel %vm1209, %v2569, %v2557
    %s2574 = scalar_lea.vmem %s4, 16
    %v2575 = vld [vmem:[%s2574] sm:$0xf]
    %v2576 = vld [vmem:[%s2574 + $0x4] sm:$0xf]
    %v2577 = vld [vmem:[%s2574 + $0x8] sm:$0xf]
    %v2578 = vld [vmem:[%s2574 + $0xc] sm:$0xf]
    %v2579 = vpack.c.bf16 %v2571, %v2570
    %v2580 = vpack.c.bf16 %v2573, %v2572
    %v2582 = vperm.slane %v49, 0
    %v2588 = vunpack.c.l.b16 %v2575
    %v2589 = vunpack.c.l.b16 %v2576
    %v2590 = vunpack.c.l.b16 %v2577
    %v2591 = vunpack.c.l.b16 %v2578
    %v2592 = vpack.c.b16 %v2589, %v2588
    %v2593 = vpack.c.b16 %v2591, %v2590
    %v2597 = vsel %vm73, %v2579, 0
    %v2600 = vsel %vm73, %v2580, 0
    %2602 = vmatpush.bf16.msra.mxu0 0
    %2603 = vmatpush.bf16.msra.mxu0 0
    %2604 = vmatpush.bf16.msra.mxu0 0
    %2605 = vmatpush.bf16.msra.mxu0 0
    %2606 = vmatpush.bf16.msra.mxu0 0
    %2607 = vmatpush.bf16.msra.mxu0 0
    %2608 = vmatpush.bf16.msra.mxu0 %v2593
    %2609 = vmatpush.bf16.msra.mxu0 %v2592
    %2610 = vmatmul.bf16.gmra.mxu0 %v2597
    %v2611 = vpop.f32.mrf.mxu0
    %v2612 = vadd.f32 %v2582, %v2611
    %v2613 = vpop.f32.mrf.mxu0
    %v2614 = vadd.f32 %v2582, %v2613
    %2615 = vmatmul.bf16.gmra.mxu0 %v2600
    %v2616 = vpop.f32.mrf.mxu0
    %v2617 = vadd.f32 %v2582, %v2616
    %v2618 = vpop.f32.mrf.mxu0
    %v2619 = vadd.f32 %v2582, %v2618
    %2620 = vdwg.mxu0
    %v2621 = vadd.f32 %v2612, %v1377
    %v2622 = vadd.f32 %v2614, %v1378
    %v2623 = vadd.f32 %v2617, %v1379
    %v2624 = vadd.f32 %v2619, %v1380
    %v2625 = vsel %vm73, %v2621, 0.0
    %2626 = vadd.xlane.f32.xlu0 %v2625
    %v2627 = vpop.xlane.xlu0 %2626
    %v2628 = vsel %vm73, %v2622, 0.0
    %2629 = vadd.xlane.f32.xlu0 %v2628
    %v2630 = vpop.xlane.xlu0 %2629
    %v2631 = vsel %vm73, %v2623, 0.0
    %2632 = vadd.xlane.f32.xlu0 %v2631
    %v2633 = vpop.xlane.xlu0 %2632
    %v2634 = vsel %vm73, %v2624, 0.0
    %2635 = vadd.xlane.f32.xlu0 %v2634
    %v2636 = vpop.xlane.xlu0 %2635
    %v2637 = vmul.f32 %v2627, %v1282
    %v2638 = vmul.f32 %v2630, %v1282
    %v2639 = vmul.f32 %v2633, %v1282
    %v2640 = vmul.f32 %v2636, %v1282
    %v2641 = vmul.f32 %v2621, %v2621
    %v2642 = vmul.f32 %v2622, %v2622
    %v2643 = vmul.f32 %v2623, %v2623
    %v2644 = vmul.f32 %v2624, %v2624
    %v2645 = vsel %vm73, %v2641, 0.0
    %2646 = vadd.xlane.f32.xlu0 %v2645
    %v2647 = vpop.xlane.xlu0 %2646
    %v2648 = vsel %vm73, %v2642, 0.0
    %2649 = vadd.xlane.f32.xlu0 %v2648
    %v2650 = vpop.xlane.xlu0 %2649
    %v2651 = vsel %vm73, %v2643, 0.0
    %2652 = vadd.xlane.f32.xlu0 %v2651
    %v2653 = vpop.xlane.xlu0 %2652
    %v2654 = vsel %vm73, %v2644, 0.0
    %2655 = vadd.xlane.f32.xlu0 %v2654
    %v2656 = vpop.xlane.xlu0 %2655
    %v2657 = vmul.f32 %v2647, %v1282
    %v2658 = vmul.f32 %v2650, %v1282
    %v2659 = vmul.f32 %v2653, %v1282
    %v2660 = vmul.f32 %v2656, %v1282
    %v2661 = vmul.f32 %v2637, %v2637
    %v2662 = vmul.f32 %v2638, %v2638
    %v2663 = vmul.f32 %v2639, %v2639
    %v2664 = vmul.f32 %v2640, %v2640
    %v2665 = vsub.f32 %v2657, %v2661
    %v2666 = vsub.f32 %v2658, %v2662
    %v2667 = vsub.f32 %v2659, %v2663
    %v2668 = vsub.f32 %v2660, %v2664
    %v2669 = vsub.f32 %v2621, %v2637
    %v2670 = vsub.f32 %v2622, %v2638
    %v2671 = vsub.f32 %v2623, %v2639
    %v2672 = vsub.f32 %v2624, %v2640
    %v2673 = vadd.f32 %v2665, 1e-05
    %v2674 = vadd.f32 %v2666, 1e-05
    %v2675 = vadd.f32 %v2667, 1e-05
    %v2676 = vadd.f32 %v2668, 1e-05
    %v2677 = vrsqrt.pop %v2673
    %v2678 = vmul.f32 %v2677, %v2673
    %v2679 = vmul.f32 %v2678, %v2677
    %v2680 = vmul.f32 0.5, %v2679
    %v2681 = vsub.f32 1.5, %v2680
    %v2682 = vmul.f32 %v2677, %v2681
    %vm2683 = vweird.f32 %v2673
    %vm2684 = vweird.f32 %v2677
    %vm2685 = vmor %vm2683, %vm2684
    %v2686 = vsel %vm2685, %v2677, %v2682
    %v2687 = vrsqrt.pop %v2674
    %v2688 = vmul.f32 %v2687, %v2674
    %v2689 = vmul.f32 %v2688, %v2687
    %v2690 = vmul.f32 0.5, %v2689
    %v2691 = vsub.f32 1.5, %v2690
    %v2692 = vmul.f32 %v2687, %v2691
    %vm2693 = vweird.f32 %v2674
    %vm2694 = vweird.f32 %v2687
    %vm2695 = vmor %vm2693, %vm2694
    %v2696 = vsel %vm2695, %v2687, %v2692
    %v2697 = vrsqrt.pop %v2675
    %v2698 = vmul.f32 %v2697, %v2675
    %v2699 = vmul.f32 %v2698, %v2697
    %v2700 = vmul.f32 0.5, %v2699
    %v2701 = vsub.f32 1.5, %v2700
    %v2702 = vmul.f32 %v2697, %v2701
    %vm2703 = vweird.f32 %v2675
    %vm2704 = vweird.f32 %v2697
    %vm2705 = vmor %vm2703, %vm2704
    %v2706 = vsel %vm2705, %v2697, %v2702
    %v2707 = vrsqrt.pop %v2676
    %v2708 = vmul.f32 %v2707, %v2676
    %v2709 = vmul.f32 %v2708, %v2707
    %v2710 = vmul.f32 0.5, %v2709
    %v2711 = vsub.f32 1.5, %v2710
    %v2712 = vmul.f32 %v2707, %v2711
    %vm2713 = vweird.f32 %v2676
    %vm2714 = vweird.f32 %v2707
    %vm2715 = vmor %vm2713, %vm2714
    %v2716 = vsel %vm2715, %v2707, %v2712
    %v2717 = vmul.f32 %v2669, %v2686
    %v2718 = vmul.f32 %v2670, %v2696
    %v2719 = vmul.f32 %v2671, %v2706
    %v2720 = vmul.f32 %v2672, %v2716
    %v2722 = vperm.slane %v44, 0
    %v2724 = vmul.f32 %v2717, %v2722
    %v2725 = vmul.f32 %v2718, %v2722
    %v2726 = vmul.f32 %v2719, %v2722
    %v2727 = vmul.f32 %v2720, %v2722
    %v2729 = vperm.slane %v45, 0
    %v2731 = vadd.f32 %v2724, %v2729
    %v2732 = vadd.f32 %v2725, %v2729
    %v2733 = vadd.f32 %v2726, %v2729
    %v2734 = vadd.f32 %v2727, %v2729
    %v2735 = vpack.c.bf16 %v2732, %v2731
    %v2736 = vpack.c.bf16 %v2734, %v2733
    %v2737 = vld [vmem:[%s5] sm:$0xff]
    %v2738 = vld [vmem:[%s5 + $0x8] sm:$0xff]
    %v2739 = vld [vmem:[%s5 + $0x10] sm:$0xff]
    %v2740 = vld [vmem:[%s5 + $0x18] sm:$0xff]
    %v2741 = vld [vmem:[%s5 + $0x20] sm:$0xff]
    %v2742 = vld [vmem:[%s5 + $0x28] sm:$0xff]
    %v2743 = vld [vmem:[%s5 + $0x30] sm:$0xff]
    %v2744 = vld [vmem:[%s5 + $0x38] sm:$0xff]
    %v2745 = vld [vmem:[%s5 + $0x40] sm:$0xff]
    %v2746 = vld [vmem:[%s5 + $0x48] sm:$0xff]
    %v2747 = vld [vmem:[%s5 + $0x50] sm:$0xff]
    %v2748 = vld [vmem:[%s5 + $0x58] sm:$0xff]
    %v2749 = vld [vmem:[%s5 + $0x60] sm:$0xff]
    %v2750 = vld [vmem:[%s5 + $0x68] sm:$0xff]
    %v2751 = vld [vmem:[%s5 + $0x70] sm:$0xff]
    %v2752 = vld [vmem:[%s5 + $0x78] sm:$0xff]
    %v2753 = vld [vmem:[%s5 + $0x80] sm:$0xff]
    %v2754 = vld [vmem:[%s5 + $0x88] sm:$0xff]
    %v2755 = vld [vmem:[%s5 + $0x90] sm:$0xff]
    %v2756 = vld [vmem:[%s5 + $0x98] sm:$0xff]
    %v2757 = vld [vmem:[%s5 + $0xa0] sm:$0xff]
    %v2758 = vld [vmem:[%s5 + $0xa8] sm:$0xff]
    %v2759 = vld [vmem:[%s5 + $0xb0] sm:$0xff]
    %v2760 = vld [vmem:[%s5 + $0xb8] sm:$0xff]
    %v2761 = vld [vmem:[%s5 + $0xc0] sm:$0xff]
    %v2762 = vld [vmem:[%s5 + $0xc8] sm:$0xff]
    %v2763 = vld [vmem:[%s5 + $0xd0] sm:$0xff]
    %v2764 = vld [vmem:[%s5 + $0xd8] sm:$0xff]
    %v2765 = vld [vmem:[%s5 + $0xe0] sm:$0xff]
    %v2766 = vld [vmem:[%s5 + $0xe8] sm:$0xff]
    %v2767 = vld [vmem:[%s5 + $0xf0] sm:$0xff]
    %v2768 = vld [vmem:[%s5 + $0xf8] sm:$0xff]
    %v2769 = vld [vmem:[%s6] sm:$0xff]
    %v2770 = vld [vmem:[%s6 + $0x8] sm:$0xff]
    %v2773 = vperm.slane %v2769, 0
    %v2774 = vperm.slane %v2769, 1
    %v2775 = vperm.slane %v2769, 2
    %v2776 = vperm.slane %v2769, 3
    %v2777 = vperm.slane %v2769, 4
    %v2778 = vperm.slane %v2769, 5
    %v2779 = vperm.slane %v2769, 6
    %v2780 = vperm.slane %v2769, 7
    %v2781 = vperm.slane %v2770, 0
    %v2782 = vperm.slane %v2770, 1
    %v2783 = vperm.slane %v2770, 2
    %v2784 = vperm.slane %v2770, 3
    %v2785 = vperm.slane %v2770, 4
    %v2786 = vperm.slane %v2770, 5
    %v2787 = vperm.slane %v2770, 6
    %v2788 = vperm.slane %v2770, 7
    %v2837 = vunpack.c.l.b16 %v2737
    %v2838 = vunpack.c.h.b16 %v2737
    %v2839 = vunpack.c.l.b16 %v2738
    %v2840 = vunpack.c.h.b16 %v2738
    %v2841 = vunpack.c.l.b16 %v2739
    %v2842 = vunpack.c.h.b16 %v2739
    %v2843 = vunpack.c.l.b16 %v2740
    %v2844 = vunpack.c.h.b16 %v2740
    %v2845 = vunpack.c.l.b16 %v2741
    %v2846 = vunpack.c.h.b16 %v2741
    %v2847 = vunpack.c.l.b16 %v2742
    %v2848 = vunpack.c.h.b16 %v2742
    %v2849 = vunpack.c.l.b16 %v2743
    %v2850 = vunpack.c.h.b16 %v2743
    %v2851 = vunpack.c.l.b16 %v2744
    %v2852 = vunpack.c.h.b16 %v2744
    %v2853 = vunpack.c.l.b16 %v2745
    %v2854 = vunpack.c.h.b16 %v2745
    %v2855 = vunpack.c.l.b16 %v2746
    %v2856 = vunpack.c.h.b16 %v2746
    %v2857 = vunpack.c.l.b16 %v2747
    %v2858 = vunpack.c.h.b16 %v2747
    %v2859 = vunpack.c.l.b16 %v2748
    %v2860 = vunpack.c.h.b16 %v2748
    %v2861 = vunpack.c.l.b16 %v2749
    %v2862 = vunpack.c.h.b16 %v2749
    %v2863 = vunpack.c.l.b16 %v2750
    %v2864 = vunpack.c.h.b16 %v2750
    %v2865 = vunpack.c.l.b16 %v2751
    %v2866 = vunpack.c.h.b16 %v2751
    %v2867 = vunpack.c.l.b16 %v2752
    %v2868 = vunpack.c.h.b16 %v2752
    %v2869 = vunpack.c.l.b16 %v2753
    %v2870 = vunpack.c.h.b16 %v2753
    %v2871 = vunpack.c.l.b16 %v2754
    %v2872 = vunpack.c.h.b16 %v2754
    %v2873 = vunpack.c.l.b16 %v2755
    %v2874 = vunpack.c.h.b16 %v2755
    %v2875 = vunpack.c.l.b16 %v2756
    %v2876 = vunpack.c.h.b16 %v2756
    %v2877 = vunpack.c.l.b16 %v2757
    %v2878 = vunpack.c.h.b16 %v2757
    %v2879 = vunpack.c.l.b16 %v2758
    %v2880 = vunpack.c.h.b16 %v2758
    %v2881 = vunpack.c.l.b16 %v2759
    %v2882 = vunpack.c.h.b16 %v2759
    %v2883 = vunpack.c.l.b16 %v2760
    %v2884 = vunpack.c.h.b16 %v2760
    %v2885 = vunpack.c.l.b16 %v2761
    %v2886 = vunpack.c.h.b16 %v2761
    %v2887 = vunpack.c.l.b16 %v2762
    %v2888 = vunpack.c.h.b16 %v2762
    %v2889 = vunpack.c.l.b16 %v2763
    %v2890 = vunpack.c.h.b16 %v2763
    %v2891 = vunpack.c.l.b16 %v2764
    %v2892 = vunpack.c.h.b16 %v2764
    %v2893 = vunpack.c.l.b16 %v2765
    %v2894 = vunpack.c.h.b16 %v2765
    %v2895 = vunpack.c.l.b16 %v2766
    %v2896 = vunpack.c.h.b16 %v2766
    %v2897 = vunpack.c.l.b16 %v2767
    %v2898 = vunpack.c.h.b16 %v2767
    %v2899 = vunpack.c.l.b16 %v2768
    %v2900 = vunpack.c.h.b16 %v2768
    %v2901 = vpack.c.b16 %v2853, %v2837
    %v2902 = vpack.c.b16 %v2854, %v2838
    %v2903 = vpack.c.b16 %v2855, %v2839
    %v2904 = vpack.c.b16 %v2856, %v2840
    %v2905 = vpack.c.b16 %v2857, %v2841
    %v2906 = vpack.c.b16 %v2858, %v2842
    %v2907 = vpack.c.b16 %v2859, %v2843
    %v2908 = vpack.c.b16 %v2860, %v2844
    %v2909 = vpack.c.b16 %v2861, %v2845
    %v2910 = vpack.c.b16 %v2862, %v2846
    %v2911 = vpack.c.b16 %v2863, %v2847
    %v2912 = vpack.c.b16 %v2864, %v2848
    %v2913 = vpack.c.b16 %v2865, %v2849
    %v2914 = vpack.c.b16 %v2866, %v2850
    %v2915 = vpack.c.b16 %v2867, %v2851
    %v2916 = vpack.c.b16 %v2868, %v2852
    %v2917 = vpack.c.b16 %v2885, %v2869
    %v2918 = vpack.c.b16 %v2886, %v2870
    %v2919 = vpack.c.b16 %v2887, %v2871
    %v2920 = vpack.c.b16 %v2888, %v2872
    %v2921 = vpack.c.b16 %v2889, %v2873
    %v2922 = vpack.c.b16 %v2890, %v2874
    %v2923 = vpack.c.b16 %v2891, %v2875
    %v2924 = vpack.c.b16 %v2892, %v2876
    %v2925 = vpack.c.b16 %v2893, %v2877
    %v2926 = vpack.c.b16 %v2894, %v2878
    %v2927 = vpack.c.b16 %v2895, %v2879
    %v2928 = vpack.c.b16 %v2896, %v2880
    %v2929 = vpack.c.b16 %v2897, %v2881
    %v2930 = vpack.c.b16 %v2898, %v2882
    %v2931 = vpack.c.b16 %v2899, %v2883
    %v2932 = vpack.c.b16 %v2900, %v2884
    %v2966 = vsel %vm73, %v2735, 0
    %v2969 = vsel %vm73, %v2736, 0
    %2971 = vmatpush.bf16.msra.mxu0 0
    %2972 = vmatpush.bf16.msra.mxu0 0
    %2973 = vmatpush.bf16.msra.mxu0 0
    %2974 = vmatpush.bf16.msra.mxu0 0
    %2975 = vmatpush.bf16.msra.mxu0 0
    %2976 = vmatpush.bf16.msra.mxu0 0
    %2977 = vmatpush.bf16.msra.mxu0 %v2917
    %2978 = vmatpush.bf16.msra.mxu0 %v2901
    %2979 = vmatmul.bf16.gmra.mxu0 %v2966
    %v2980 = vpop.f32.mrf.mxu0
    %v2981 = vadd.f32 %v2773, %v2980
    %v2982 = vpop.f32.mrf.mxu0
    %v2983 = vadd.f32 %v2773, %v2982
    %2984 = vmatmul.bf16.gmra.mxu0 %v2969
    %v2985 = vpop.f32.mrf.mxu0
    %v2986 = vadd.f32 %v2773, %v2985
    %v2987 = vpop.f32.mrf.mxu0
    %v2988 = vadd.f32 %v2773, %v2987
    %2989 = vdwg.mxu0
    %2990 = vmatpush.bf16.msra.mxu0 0
    %2991 = vmatpush.bf16.msra.mxu0 0
    %2992 = vmatpush.bf16.msra.mxu0 0
    %2993 = vmatpush.bf16.msra.mxu0 0
    %2994 = vmatpush.bf16.msra.mxu0 0
    %2995 = vmatpush.bf16.msra.mxu0 0
    %2996 = vmatpush.bf16.msra.mxu0 %v2918
    %2997 = vmatpush.bf16.msra.mxu0 %v2902
    %2998 = vmatmul.bf16.gmra.mxu0 %v2966
    %v2999 = vpop.f32.mrf.mxu0
    %v3000 = vadd.f32 %v2774, %v2999
    %v3001 = vpop.f32.mrf.mxu0
    %v3002 = vadd.f32 %v2774, %v3001
    %3003 = vmatmul.bf16.gmra.mxu0 %v2969
    %v3004 = vpop.f32.mrf.mxu0
    %v3005 = vadd.f32 %v2774, %v3004
    %v3006 = vpop.f32.mrf.mxu0
    %v3007 = vadd.f32 %v2774, %v3006
    %3008 = vdwg.mxu0
    %3009 = vmatpush.bf16.msra.mxu0 0
    %3010 = vmatpush.bf16.msra.mxu0 0
    %3011 = vmatpush.bf16.msra.mxu0 0
    %3012 = vmatpush.bf16.msra.mxu0 0
    %3013 = vmatpush.bf16.msra.mxu0 0
    %3014 = vmatpush.bf16.msra.mxu0 0
    %3015 = vmatpush.bf16.msra.mxu0 %v2919
    %3016 = vmatpush.bf16.msra.mxu0 %v2903
    %3017 = vmatmul.bf16.gmra.mxu0 %v2966
    %v3018 = vpop.f32.mrf.mxu0
    %v3019 = vadd.f32 %v2775, %v3018
    %v3020 = vpop.f32.mrf.mxu0
    %v3021 = vadd.f32 %v2775, %v3020
    %3022 = vmatmul.bf16.gmra.mxu0 %v2969
    %v3023 = vpop.f32.mrf.mxu0
    %v3024 = vadd.f32 %v2775, %v3023
    %v3025 = vpop.f32.mrf.mxu0
    %v3026 = vadd.f32 %v2775, %v3025
    %3027 = vdwg.mxu0
    %3028 = vmatpush.bf16.msra.mxu0 0
    %3029 = vmatpush.bf16.msra.mxu0 0
    %3030 = vmatpush.bf16.msra.mxu0 0
    %3031 = vmatpush.bf16.msra.mxu0 0
    %3032 = vmatpush.bf16.msra.mxu0 0
    %3033 = vmatpush.bf16.msra.mxu0 0
    %3034 = vmatpush.bf16.msra.mxu0 %v2920
    %3035 = vmatpush.bf16.msra.mxu0 %v2904
    %3036 = vmatmul.bf16.gmra.mxu0 %v2966
    %v3037 = vpop.f32.mrf.mxu0
    %v3038 = vadd.f32 %v2776, %v3037
    %v3039 = vpop.f32.mrf.mxu0
    %v3040 = vadd.f32 %v2776, %v3039
    %3041 = vmatmul.bf16.gmra.mxu0 %v2969
    %v3042 = vpop.f32.mrf.mxu0
    %v3043 = vadd.f32 %v2776, %v3042
    %v3044 = vpop.f32.mrf.mxu0
    %v3045 = vadd.f32 %v2776, %v3044
    %3046 = vdwg.mxu0
    %3047 = vmatpush.bf16.msra.mxu0 0
    %3048 = vmatpush.bf16.msra.mxu0 0
    %3049 = vmatpush.bf16.msra.mxu0 0
    %3050 = vmatpush.bf16.msra.mxu0 0
    %3051 = vmatpush.bf16.msra.mxu0 0
    %3052 = vmatpush.bf16.msra.mxu0 0
    %3053 = vmatpush.bf16.msra.mxu0 %v2921
    %3054 = vmatpush.bf16.msra.mxu0 %v2905
    %3055 = vmatmul.bf16.gmra.mxu0 %v2966
    %v3056 = vpop.f32.mrf.mxu0
    %v3057 = vadd.f32 %v2777, %v3056
    %v3058 = vpop.f32.mrf.mxu0
    %v3059 = vadd.f32 %v2777, %v3058
    %3060 = vmatmul.bf16.gmra.mxu0 %v2969
    %v3061 = vpop.f32.mrf.mxu0
    %v3062 = vadd.f32 %v2777, %v3061
    %v3063 = vpop.f32.mrf.mxu0
    %v3064 = vadd.f32 %v2777, %v3063
    %3065 = vdwg.mxu0
    %3066 = vmatpush.bf16.msra.mxu0 0
    %3067 = vmatpush.bf16.msra.mxu0 0
    %3068 = vmatpush.bf16.msra.mxu0 0
    %3069 = vmatpush.bf16.msra.mxu0 0
    %3070 = vmatpush.bf16.msra.mxu0 0
    %3071 = vmatpush.bf16.msra.mxu0 0
    %3072 = vmatpush.bf16.msra.mxu0 %v2922
    %3073 = vmatpush.bf16.msra.mxu0 %v2906
    %3074 = vmatmul.bf16.gmra.mxu0 %v2966
    %v3075 = vpop.f32.mrf.mxu0
    %v3076 = vadd.f32 %v2778, %v3075
    %v3077 = vpop.f32.mrf.mxu0
    %v3078 = vadd.f32 %v2778, %v3077
    %3079 = vmatmul.bf16.gmra.mxu0 %v2969
    %v3080 = vpop.f32.mrf.mxu0
    %v3081 = vadd.f32 %v2778, %v3080
    %v3082 = vpop.f32.mrf.mxu0
    %v3083 = vadd.f32 %v2778, %v3082
    %3084 = vdwg.mxu0
    %3085 = vmatpush.bf16.msra.mxu0 0
    %3086 = vmatpush.bf16.msra.mxu0 0
    %3087 = vmatpush.bf16.msra.mxu0 0
    %3088 = vmatpush.bf16.msra.mxu0 0
    %3089 = vmatpush.bf16.msra.mxu0 0
    %3090 = vmatpush.bf16.msra.mxu0 0
    %3091 = vmatpush.bf16.msra.mxu0 %v2923
    %3092 = vmatpush.bf16.msra.mxu0 %v2907
    %3093 = vmatmul.bf16.gmra.mxu0 %v2966
    %v3094 = vpop.f32.mrf.mxu0
    %v3095 = vadd.f32 %v2779, %v3094
    %v3096 = vpop.f32.mrf.mxu0
    %v3097 = vadd.f32 %v2779, %v3096
    %3098 = vmatmul.bf16.gmra.mxu0 %v2969
    %v3099 = vpop.f32.mrf.mxu0
    %v3100 = vadd.f32 %v2779, %v3099
    %v3101 = vpop.f32.mrf.mxu0
    %v3102 = vadd.f32 %v2779, %v3101
    %3103 = vdwg.mxu0
    %3104 = vmatpush.bf16.msra.mxu0 0
    %3105 = vmatpush.bf16.msra.mxu0 0
    %3106 = vmatpush.bf16.msra.mxu0 0
    %3107 = vmatpush.bf16.msra.mxu0 0
    %3108 = vmatpush.bf16.msra.mxu0 0
    %3109 = vmatpush.bf16.msra.mxu0 0
    %3110 = vmatpush.bf16.msra.mxu0 %v2924
    %3111 = vmatpush.bf16.msra.mxu0 %v2908
    %3112 = vmatmul.bf16.gmra.mxu0 %v2966
    %v3113 = vpop.f32.mrf.mxu0
    %v3114 = vadd.f32 %v2780, %v3113
    %v3115 = vpop.f32.mrf.mxu0
    %v3116 = vadd.f32 %v2780, %v3115
    %3117 = vmatmul.bf16.gmra.mxu0 %v2969
    %v3118 = vpop.f32.mrf.mxu0
    %v3119 = vadd.f32 %v2780, %v3118
    %v3120 = vpop.f32.mrf.mxu0
    %v3121 = vadd.f32 %v2780, %v3120
    %3122 = vdwg.mxu0
    %3123 = vmatpush.bf16.msra.mxu0 0
    %3124 = vmatpush.bf16.msra.mxu0 0
    %3125 = vmatpush.bf16.msra.mxu0 0
    %3126 = vmatpush.bf16.msra.mxu0 0
    %3127 = vmatpush.bf16.msra.mxu0 0
    %3128 = vmatpush.bf16.msra.mxu0 0
    %3129 = vmatpush.bf16.msra.mxu0 %v2925
    %3130 = vmatpush.bf16.msra.mxu0 %v2909
    %3131 = vmatmul.bf16.gmra.mxu0 %v2966
    %v3132 = vpop.f32.mrf.mxu0
    %v3133 = vadd.f32 %v2781, %v3132
    %v3134 = vpop.f32.mrf.mxu0
    %v3135 = vadd.f32 %v2781, %v3134
    %3136 = vmatmul.bf16.gmra.mxu0 %v2969
    %v3137 = vpop.f32.mrf.mxu0
    %v3138 = vadd.f32 %v2781, %v3137
    %v3139 = vpop.f32.mrf.mxu0
    %v3140 = vadd.f32 %v2781, %v3139
    %3141 = vdwg.mxu0
    %3142 = vmatpush.bf16.msra.mxu0 0
    %3143 = vmatpush.bf16.msra.mxu0 0
    %3144 = vmatpush.bf16.msra.mxu0 0
    %3145 = vmatpush.bf16.msra.mxu0 0
    %3146 = vmatpush.bf16.msra.mxu0 0
    %3147 = vmatpush.bf16.msra.mxu0 0
    %3148 = vmatpush.bf16.msra.mxu0 %v2926
    %3149 = vmatpush.bf16.msra.mxu0 %v2910
    %3150 = vmatmul.bf16.gmra.mxu0 %v2966
    %v3151 = vpop.f32.mrf.mxu0
    %v3152 = vadd.f32 %v2782, %v3151
    %v3153 = vpop.f32.mrf.mxu0
    %v3154 = vadd.f32 %v2782, %v3153
    %3155 = vmatmul.bf16.gmra.mxu0 %v2969
    %v3156 = vpop.f32.mrf.mxu0
    %v3157 = vadd.f32 %v2782, %v3156
    %v3158 = vpop.f32.mrf.mxu0
    %v3159 = vadd.f32 %v2782, %v3158
    %3160 = vdwg.mxu0
    %3161 = vmatpush.bf16.msra.mxu0 0
    %3162 = vmatpush.bf16.msra.mxu0 0
    %3163 = vmatpush.bf16.msra.mxu0 0
    %3164 = vmatpush.bf16.msra.mxu0 0
    %3165 = vmatpush.bf16.msra.mxu0 0
    %3166 = vmatpush.bf16.msra.mxu0 0
    %3167 = vmatpush.bf16.msra.mxu0 %v2927
    %3168 = vmatpush.bf16.msra.mxu0 %v2911
    %3169 = vmatmul.bf16.gmra.mxu0 %v2966
    %v3170 = vpop.f32.mrf.mxu0
    %v3171 = vadd.f32 %v2783, %v3170
    %v3172 = vpop.f32.mrf.mxu0
    %v3173 = vadd.f32 %v2783, %v3172
    %3174 = vmatmul.bf16.gmra.mxu0 %v2969
    %v3175 = vpop.f32.mrf.mxu0
    %v3176 = vadd.f32 %v2783, %v3175
    %v3177 = vpop.f32.mrf.mxu0
    %v3178 = vadd.f32 %v2783, %v3177
    %3179 = vdwg.mxu0
    %3180 = vmatpush.bf16.msra.mxu0 0
    %3181 = vmatpush.bf16.msra.mxu0 0
    %3182 = vmatpush.bf16.msra.mxu0 0
    %3183 = vmatpush.bf16.msra.mxu0 0
    %3184 = vmatpush.bf16.msra.mxu0 0
    %3185 = vmatpush.bf16.msra.mxu0 0
    %3186 = vmatpush.bf16.msra.mxu0 %v2928
    %3187 = vmatpush.bf16.msra.mxu0 %v2912
    %3188 = vmatmul.bf16.gmra.mxu0 %v2966
    %v3189 = vpop.f32.mrf.mxu0
    %v3190 = vadd.f32 %v2784, %v3189
    %v3191 = vpop.f32.mrf.mxu0
    %v3192 = vadd.f32 %v2784, %v3191
    %3193 = vmatmul.bf16.gmra.mxu0 %v2969
    %v3194 = vpop.f32.mrf.mxu0
    %v3195 = vadd.f32 %v2784, %v3194
    %v3196 = vpop.f32.mrf.mxu0
    %v3197 = vadd.f32 %v2784, %v3196
    %3198 = vdwg.mxu0
    %3199 = vmatpush.bf16.msra.mxu0 0
    %3200 = vmatpush.bf16.msra.mxu0 0
    %3201 = vmatpush.bf16.msra.mxu0 0
    %3202 = vmatpush.bf16.msra.mxu0 0
    %3203 = vmatpush.bf16.msra.mxu0 0
    %3204 = vmatpush.bf16.msra.mxu0 0
    %3205 = vmatpush.bf16.msra.mxu0 %v2929
    %3206 = vmatpush.bf16.msra.mxu0 %v2913
    %3207 = vmatmul.bf16.gmra.mxu0 %v2966
    %v3208 = vpop.f32.mrf.mxu0
    %v3209 = vadd.f32 %v2785, %v3208
    %v3210 = vpop.f32.mrf.mxu0
    %v3211 = vadd.f32 %v2785, %v3210
    %3212 = vmatmul.bf16.gmra.mxu0 %v2969
    %v3213 = vpop.f32.mrf.mxu0
    %v3214 = vadd.f32 %v2785, %v3213
    %v3215 = vpop.f32.mrf.mxu0
    %v3216 = vadd.f32 %v2785, %v3215
    %3217 = vdwg.mxu0
    %3218 = vmatpush.bf16.msra.mxu0 0
    %3219 = vmatpush.bf16.msra.mxu0 0
    %3220 = vmatpush.bf16.msra.mxu0 0
    %3221 = vmatpush.bf16.msra.mxu0 0
    %3222 = vmatpush.bf16.msra.mxu0 0
    %3223 = vmatpush.bf16.msra.mxu0 0
    %3224 = vmatpush.bf16.msra.mxu0 %v2930
    %3225 = vmatpush.bf16.msra.mxu0 %v2914
    %3226 = vmatmul.bf16.gmra.mxu0 %v2966
    %v3227 = vpop.f32.mrf.mxu0
    %v3228 = vadd.f32 %v2786, %v3227
    %v3229 = vpop.f32.mrf.mxu0
    %v3230 = vadd.f32 %v2786, %v3229
    %3231 = vmatmul.bf16.gmra.mxu0 %v2969
    %v3232 = vpop.f32.mrf.mxu0
    %v3233 = vadd.f32 %v2786, %v3232
    %v3234 = vpop.f32.mrf.mxu0
    %v3235 = vadd.f32 %v2786, %v3234
    %3236 = vdwg.mxu0
    %3237 = vmatpush.bf16.msra.mxu0 0
    %3238 = vmatpush.bf16.msra.mxu0 0
    %3239 = vmatpush.bf16.msra.mxu0 0
    %3240 = vmatpush.bf16.msra.mxu0 0
    %3241 = vmatpush.bf16.msra.mxu0 0
    %3242 = vmatpush.bf16.msra.mxu0 0
    %3243 = vmatpush.bf16.msra.mxu0 %v2931
    %3244 = vmatpush.bf16.msra.mxu0 %v2915
    %3245 = vmatmul.bf16.gmra.mxu0 %v2966
    %v3246 = vpop.f32.mrf.mxu0
    %v3247 = vadd.f32 %v2787, %v3246
    %v3248 = vpop.f32.mrf.mxu0
    %v3249 = vadd.f32 %v2787, %v3248
    %3250 = vmatmul.bf16.gmra.mxu0 %v2969
    %v3251 = vpop.f32.mrf.mxu0
    %v3252 = vadd.f32 %v2787, %v3251
    %v3253 = vpop.f32.mrf.mxu0
    %v3254 = vadd.f32 %v2787, %v3253
    %3255 = vdwg.mxu0
    %3256 = vmatpush.bf16.msra.mxu0 0
    %3257 = vmatpush.bf16.msra.mxu0 0
    %3258 = vmatpush.bf16.msra.mxu0 0
    %3259 = vmatpush.bf16.msra.mxu0 0
    %3260 = vmatpush.bf16.msra.mxu0 0
    %3261 = vmatpush.bf16.msra.mxu0 0
    %3262 = vmatpush.bf16.msra.mxu0 %v2932
    %3263 = vmatpush.bf16.msra.mxu0 %v2916
    %3264 = vmatmul.bf16.gmra.mxu0 %v2966
    %v3265 = vpop.f32.mrf.mxu0
    %v3266 = vadd.f32 %v2788, %v3265
    %v3267 = vpop.f32.mrf.mxu0
    %v3268 = vadd.f32 %v2788, %v3267
    %3269 = vmatmul.bf16.gmra.mxu0 %v2969
    %v3270 = vpop.f32.mrf.mxu0
    %v3271 = vadd.f32 %v2788, %v3270
    %v3272 = vpop.f32.mrf.mxu0
    %v3273 = vadd.f32 %v2788, %v3272
    %3274 = vdwg.mxu0
    %v3275 = vmax.f32 %v2981, 0.0
    %v3276 = vmax.f32 %v3000, 0.0
    %v3277 = vmax.f32 %v3019, 0.0
    %v3278 = vmax.f32 %v3038, 0.0
    %v3279 = vmax.f32 %v3057, 0.0
    %v3280 = vmax.f32 %v3076, 0.0
    %v3281 = vmax.f32 %v3095, 0.0
    %v3282 = vmax.f32 %v3114, 0.0
    %v3283 = vmax.f32 %v3133, 0.0
    %v3284 = vmax.f32 %v3152, 0.0
    %v3285 = vmax.f32 %v3171, 0.0
    %v3286 = vmax.f32 %v3190, 0.0
    %v3287 = vmax.f32 %v3209, 0.0
    %v3288 = vmax.f32 %v3228, 0.0
    %v3289 = vmax.f32 %v3247, 0.0
    %v3290 = vmax.f32 %v3266, 0.0
    %v3291 = vmax.f32 %v2983, 0.0
    %v3292 = vmax.f32 %v3002, 0.0
    %v3293 = vmax.f32 %v3021, 0.0
    %v3294 = vmax.f32 %v3040, 0.0
    %v3295 = vmax.f32 %v3059, 0.0
    %v3296 = vmax.f32 %v3078, 0.0
    %v3297 = vmax.f32 %v3097, 0.0
    %v3298 = vmax.f32 %v3116, 0.0
    %v3299 = vmax.f32 %v3135, 0.0
    %v3300 = vmax.f32 %v3154, 0.0
    %v3301 = vmax.f32 %v3173, 0.0
    %v3302 = vmax.f32 %v3192, 0.0
    %v3303 = vmax.f32 %v3211, 0.0
    %v3304 = vmax.f32 %v3230, 0.0
    %v3305 = vmax.f32 %v3249, 0.0
    %v3306 = vmax.f32 %v3268, 0.0
    %v3307 = vmax.f32 %v2986, 0.0
    %v3308 = vmax.f32 %v3005, 0.0
    %v3309 = vmax.f32 %v3024, 0.0
    %v3310 = vmax.f32 %v3043, 0.0
    %v3311 = vmax.f32 %v3062, 0.0
    %v3312 = vmax.f32 %v3081, 0.0
    %v3313 = vmax.f32 %v3100, 0.0
    %v3314 = vmax.f32 %v3119, 0.0
    %v3315 = vmax.f32 %v3138, 0.0
    %v3316 = vmax.f32 %v3157, 0.0
    %v3317 = vmax.f32 %v3176, 0.0
    %v3318 = vmax.f32 %v3195, 0.0
    %v3319 = vmax.f32 %v3214, 0.0
    %v3320 = vmax.f32 %v3233, 0.0
    %v3321 = vmax.f32 %v3252, 0.0
    %v3322 = vmax.f32 %v3271, 0.0
    %v3323 = vmax.f32 %v2988, 0.0
    %v3324 = vmax.f32 %v3007, 0.0
    %v3325 = vmax.f32 %v3026, 0.0
    %v3326 = vmax.f32 %v3045, 0.0
    %v3327 = vmax.f32 %v3064, 0.0
    %v3328 = vmax.f32 %v3083, 0.0
    %v3329 = vmax.f32 %v3102, 0.0
    %v3330 = vmax.f32 %v3121, 0.0
    %v3331 = vmax.f32 %v3140, 0.0
    %v3332 = vmax.f32 %v3159, 0.0
    %v3333 = vmax.f32 %v3178, 0.0
    %v3334 = vmax.f32 %v3197, 0.0
    %v3335 = vmax.f32 %v3216, 0.0
    %v3336 = vmax.f32 %v3235, 0.0
    %v3337 = vmax.f32 %v3254, 0.0
    %v3338 = vmax.f32 %v3273, 0.0
    %v3339 = vpack.c.bf16 %v3291, %v3275
    %v3340 = vpack.c.bf16 %v3292, %v3276
    %v3341 = vpack.c.bf16 %v3293, %v3277
    %v3342 = vpack.c.bf16 %v3294, %v3278
    %v3343 = vpack.c.bf16 %v3295, %v3279
    %v3344 = vpack.c.bf16 %v3296, %v3280
    %v3345 = vpack.c.bf16 %v3297, %v3281
    %v3346 = vpack.c.bf16 %v3298, %v3282
    %v3347 = vpack.c.bf16 %v3299, %v3283
    %v3348 = vpack.c.bf16 %v3300, %v3284
    %v3349 = vpack.c.bf16 %v3301, %v3285
    %v3350 = vpack.c.bf16 %v3302, %v3286
    %v3351 = vpack.c.bf16 %v3303, %v3287
    %v3352 = vpack.c.bf16 %v3304, %v3288
    %v3353 = vpack.c.bf16 %v3305, %v3289
    %v3354 = vpack.c.bf16 %v3306, %v3290
    %v3355 = vpack.c.bf16 %v3323, %v3307
    %v3356 = vpack.c.bf16 %v3324, %v3308
    %v3357 = vpack.c.bf16 %v3325, %v3309
    %v3358 = vpack.c.bf16 %v3326, %v3310
    %v3359 = vpack.c.bf16 %v3327, %v3311
    %v3360 = vpack.c.bf16 %v3328, %v3312
    %v3361 = vpack.c.bf16 %v3329, %v3313
    %v3362 = vpack.c.bf16 %v3330, %v3314
    %v3363 = vpack.c.bf16 %v3331, %v3315
    %v3364 = vpack.c.bf16 %v3332, %v3316
    %v3365 = vpack.c.bf16 %v3333, %v3317
    %v3366 = vpack.c.bf16 %v3334, %v3318
    %v3367 = vpack.c.bf16 %v3335, %v3319
    %v3368 = vpack.c.bf16 %v3336, %v3320
    %v3369 = vpack.c.bf16 %v3337, %v3321
    %v3370 = vpack.c.bf16 %v3338, %v3322
    %v3371 = vld [vmem:[%s7] sm:$0xf]
    %v3372 = vld [vmem:[%s7 + $0x4] sm:$0xf]
    %v3373 = vld [vmem:[%s7 + $0x8] sm:$0xf]
    %v3374 = vld [vmem:[%s7 + $0xc] sm:$0xf]
    %v3375 = vld [vmem:[%s7 + $0x10] sm:$0xf]
    %v3376 = vld [vmem:[%s7 + $0x14] sm:$0xf]
    %v3377 = vld [vmem:[%s7 + $0x18] sm:$0xf]
    %v3378 = vld [vmem:[%s7 + $0x1c] sm:$0xf]
    %v3379 = vld [vmem:[%s7 + $0x20] sm:$0xf]
    %v3380 = vld [vmem:[%s7 + $0x24] sm:$0xf]
    %v3381 = vld [vmem:[%s7 + $0x28] sm:$0xf]
    %v3382 = vld [vmem:[%s7 + $0x2c] sm:$0xf]
    %v3383 = vld [vmem:[%s7 + $0x30] sm:$0xf]
    %v3384 = vld [vmem:[%s7 + $0x34] sm:$0xf]
    %v3385 = vld [vmem:[%s7 + $0x38] sm:$0xf]
    %v3386 = vld [vmem:[%s7 + $0x3c] sm:$0xf]
    %v3387 = vld [vmem:[%s7 + $0x40] sm:$0xf]
    %v3388 = vld [vmem:[%s7 + $0x44] sm:$0xf]
    %v3389 = vld [vmem:[%s7 + $0x48] sm:$0xf]
    %v3390 = vld [vmem:[%s7 + $0x4c] sm:$0xf]
    %v3391 = vld [vmem:[%s7 + $0x50] sm:$0xf]
    %v3392 = vld [vmem:[%s7 + $0x54] sm:$0xf]
    %v3393 = vld [vmem:[%s7 + $0x58] sm:$0xf]
    %v3394 = vld [vmem:[%s7 + $0x5c] sm:$0xf]
    %v3395 = vld [vmem:[%s7 + $0x60] sm:$0xf]
    %v3396 = vld [vmem:[%s7 + $0x64] sm:$0xf]
    %v3397 = vld [vmem:[%s7 + $0x68] sm:$0xf]
    %v3398 = vld [vmem:[%s7 + $0x6c] sm:$0xf]
    %v3399 = vld [vmem:[%s7 + $0x70] sm:$0xf]
    %v3400 = vld [vmem:[%s7 + $0x74] sm:$0xf]
    %v3401 = vld [vmem:[%s7 + $0x78] sm:$0xf]
    %v3402 = vld [vmem:[%s7 + $0x7c] sm:$0xf]
    %v3403 = vld [vmem:[%s7 + $0x80] sm:$0xf]
    %v3404 = vld [vmem:[%s7 + $0x84] sm:$0xf]
    %v3405 = vld [vmem:[%s7 + $0x88] sm:$0xf]
    %v3406 = vld [vmem:[%s7 + $0x8c] sm:$0xf]
    %v3407 = vld [vmem:[%s7 + $0x90] sm:$0xf]
    %v3408 = vld [vmem:[%s7 + $0x94] sm:$0xf]
    %v3409 = vld [vmem:[%s7 + $0x98] sm:$0xf]
    %v3410 = vld [vmem:[%s7 + $0x9c] sm:$0xf]
    %v3411 = vld [vmem:[%s7 + $0xa0] sm:$0xf]
    %v3412 = vld [vmem:[%s7 + $0xa4] sm:$0xf]
    %v3413 = vld [vmem:[%s7 + $0xa8] sm:$0xf]
    %v3414 = vld [vmem:[%s7 + $0xac] sm:$0xf]
    %v3415 = vld [vmem:[%s7 + $0xb0] sm:$0xf]
    %v3416 = vld [vmem:[%s7 + $0xb4] sm:$0xf]
    %v3417 = vld [vmem:[%s7 + $0xb8] sm:$0xf]
    %v3418 = vld [vmem:[%s7 + $0xbc] sm:$0xf]
    %v3419 = vld [vmem:[%s7 + $0xc0] sm:$0xf]
    %v3420 = vld [vmem:[%s7 + $0xc4] sm:$0xf]
    %v3421 = vld [vmem:[%s7 + $0xc8] sm:$0xf]
    %v3422 = vld [vmem:[%s7 + $0xcc] sm:$0xf]
    %v3423 = vld [vmem:[%s7 + $0xd0] sm:$0xf]
    %v3424 = vld [vmem:[%s7 + $0xd4] sm:$0xf]
    %v3425 = vld [vmem:[%s7 + $0xd8] sm:$0xf]
    %v3426 = vld [vmem:[%s7 + $0xdc] sm:$0xf]
    %v3427 = vld [vmem:[%s7 + $0xe0] sm:$0xf]
    %v3428 = vld [vmem:[%s7 + $0xe4] sm:$0xf]
    %v3429 = vld [vmem:[%s7 + $0xe8] sm:$0xf]
    %v3430 = vld [vmem:[%s7 + $0xec] sm:$0xf]
    %v3431 = vld [vmem:[%s7 + $0xf0] sm:$0xf]
    %v3432 = vld [vmem:[%s7 + $0xf4] sm:$0xf]
    %v3433 = vld [vmem:[%s7 + $0xf8] sm:$0xf]
    %v3434 = vld [vmem:[%s7 + $0xfc] sm:$0xf]
    %v3435 = vld [vmem:[%s7 + $0x100] sm:$0xf]
    %v3436 = vld [vmem:[%s7 + $0x104] sm:$0xf]
    %v3437 = vld [vmem:[%s7 + $0x108] sm:$0xf]
    %v3438 = vld [vmem:[%s7 + $0x10c] sm:$0xf]
    %v3439 = vld [vmem:[%s7 + $0x110] sm:$0xf]
    %v3440 = vld [vmem:[%s7 + $0x114] sm:$0xf]
    %v3441 = vld [vmem:[%s7 + $0x118] sm:$0xf]
    %v3442 = vld [vmem:[%s7 + $0x11c] sm:$0xf]
    %v3443 = vld [vmem:[%s7 + $0x120] sm:$0xf]
    %v3444 = vld [vmem:[%s7 + $0x124] sm:$0xf]
    %v3445 = vld [vmem:[%s7 + $0x128] sm:$0xf]
    %v3446 = vld [vmem:[%s7 + $0x12c] sm:$0xf]
    %v3447 = vld [vmem:[%s7 + $0x130] sm:$0xf]
    %v3448 = vld [vmem:[%s7 + $0x134] sm:$0xf]
    %v3449 = vld [vmem:[%s7 + $0x138] sm:$0xf]
    %v3450 = vld [vmem:[%s7 + $0x13c] sm:$0xf]
    %v3451 = vld [vmem:[%s7 + $0x140] sm:$0xf]
    %v3452 = vld [vmem:[%s7 + $0x144] sm:$0xf]
    %v3453 = vld [vmem:[%s7 + $0x148] sm:$0xf]
    %v3454 = vld [vmem:[%s7 + $0x14c] sm:$0xf]
    %v3455 = vld [vmem:[%s7 + $0x150] sm:$0xf]
    %v3456 = vld [vmem:[%s7 + $0x154] sm:$0xf]
    %v3457 = vld [vmem:[%s7 + $0x158] sm:$0xf]
    %v3458 = vld [vmem:[%s7 + $0x15c] sm:$0xf]
    %v3459 = vld [vmem:[%s7 + $0x160] sm:$0xf]
    %v3460 = vld [vmem:[%s7 + $0x164] sm:$0xf]
    %v3461 = vld [vmem:[%s7 + $0x168] sm:$0xf]
    %v3462 = vld [vmem:[%s7 + $0x16c] sm:$0xf]
    %v3463 = vld [vmem:[%s7 + $0x170] sm:$0xf]
    %v3464 = vld [vmem:[%s7 + $0x174] sm:$0xf]
    %v3465 = vld [vmem:[%s7 + $0x178] sm:$0xf]
    %v3466 = vld [vmem:[%s7 + $0x17c] sm:$0xf]
    %v3467 = vld [vmem:[%s7 + $0x180] sm:$0xf]
    %v3468 = vld [vmem:[%s7 + $0x184] sm:$0xf]
    %v3469 = vld [vmem:[%s7 + $0x188] sm:$0xf]
    %v3470 = vld [vmem:[%s7 + $0x18c] sm:$0xf]
    %v3471 = vld [vmem:[%s7 + $0x190] sm:$0xf]
    %v3472 = vld [vmem:[%s7 + $0x194] sm:$0xf]
    %v3473 = vld [vmem:[%s7 + $0x198] sm:$0xf]
    %v3474 = vld [vmem:[%s7 + $0x19c] sm:$0xf]
    %v3475 = vld [vmem:[%s7 + $0x1a0] sm:$0xf]
    %v3476 = vld [vmem:[%s7 + $0x1a4] sm:$0xf]
    %v3477 = vld [vmem:[%s7 + $0x1a8] sm:$0xf]
    %v3478 = vld [vmem:[%s7 + $0x1ac] sm:$0xf]
    %v3479 = vld [vmem:[%s7 + $0x1b0] sm:$0xf]
    %v3480 = vld [vmem:[%s7 + $0x1b4] sm:$0xf]
    %v3481 = vld [vmem:[%s7 + $0x1b8] sm:$0xf]
    %v3482 = vld [vmem:[%s7 + $0x1bc] sm:$0xf]
    %v3483 = vld [vmem:[%s7 + $0x1c0] sm:$0xf]
    %v3484 = vld [vmem:[%s7 + $0x1c4] sm:$0xf]
    %v3485 = vld [vmem:[%s7 + $0x1c8] sm:$0xf]
    %v3486 = vld [vmem:[%s7 + $0x1cc] sm:$0xf]
    %v3487 = vld [vmem:[%s7 + $0x1d0] sm:$0xf]
    %v3488 = vld [vmem:[%s7 + $0x1d4] sm:$0xf]
    %v3489 = vld [vmem:[%s7 + $0x1d8] sm:$0xf]
    %v3490 = vld [vmem:[%s7 + $0x1dc] sm:$0xf]
    %v3491 = vld [vmem:[%s7 + $0x1e0] sm:$0xf]
    %v3492 = vld [vmem:[%s7 + $0x1e4] sm:$0xf]
    %v3493 = vld [vmem:[%s7 + $0x1e8] sm:$0xf]
    %v3494 = vld [vmem:[%s7 + $0x1ec] sm:$0xf]
    %v3495 = vld [vmem:[%s7 + $0x1f0] sm:$0xf]
    %v3496 = vld [vmem:[%s7 + $0x1f4] sm:$0xf]
    %v3497 = vld [vmem:[%s7 + $0x1f8] sm:$0xf]
    %v3498 = vld [vmem:[%s7 + $0x1fc] sm:$0xf]
    %v3499 = vld [vmem:[%s7 + $0x200] sm:$0xf]
    %v3500 = vld [vmem:[%s7 + $0x204] sm:$0xf]
    %v3501 = vld [vmem:[%s7 + $0x208] sm:$0xf]
    %v3502 = vld [vmem:[%s7 + $0x20c] sm:$0xf]
    %v3503 = vld [vmem:[%s7 + $0x210] sm:$0xf]
    %v3504 = vld [vmem:[%s7 + $0x214] sm:$0xf]
    %v3505 = vld [vmem:[%s7 + $0x218] sm:$0xf]
    %v3506 = vld [vmem:[%s7 + $0x21c] sm:$0xf]
    %v3507 = vld [vmem:[%s7 + $0x220] sm:$0xf]
    %v3508 = vld [vmem:[%s7 + $0x224] sm:$0xf]
    %v3509 = vld [vmem:[%s7 + $0x228] sm:$0xf]
    %v3510 = vld [vmem:[%s7 + $0x22c] sm:$0xf]
    %v3511 = vld [vmem:[%s7 + $0x230] sm:$0xf]
    %v3512 = vld [vmem:[%s7 + $0x234] sm:$0xf]
    %v3513 = vld [vmem:[%s7 + $0x238] sm:$0xf]
    %v3514 = vld [vmem:[%s7 + $0x23c] sm:$0xf]
    %v3515 = vld [vmem:[%s7 + $0x240] sm:$0xf]
    %v3516 = vld [vmem:[%s7 + $0x244] sm:$0xf]
    %v3517 = vld [vmem:[%s7 + $0x248] sm:$0xf]
    %v3518 = vld [vmem:[%s7 + $0x24c] sm:$0xf]
    %v3519 = vld [vmem:[%s7 + $0x250] sm:$0xf]
    %v3520 = vld [vmem:[%s7 + $0x254] sm:$0xf]
    %v3521 = vld [vmem:[%s7 + $0x258] sm:$0xf]
    %v3522 = vld [vmem:[%s7 + $0x25c] sm:$0xf]
    %v3523 = vld [vmem:[%s7 + $0x260] sm:$0xf]
    %v3524 = vld [vmem:[%s7 + $0x264] sm:$0xf]
    %v3525 = vld [vmem:[%s7 + $0x268] sm:$0xf]
    %v3526 = vld [vmem:[%s7 + $0x26c] sm:$0xf]
    %v3527 = vld [vmem:[%s7 + $0x270] sm:$0xf]
    %v3528 = vld [vmem:[%s7 + $0x274] sm:$0xf]
    %v3529 = vld [vmem:[%s7 + $0x278] sm:$0xf]
    %v3530 = vld [vmem:[%s7 + $0x27c] sm:$0xf]
    %v3531 = vld [vmem:[%s7 + $0x280] sm:$0xf]
    %v3532 = vld [vmem:[%s7 + $0x284] sm:$0xf]
    %v3533 = vld [vmem:[%s7 + $0x288] sm:$0xf]
    %v3534 = vld [vmem:[%s7 + $0x28c] sm:$0xf]
    %v3535 = vld [vmem:[%s7 + $0x290] sm:$0xf]
    %v3536 = vld [vmem:[%s7 + $0x294] sm:$0xf]
    %v3537 = vld [vmem:[%s7 + $0x298] sm:$0xf]
    %v3538 = vld [vmem:[%s7 + $0x29c] sm:$0xf]
    %v3539 = vld [vmem:[%s7 + $0x2a0] sm:$0xf]
    %v3540 = vld [vmem:[%s7 + $0x2a4] sm:$0xf]
    %v3541 = vld [vmem:[%s7 + $0x2a8] sm:$0xf]
    %v3542 = vld [vmem:[%s7 + $0x2ac] sm:$0xf]
    %v3543 = vld [vmem:[%s7 + $0x2b0] sm:$0xf]
    %v3544 = vld [vmem:[%s7 + $0x2b4] sm:$0xf]
    %v3545 = vld [vmem:[%s7 + $0x2b8] sm:$0xf]
    %v3546 = vld [vmem:[%s7 + $0x2bc] sm:$0xf]
    %v3547 = vld [vmem:[%s7 + $0x2c0] sm:$0xf]
    %v3548 = vld [vmem:[%s7 + $0x2c4] sm:$0xf]
    %v3549 = vld [vmem:[%s7 + $0x2c8] sm:$0xf]
    %v3550 = vld [vmem:[%s7 + $0x2cc] sm:$0xf]
    %v3551 = vld [vmem:[%s7 + $0x2d0] sm:$0xf]
    %v3552 = vld [vmem:[%s7 + $0x2d4] sm:$0xf]
    %v3553 = vld [vmem:[%s7 + $0x2d8] sm:$0xf]
    %v3554 = vld [vmem:[%s7 + $0x2dc] sm:$0xf]
    %v3555 = vld [vmem:[%s7 + $0x2e0] sm:$0xf]
    %v3556 = vld [vmem:[%s7 + $0x2e4] sm:$0xf]
    %v3557 = vld [vmem:[%s7 + $0x2e8] sm:$0xf]
    %v3558 = vld [vmem:[%s7 + $0x2ec] sm:$0xf]
    %v3559 = vld [vmem:[%s7 + $0x2f0] sm:$0xf]
    %v3560 = vld [vmem:[%s7 + $0x2f4] sm:$0xf]
    %v3561 = vld [vmem:[%s7 + $0x2f8] sm:$0xf]
    %v3562 = vld [vmem:[%s7 + $0x2fc] sm:$0xf]
    %v3563 = vld [vmem:[%s7 + $0x300] sm:$0xf]
    %v3564 = vld [vmem:[%s7 + $0x304] sm:$0xf]
    %v3565 = vld [vmem:[%s7 + $0x308] sm:$0xf]
    %v3566 = vld [vmem:[%s7 + $0x30c] sm:$0xf]
    %v3567 = vld [vmem:[%s7 + $0x310] sm:$0xf]
    %v3568 = vld [vmem:[%s7 + $0x314] sm:$0xf]
    %v3569 = vld [vmem:[%s7 + $0x318] sm:$0xf]
    %v3570 = vld [vmem:[%s7 + $0x31c] sm:$0xf]
    %v3571 = vld [vmem:[%s7 + $0x320] sm:$0xf]
    %v3572 = vld [vmem:[%s7 + $0x324] sm:$0xf]
    %v3573 = vld [vmem:[%s7 + $0x328] sm:$0xf]
    %v3574 = vld [vmem:[%s7 + $0x32c] sm:$0xf]
    %v3575 = vld [vmem:[%s7 + $0x330] sm:$0xf]
    %v3576 = vld [vmem:[%s7 + $0x334] sm:$0xf]
    %v3577 = vld [vmem:[%s7 + $0x338] sm:$0xf]
    %v3578 = vld [vmem:[%s7 + $0x33c] sm:$0xf]
    %v3579 = vld [vmem:[%s7 + $0x340] sm:$0xf]
    %v3580 = vld [vmem:[%s7 + $0x344] sm:$0xf]
    %v3581 = vld [vmem:[%s7 + $0x348] sm:$0xf]
    %v3582 = vld [vmem:[%s7 + $0x34c] sm:$0xf]
    %v3583 = vld [vmem:[%s7 + $0x350] sm:$0xf]
    %v3584 = vld [vmem:[%s7 + $0x354] sm:$0xf]
    %v3585 = vld [vmem:[%s7 + $0x358] sm:$0xf]
    %v3586 = vld [vmem:[%s7 + $0x35c] sm:$0xf]
    %v3587 = vld [vmem:[%s7 + $0x360] sm:$0xf]
    %v3588 = vld [vmem:[%s7 + $0x364] sm:$0xf]
    %v3589 = vld [vmem:[%s7 + $0x368] sm:$0xf]
    %v3590 = vld [vmem:[%s7 + $0x36c] sm:$0xf]
    %v3591 = vld [vmem:[%s7 + $0x370] sm:$0xf]
    %v3592 = vld [vmem:[%s7 + $0x374] sm:$0xf]
    %v3593 = vld [vmem:[%s7 + $0x378] sm:$0xf]
    %v3594 = vld [vmem:[%s7 + $0x37c] sm:$0xf]
    %v3595 = vld [vmem:[%s7 + $0x380] sm:$0xf]
    %v3596 = vld [vmem:[%s7 + $0x384] sm:$0xf]
    %v3597 = vld [vmem:[%s7 + $0x388] sm:$0xf]
    %v3598 = vld [vmem:[%s7 + $0x38c] sm:$0xf]
    %v3599 = vld [vmem:[%s7 + $0x390] sm:$0xf]
    %v3600 = vld [vmem:[%s7 + $0x394] sm:$0xf]
    %v3601 = vld [vmem:[%s7 + $0x398] sm:$0xf]
    %v3602 = vld [vmem:[%s7 + $0x39c] sm:$0xf]
    %v3603 = vld [vmem:[%s7 + $0x3a0] sm:$0xf]
    %v3604 = vld [vmem:[%s7 + $0x3a4] sm:$0xf]
    %v3605 = vld [vmem:[%s7 + $0x3a8] sm:$0xf]
    %v3606 = vld [vmem:[%s7 + $0x3ac] sm:$0xf]
    %v3607 = vld [vmem:[%s7 + $0x3b0] sm:$0xf]
    %v3608 = vld [vmem:[%s7 + $0x3b4] sm:$0xf]
    %v3609 = vld [vmem:[%s7 + $0x3b8] sm:$0xf]
    %v3610 = vld [vmem:[%s7 + $0x3bc] sm:$0xf]
    %v3611 = vld [vmem:[%s7 + $0x3c0] sm:$0xf]
    %v3612 = vld [vmem:[%s7 + $0x3c4] sm:$0xf]
    %v3613 = vld [vmem:[%s7 + $0x3c8] sm:$0xf]
    %v3614 = vld [vmem:[%s7 + $0x3cc] sm:$0xf]
    %v3615 = vld [vmem:[%s7 + $0x3d0] sm:$0xf]
    %v3616 = vld [vmem:[%s7 + $0x3d4] sm:$0xf]
    %v3617 = vld [vmem:[%s7 + $0x3d8] sm:$0xf]
    %v3618 = vld [vmem:[%s7 + $0x3dc] sm:$0xf]
    %v3619 = vld [vmem:[%s7 + $0x3e0] sm:$0xf]
    %v3620 = vld [vmem:[%s7 + $0x3e4] sm:$0xf]
    %v3621 = vld [vmem:[%s7 + $0x3e8] sm:$0xf]
    %v3622 = vld [vmem:[%s7 + $0x3ec] sm:$0xf]
    %v3623 = vld [vmem:[%s7 + $0x3f0] sm:$0xf]
    %v3624 = vld [vmem:[%s7 + $0x3f4] sm:$0xf]
    %v3625 = vld [vmem:[%s7 + $0x3f8] sm:$0xf]
    %v3626 = vld [vmem:[%s7 + $0x3fc] sm:$0xf]
    %v3628 = vperm.slane %v50, 0
    %v3886 = vunpack.c.l.b16 %v3371
    %v3887 = vunpack.c.l.b16 %v3372
    %v3888 = vunpack.c.l.b16 %v3373
    %v3889 = vunpack.c.l.b16 %v3374
    %v3890 = vunpack.c.l.b16 %v3375
    %v3891 = vunpack.c.l.b16 %v3376
    %v3892 = vunpack.c.l.b16 %v3377
    %v3893 = vunpack.c.l.b16 %v3378
    %v3894 = vunpack.c.l.b16 %v3379
    %v3895 = vunpack.c.l.b16 %v3380
    %v3896 = vunpack.c.l.b16 %v3381
    %v3897 = vunpack.c.l.b16 %v3382
    %v3898 = vunpack.c.l.b16 %v3383
    %v3899 = vunpack.c.l.b16 %v3384
    %v3900 = vunpack.c.l.b16 %v3385
    %v3901 = vunpack.c.l.b16 %v3386
    %v3902 = vunpack.c.l.b16 %v3387
    %v3903 = vunpack.c.l.b16 %v3388
    %v3904 = vunpack.c.l.b16 %v3389
    %v3905 = vunpack.c.l.b16 %v3390
    %v3906 = vunpack.c.l.b16 %v3391
    %v3907 = vunpack.c.l.b16 %v3392
    %v3908 = vunpack.c.l.b16 %v3393
    %v3909 = vunpack.c.l.b16 %v3394
    %v3910 = vunpack.c.l.b16 %v3395
    %v3911 = vunpack.c.l.b16 %v3396
    %v3912 = vunpack.c.l.b16 %v3397
    %v3913 = vunpack.c.l.b16 %v3398
    %v3914 = vunpack.c.l.b16 %v3399
    %v3915 = vunpack.c.l.b16 %v3400
    %v3916 = vunpack.c.l.b16 %v3401
    %v3917 = vunpack.c.l.b16 %v3402
    %v3918 = vunpack.c.l.b16 %v3403
    %v3919 = vunpack.c.l.b16 %v3404
    %v3920 = vunpack.c.l.b16 %v3405
    %v3921 = vunpack.c.l.b16 %v3406
    %v3922 = vunpack.c.l.b16 %v3407
    %v3923 = vunpack.c.l.b16 %v3408
    %v3924 = vunpack.c.l.b16 %v3409
    %v3925 = vunpack.c.l.b16 %v3410
    %v3926 = vunpack.c.l.b16 %v3411
    %v3927 = vunpack.c.l.b16 %v3412
    %v3928 = vunpack.c.l.b16 %v3413
    %v3929 = vunpack.c.l.b16 %v3414
    %v3930 = vunpack.c.l.b16 %v3415
    %v3931 = vunpack.c.l.b16 %v3416
    %v3932 = vunpack.c.l.b16 %v3417
    %v3933 = vunpack.c.l.b16 %v3418
    %v3934 = vunpack.c.l.b16 %v3419
    %v3935 = vunpack.c.l.b16 %v3420
    %v3936 = vunpack.c.l.b16 %v3421
    %v3937 = vunpack.c.l.b16 %v3422
    %v3938 = vunpack.c.l.b16 %v3423
    %v3939 = vunpack.c.l.b16 %v3424
    %v3940 = vunpack.c.l.b16 %v3425
    %v3941 = vunpack.c.l.b16 %v3426
    %v3942 = vunpack.c.l.b16 %v3427
    %v3943 = vunpack.c.l.b16 %v3428
    %v3944 = vunpack.c.l.b16 %v3429
    %v3945 = vunpack.c.l.b16 %v3430
    %v3946 = vunpack.c.l.b16 %v3431
    %v3947 = vunpack.c.l.b16 %v3432
    %v3948 = vunpack.c.l.b16 %v3433
    %v3949 = vunpack.c.l.b16 %v3434
    %v3950 = vunpack.c.l.b16 %v3435
    %v3951 = vunpack.c.l.b16 %v3436
    %v3952 = vunpack.c.l.b16 %v3437
    %v3953 = vunpack.c.l.b16 %v3438
    %v3954 = vunpack.c.l.b16 %v3439
    %v3955 = vunpack.c.l.b16 %v3440
    %v3956 = vunpack.c.l.b16 %v3441
    %v3957 = vunpack.c.l.b16 %v3442
    %v3958 = vunpack.c.l.b16 %v3443
    %v3959 = vunpack.c.l.b16 %v3444
    %v3960 = vunpack.c.l.b16 %v3445
    %v3961 = vunpack.c.l.b16 %v3446
    %v3962 = vunpack.c.l.b16 %v3447
    %v3963 = vunpack.c.l.b16 %v3448
    %v3964 = vunpack.c.l.b16 %v3449
    %v3965 = vunpack.c.l.b16 %v3450
    %v3966 = vunpack.c.l.b16 %v3451
    %v3967 = vunpack.c.l.b16 %v3452
    %v3968 = vunpack.c.l.b16 %v3453
    %v3969 = vunpack.c.l.b16 %v3454
    %v3970 = vunpack.c.l.b16 %v3455
    %v3971 = vunpack.c.l.b16 %v3456
    %v3972 = vunpack.c.l.b16 %v3457
    %v3973 = vunpack.c.l.b16 %v3458
    %v3974 = vunpack.c.l.b16 %v3459
    %v3975 = vunpack.c.l.b16 %v3460
    %v3976 = vunpack.c.l.b16 %v3461
    %v3977 = vunpack.c.l.b16 %v3462
    %v3978 = vunpack.c.l.b16 %v3463
    %v3979 = vunpack.c.l.b16 %v3464
    %v3980 = vunpack.c.l.b16 %v3465
    %v3981 = vunpack.c.l.b16 %v3466
    %v3982 = vunpack.c.l.b16 %v3467
    %v3983 = vunpack.c.l.b16 %v3468
    %v3984 = vunpack.c.l.b16 %v3469
    %v3985 = vunpack.c.l.b16 %v3470
    %v3986 = vunpack.c.l.b16 %v3471
    %v3987 = vunpack.c.l.b16 %v3472
    %v3988 = vunpack.c.l.b16 %v3473
    %v3989 = vunpack.c.l.b16 %v3474
    %v3990 = vunpack.c.l.b16 %v3475
    %v3991 = vunpack.c.l.b16 %v3476
    %v3992 = vunpack.c.l.b16 %v3477
    %v3993 = vunpack.c.l.b16 %v3478
    %v3994 = vunpack.c.l.b16 %v3479
    %v3995 = vunpack.c.l.b16 %v3480
    %v3996 = vunpack.c.l.b16 %v3481
    %v3997 = vunpack.c.l.b16 %v3482
    %v3998 = vunpack.c.l.b16 %v3483
    %v3999 = vunpack.c.l.b16 %v3484
    %v4000 = vunpack.c.l.b16 %v3485
    %v4001 = vunpack.c.l.b16 %v3486
    %v4002 = vunpack.c.l.b16 %v3487
    %v4003 = vunpack.c.l.b16 %v3488
    %v4004 = vunpack.c.l.b16 %v3489
    %v4005 = vunpack.c.l.b16 %v3490
    %v4006 = vunpack.c.l.b16 %v3491
    %v4007 = vunpack.c.l.b16 %v3492
    %v4008 = vunpack.c.l.b16 %v3493
    %v4009 = vunpack.c.l.b16 %v3494
    %v4010 = vunpack.c.l.b16 %v3495
    %v4011 = vunpack.c.l.b16 %v3496
    %v4012 = vunpack.c.l.b16 %v3497
    %v4013 = vunpack.c.l.b16 %v3498
    %v4014 = vunpack.c.l.b16 %v3499
    %v4015 = vunpack.c.l.b16 %v3500
    %v4016 = vunpack.c.l.b16 %v3501
    %v4017 = vunpack.c.l.b16 %v3502
    %v4018 = vunpack.c.l.b16 %v3503
    %v4019 = vunpack.c.l.b16 %v3504
    %v4020 = vunpack.c.l.b16 %v3505
    %v4021 = vunpack.c.l.b16 %v3506
    %v4022 = vunpack.c.l.b16 %v3507
    %v4023 = vunpack.c.l.b16 %v3508
    %v4024 = vunpack.c.l.b16 %v3509
    %v4025 = vunpack.c.l.b16 %v3510
    %v4026 = vunpack.c.l.b16 %v3511
    %v4027 = vunpack.c.l.b16 %v3512
    %v4028 = vunpack.c.l.b16 %v3513
    %v4029 = vunpack.c.l.b16 %v3514
    %v4030 = vunpack.c.l.b16 %v3515
    %v4031 = vunpack.c.l.b16 %v3516
    %v4032 = vunpack.c.l.b16 %v3517
    %v4033 = vunpack.c.l.b16 %v3518
    %v4034 = vunpack.c.l.b16 %v3519
    %v4035 = vunpack.c.l.b16 %v3520
    %v4036 = vunpack.c.l.b16 %v3521
    %v4037 = vunpack.c.l.b16 %v3522
    %v4038 = vunpack.c.l.b16 %v3523
    %v4039 = vunpack.c.l.b16 %v3524
    %v4040 = vunpack.c.l.b16 %v3525
    %v4041 = vunpack.c.l.b16 %v3526
    %v4042 = vunpack.c.l.b16 %v3527
    %v4043 = vunpack.c.l.b16 %v3528
    %v4044 = vunpack.c.l.b16 %v3529
    %v4045 = vunpack.c.l.b16 %v3530
    %v4046 = vunpack.c.l.b16 %v3531
    %v4047 = vunpack.c.l.b16 %v3532
    %v4048 = vunpack.c.l.b16 %v3533
    %v4049 = vunpack.c.l.b16 %v3534
    %v4050 = vunpack.c.l.b16 %v3535
    %v4051 = vunpack.c.l.b16 %v3536
    %v4052 = vunpack.c.l.b16 %v3537
    %v4053 = vunpack.c.l.b16 %v3538
    %v4054 = vunpack.c.l.b16 %v3539
    %v4055 = vunpack.c.l.b16 %v3540
    %v4056 = vunpack.c.l.b16 %v3541
    %v4057 = vunpack.c.l.b16 %v3542
    %v4058 = vunpack.c.l.b16 %v3543
    %v4059 = vunpack.c.l.b16 %v3544
    %v4060 = vunpack.c.l.b16 %v3545
    %v4061 = vunpack.c.l.b16 %v3546
    %v4062 = vunpack.c.l.b16 %v3547
    %v4063 = vunpack.c.l.b16 %v3548
    %v4064 = vunpack.c.l.b16 %v3549
    %v4065 = vunpack.c.l.b16 %v3550
    %v4066 = vunpack.c.l.b16 %v3551
    %v4067 = vunpack.c.l.b16 %v3552
    %v4068 = vunpack.c.l.b16 %v3553
    %v4069 = vunpack.c.l.b16 %v3554
    %v4070 = vunpack.c.l.b16 %v3555
    %v4071 = vunpack.c.l.b16 %v3556
    %v4072 = vunpack.c.l.b16 %v3557
    %v4073 = vunpack.c.l.b16 %v3558
    %v4074 = vunpack.c.l.b16 %v3559
    %v4075 = vunpack.c.l.b16 %v3560
    %v4076 = vunpack.c.l.b16 %v3561
    %v4077 = vunpack.c.l.b16 %v3562
    %v4078 = vunpack.c.l.b16 %v3563
    %v4079 = vunpack.c.l.b16 %v3564
    %v4080 = vunpack.c.l.b16 %v3565
    %v4081 = vunpack.c.l.b16 %v3566
    %v4082 = vunpack.c.l.b16 %v3567
    %v4083 = vunpack.c.l.b16 %v3568
    %v4084 = vunpack.c.l.b16 %v3569
    %v4085 = vunpack.c.l.b16 %v3570
    %v4086 = vunpack.c.l.b16 %v3571
    %v4087 = vunpack.c.l.b16 %v3572
    %v4088 = vunpack.c.l.b16 %v3573
    %v4089 = vunpack.c.l.b16 %v3574
    %v4090 = vunpack.c.l.b16 %v3575
    %v4091 = vunpack.c.l.b16 %v3576
    %v4092 = vunpack.c.l.b16 %v3577
    %v4093 = vunpack.c.l.b16 %v3578
    %v4094 = vunpack.c.l.b16 %v3579
    %v4095 = vunpack.c.l.b16 %v3580
    %v4096 = vunpack.c.l.b16 %v3581
    %v4097 = vunpack.c.l.b16 %v3582
    %v4098 = vunpack.c.l.b16 %v3583
    %v4099 = vunpack.c.l.b16 %v3584
    %v4100 = vunpack.c.l.b16 %v3585
    %v4101 = vunpack.c.l.b16 %v3586
    %v4102 = vunpack.c.l.b16 %v3587
    %v4103 = vunpack.c.l.b16 %v3588
    %v4104 = vunpack.c.l.b16 %v3589
    %v4105 = vunpack.c.l.b16 %v3590
    %v4106 = vunpack.c.l.b16 %v3591
    %v4107 = vunpack.c.l.b16 %v3592
    %v4108 = vunpack.c.l.b16 %v3593
    %v4109 = vunpack.c.l.b16 %v3594
    %v4110 = vunpack.c.l.b16 %v3595
    %v4111 = vunpack.c.l.b16 %v3596
    %v4112 = vunpack.c.l.b16 %v3597
    %v4113 = vunpack.c.l.b16 %v3598
    %v4114 = vunpack.c.l.b16 %v3599
    %v4115 = vunpack.c.l.b16 %v3600
    %v4116 = vunpack.c.l.b16 %v3601
    %v4117 = vunpack.c.l.b16 %v3602
    %v4118 = vunpack.c.l.b16 %v3603
    %v4119 = vunpack.c.l.b16 %v3604
    %v4120 = vunpack.c.l.b16 %v3605
    %v4121 = vunpack.c.l.b16 %v3606
    %v4122 = vunpack.c.l.b16 %v3607
    %v4123 = vunpack.c.l.b16 %v3608
    %v4124 = vunpack.c.l.b16 %v3609
    %v4125 = vunpack.c.l.b16 %v3610
    %v4126 = vunpack.c.l.b16 %v3611
    %v4127 = vunpack.c.l.b16 %v3612
    %v4128 = vunpack.c.l.b16 %v3613
    %v4129 = vunpack.c.l.b16 %v3614
    %v4130 = vunpack.c.l.b16 %v3615
    %v4131 = vunpack.c.l.b16 %v3616
    %v4132 = vunpack.c.l.b16 %v3617
    %v4133 = vunpack.c.l.b16 %v3618
    %v4134 = vunpack.c.l.b16 %v3619
    %v4135 = vunpack.c.l.b16 %v3620
    %v4136 = vunpack.c.l.b16 %v3621
    %v4137 = vunpack.c.l.b16 %v3622
    %v4138 = vunpack.c.l.b16 %v3623
    %v4139 = vunpack.c.l.b16 %v3624
    %v4140 = vunpack.c.l.b16 %v3625
    %v4141 = vunpack.c.l.b16 %v3626
    %v4142 = vpack.c.b16 %v3887, %v3886
    %v4143 = vpack.c.b16 %v3889, %v3888
    %v4144 = vpack.c.b16 %v3891, %v3890
    %v4145 = vpack.c.b16 %v3893, %v3892
    %v4146 = vpack.c.b16 %v3895, %v3894
    %v4147 = vpack.c.b16 %v3897, %v3896
    %v4148 = vpack.c.b16 %v3899, %v3898
    %v4149 = vpack.c.b16 %v3901, %v3900
    %v4150 = vpack.c.b16 %v3903, %v3902
    %v4151 = vpack.c.b16 %v3905, %v3904
    %v4152 = vpack.c.b16 %v3907, %v3906
    %v4153 = vpack.c.b16 %v3909, %v3908
    %v4154 = vpack.c.b16 %v3911, %v3910
    %v4155 = vpack.c.b16 %v3913, %v3912
    %v4156 = vpack.c.b16 %v3915, %v3914
    %v4157 = vpack.c.b16 %v3917, %v3916
    %v4158 = vpack.c.b16 %v3919, %v3918
    %v4159 = vpack.c.b16 %v3921, %v3920
    %v4160 = vpack.c.b16 %v3923, %v3922
    %v4161 = vpack.c.b16 %v3925, %v3924
    %v4162 = vpack.c.b16 %v3927, %v3926
    %v4163 = vpack.c.b16 %v3929, %v3928
    %v4164 = vpack.c.b16 %v3931, %v3930
    %v4165 = vpack.c.b16 %v3933, %v3932
    %v4166 = vpack.c.b16 %v3935, %v3934
    %v4167 = vpack.c.b16 %v3937, %v3936
    %v4168 = vpack.c.b16 %v3939, %v3938
    %v4169 = vpack.c.b16 %v3941, %v3940
    %v4170 = vpack.c.b16 %v3943, %v3942
    %v4171 = vpack.c.b16 %v3945, %v3944
    %v4172 = vpack.c.b16 %v3947, %v3946
    %v4173 = vpack.c.b16 %v3949, %v3948
    %v4174 = vpack.c.b16 %v3951, %v3950
    %v4175 = vpack.c.b16 %v3953, %v3952
    %v4176 = vpack.c.b16 %v3955, %v3954
    %v4177 = vpack.c.b16 %v3957, %v3956
    %v4178 = vpack.c.b16 %v3959, %v3958
    %v4179 = vpack.c.b16 %v3961, %v3960
    %v4180 = vpack.c.b16 %v3963, %v3962
    %v4181 = vpack.c.b16 %v3965, %v3964
    %v4182 = vpack.c.b16 %v3967, %v3966
    %v4183 = vpack.c.b16 %v3969, %v3968
    %v4184 = vpack.c.b16 %v3971, %v3970
    %v4185 = vpack.c.b16 %v3973, %v3972
    %v4186 = vpack.c.b16 %v3975, %v3974
    %v4187 = vpack.c.b16 %v3977, %v3976
    %v4188 = vpack.c.b16 %v3979, %v3978
    %v4189 = vpack.c.b16 %v3981, %v3980
    %v4190 = vpack.c.b16 %v3983, %v3982
    %v4191 = vpack.c.b16 %v3985, %v3984
    %v4192 = vpack.c.b16 %v3987, %v3986
    %v4193 = vpack.c.b16 %v3989, %v3988
    %v4194 = vpack.c.b16 %v3991, %v3990
    %v4195 = vpack.c.b16 %v3993, %v3992
    %v4196 = vpack.c.b16 %v3995, %v3994
    %v4197 = vpack.c.b16 %v3997, %v3996
    %v4198 = vpack.c.b16 %v3999, %v3998
    %v4199 = vpack.c.b16 %v4001, %v4000
    %v4200 = vpack.c.b16 %v4003, %v4002
    %v4201 = vpack.c.b16 %v4005, %v4004
    %v4202 = vpack.c.b16 %v4007, %v4006
    %v4203 = vpack.c.b16 %v4009, %v4008
    %v4204 = vpack.c.b16 %v4011, %v4010
    %v4205 = vpack.c.b16 %v4013, %v4012
    %v4206 = vpack.c.b16 %v4015, %v4014
    %v4207 = vpack.c.b16 %v4017, %v4016
    %v4208 = vpack.c.b16 %v4019, %v4018
    %v4209 = vpack.c.b16 %v4021, %v4020
    %v4210 = vpack.c.b16 %v4023, %v4022
    %v4211 = vpack.c.b16 %v4025, %v4024
    %v4212 = vpack.c.b16 %v4027, %v4026
    %v4213 = vpack.c.b16 %v4029, %v4028
    %v4214 = vpack.c.b16 %v4031, %v4030
    %v4215 = vpack.c.b16 %v4033, %v4032
    %v4216 = vpack.c.b16 %v4035, %v4034
    %v4217 = vpack.c.b16 %v4037, %v4036
    %v4218 = vpack.c.b16 %v4039, %v4038
    %v4219 = vpack.c.b16 %v4041, %v4040
    %v4220 = vpack.c.b16 %v4043, %v4042
    %v4221 = vpack.c.b16 %v4045, %v4044
    %v4222 = vpack.c.b16 %v4047, %v4046
    %v4223 = vpack.c.b16 %v4049, %v4048
    %v4224 = vpack.c.b16 %v4051, %v4050
    %v4225 = vpack.c.b16 %v4053, %v4052
    %v4226 = vpack.c.b16 %v4055, %v4054
    %v4227 = vpack.c.b16 %v4057, %v4056
    %v4228 = vpack.c.b16 %v4059, %v4058
    %v4229 = vpack.c.b16 %v4061, %v4060
    %v4230 = vpack.c.b16 %v4063, %v4062
    %v4231 = vpack.c.b16 %v4065, %v4064
    %v4232 = vpack.c.b16 %v4067, %v4066
    %v4233 = vpack.c.b16 %v4069, %v4068
    %v4234 = vpack.c.b16 %v4071, %v4070
    %v4235 = vpack.c.b16 %v4073, %v4072
    %v4236 = vpack.c.b16 %v4075, %v4074
    %v4237 = vpack.c.b16 %v4077, %v4076
    %v4238 = vpack.c.b16 %v4079, %v4078
    %v4239 = vpack.c.b16 %v4081, %v4080
    %v4240 = vpack.c.b16 %v4083, %v4082
    %v4241 = vpack.c.b16 %v4085, %v4084
    %v4242 = vpack.c.b16 %v4087, %v4086
    %v4243 = vpack.c.b16 %v4089, %v4088
    %v4244 = vpack.c.b16 %v4091, %v4090
    %v4245 = vpack.c.b16 %v4093, %v4092
    %v4246 = vpack.c.b16 %v4095, %v4094
    %v4247 = vpack.c.b16 %v4097, %v4096
    %v4248 = vpack.c.b16 %v4099, %v4098
    %v4249 = vpack.c.b16 %v4101, %v4100
    %v4250 = vpack.c.b16 %v4103, %v4102
    %v4251 = vpack.c.b16 %v4105, %v4104
    %v4252 = vpack.c.b16 %v4107, %v4106
    %v4253 = vpack.c.b16 %v4109, %v4108
    %v4254 = vpack.c.b16 %v4111, %v4110
    %v4255 = vpack.c.b16 %v4113, %v4112
    %v4256 = vpack.c.b16 %v4115, %v4114
    %v4257 = vpack.c.b16 %v4117, %v4116
    %v4258 = vpack.c.b16 %v4119, %v4118
    %v4259 = vpack.c.b16 %v4121, %v4120
    %v4260 = vpack.c.b16 %v4123, %v4122
    %v4261 = vpack.c.b16 %v4125, %v4124
    %v4262 = vpack.c.b16 %v4127, %v4126
    %v4263 = vpack.c.b16 %v4129, %v4128
    %v4264 = vpack.c.b16 %v4131, %v4130
    %v4265 = vpack.c.b16 %v4133, %v4132
    %v4266 = vpack.c.b16 %v4135, %v4134
    %v4267 = vpack.c.b16 %v4137, %v4136
    %v4268 = vpack.c.b16 %v4139, %v4138
    %v4269 = vpack.c.b16 %v4141, %v4140
    %4398 = vmatpush.bf16.msra.mxu0 %v4149
    %4399 = vmatpush.bf16.msra.mxu0 %v4148
    %4400 = vmatpush.bf16.msra.mxu0 %v4147
    %4401 = vmatpush.bf16.msra.mxu0 %v4146
    %4402 = vmatpush.bf16.msra.mxu0 %v4145
    %4403 = vmatpush.bf16.msra.mxu0 %v4144
    %4404 = vmatpush.bf16.msra.mxu0 %v4143
    %4405 = vmatpush.bf16.msra.mxu0 %v4142
    %4406 = vmatmul.bf16.gmra.mxu0 %v3339
    %v4407 = vpop.f32.mrf.mxu0
    %v4408 = vadd.f32 %v3628, %v4407
    %v4409 = vpop.f32.mrf.mxu0
    %v4410 = vadd.f32 %v3628, %v4409
    %4411 = vmatmul.bf16.gmra.mxu0 %v3355
    %v4412 = vpop.f32.mrf.mxu0
    %v4413 = vadd.f32 %v3628, %v4412
    %v4414 = vpop.f32.mrf.mxu0
    %v4415 = vadd.f32 %v3628, %v4414
    %4416 = vdwg.mxu0
    %4417 = vmatpush.bf16.msra.mxu0 %v4157
    %4418 = vmatpush.bf16.msra.mxu0 %v4156
    %4419 = vmatpush.bf16.msra.mxu0 %v4155
    %4420 = vmatpush.bf16.msra.mxu0 %v4154
    %4421 = vmatpush.bf16.msra.mxu0 %v4153
    %4422 = vmatpush.bf16.msra.mxu0 %v4152
    %4423 = vmatpush.bf16.msra.mxu0 %v4151
    %4424 = vmatpush.bf16.msra.mxu0 %v4150
    %4425 = vmatmul.bf16.gmra.mxu0 %v3340
    %v4426 = vpop.f32.mrf.mxu0
    %v4427 = vadd.f32 %v4408, %v4426
    %v4428 = vpop.f32.mrf.mxu0
    %v4429 = vadd.f32 %v4410, %v4428
    %4430 = vmatmul.bf16.gmra.mxu0 %v3356
    %v4431 = vpop.f32.mrf.mxu0
    %v4432 = vadd.f32 %v4413, %v4431
    %v4433 = vpop.f32.mrf.mxu0
    %v4434 = vadd.f32 %v4415, %v4433
    %4435 = vdwg.mxu0
    %4436 = vmatpush.bf16.msra.mxu0 %v4165
    %4437 = vmatpush.bf16.msra.mxu0 %v4164
    %4438 = vmatpush.bf16.msra.mxu0 %v4163
    %4439 = vmatpush.bf16.msra.mxu0 %v4162
    %4440 = vmatpush.bf16.msra.mxu0 %v4161
    %4441 = vmatpush.bf16.msra.mxu0 %v4160
    %4442 = vmatpush.bf16.msra.mxu0 %v4159
    %4443 = vmatpush.bf16.msra.mxu0 %v4158
    %4444 = vmatmul.bf16.gmra.mxu0 %v3341
    %v4445 = vpop.f32.mrf.mxu0
    %v4446 = vadd.f32 %v4427, %v4445
    %v4447 = vpop.f32.mrf.mxu0
    %v4448 = vadd.f32 %v4429, %v4447
    %4449 = vmatmul.bf16.gmra.mxu0 %v3357
    %v4450 = vpop.f32.mrf.mxu0
    %v4451 = vadd.f32 %v4432, %v4450
    %v4452 = vpop.f32.mrf.mxu0
    %v4453 = vadd.f32 %v4434, %v4452
    %4454 = vdwg.mxu0
    %4455 = vmatpush.bf16.msra.mxu0 %v4173
    %4456 = vmatpush.bf16.msra.mxu0 %v4172
    %4457 = vmatpush.bf16.msra.mxu0 %v4171
    %4458 = vmatpush.bf16.msra.mxu0 %v4170
    %4459 = vmatpush.bf16.msra.mxu0 %v4169
    %4460 = vmatpush.bf16.msra.mxu0 %v4168
    %4461 = vmatpush.bf16.msra.mxu0 %v4167
    %4462 = vmatpush.bf16.msra.mxu0 %v4166
    %4463 = vmatmul.bf16.gmra.mxu0 %v3342
    %v4464 = vpop.f32.mrf.mxu0
    %v4465 = vadd.f32 %v4446, %v4464
    %v4466 = vpop.f32.mrf.mxu0
    %v4467 = vadd.f32 %v4448, %v4466
    %4468 = vmatmul.bf16.gmra.mxu0 %v3358
    %v4469 = vpop.f32.mrf.mxu0
    %v4470 = vadd.f32 %v4451, %v4469
    %v4471 = vpop.f32.mrf.mxu0
    %v4472 = vadd.f32 %v4453, %v4471
    %4473 = vdwg.mxu0
    %4474 = vmatpush.bf16.msra.mxu0 %v4181
    %4475 = vmatpush.bf16.msra.mxu0 %v4180
    %4476 = vmatpush.bf16.msra.mxu0 %v4179
    %4477 = vmatpush.bf16.msra.mxu0 %v4178
    %4478 = vmatpush.bf16.msra.mxu0 %v4177
    %4479 = vmatpush.bf16.msra.mxu0 %v4176
    %4480 = vmatpush.bf16.msra.mxu0 %v4175
    %4481 = vmatpush.bf16.msra.mxu0 %v4174
    %4482 = vmatmul.bf16.gmra.mxu0 %v3343
    %v4483 = vpop.f32.mrf.mxu0
    %v4484 = vadd.f32 %v4465, %v4483
    %v4485 = vpop.f32.mrf.mxu0
    %v4486 = vadd.f32 %v4467, %v4485
    %4487 = vmatmul.bf16.gmra.mxu0 %v3359
    %v4488 = vpop.f32.mrf.mxu0
    %v4489 = vadd.f32 %v4470, %v4488
    %v4490 = vpop.f32.mrf.mxu0
    %v4491 = vadd.f32 %v4472, %v4490
    %4492 = vdwg.mxu0
    %4493 = vmatpush.bf16.msra.mxu0 %v4189
    %4494 = vmatpush.bf16.msra.mxu0 %v4188
    %4495 = vmatpush.bf16.msra.mxu0 %v4187
    %4496 = vmatpush.bf16.msra.mxu0 %v4186
    %4497 = vmatpush.bf16.msra.mxu0 %v4185
    %4498 = vmatpush.bf16.msra.mxu0 %v4184
    %4499 = vmatpush.bf16.msra.mxu0 %v4183
    %4500 = vmatpush.bf16.msra.mxu0 %v4182
    %4501 = vmatmul.bf16.gmra.mxu0 %v3344
    %v4502 = vpop.f32.mrf.mxu0
    %v4503 = vadd.f32 %v4484, %v4502
    %v4504 = vpop.f32.mrf.mxu0
    %v4505 = vadd.f32 %v4486, %v4504
    %4506 = vmatmul.bf16.gmra.mxu0 %v3360
    %v4507 = vpop.f32.mrf.mxu0
    %v4508 = vadd.f32 %v4489, %v4507
    %v4509 = vpop.f32.mrf.mxu0
    %v4510 = vadd.f32 %v4491, %v4509
    %4511 = vdwg.mxu0
    %4512 = vmatpush.bf16.msra.mxu0 %v4197
    %4513 = vmatpush.bf16.msra.mxu0 %v4196
    %4514 = vmatpush.bf16.msra.mxu0 %v4195
    %4515 = vmatpush.bf16.msra.mxu0 %v4194
    %4516 = vmatpush.bf16.msra.mxu0 %v4193
    %4517 = vmatpush.bf16.msra.mxu0 %v4192
    %4518 = vmatpush.bf16.msra.mxu0 %v4191
    %4519 = vmatpush.bf16.msra.mxu0 %v4190
    %4520 = vmatmul.bf16.gmra.mxu0 %v3345
    %v4521 = vpop.f32.mrf.mxu0
    %v4522 = vadd.f32 %v4503, %v4521
    %v4523 = vpop.f32.mrf.mxu0
    %v4524 = vadd.f32 %v4505, %v4523
    %4525 = vmatmul.bf16.gmra.mxu0 %v3361
    %v4526 = vpop.f32.mrf.mxu0
    %v4527 = vadd.f32 %v4508, %v4526
    %v4528 = vpop.f32.mrf.mxu0
    %v4529 = vadd.f32 %v4510, %v4528
    %4530 = vdwg.mxu0
    %4531 = vmatpush.bf16.msra.mxu0 %v4205
    %4532 = vmatpush.bf16.msra.mxu0 %v4204
    %4533 = vmatpush.bf16.msra.mxu0 %v4203
    %4534 = vmatpush.bf16.msra.mxu0 %v4202
    %4535 = vmatpush.bf16.msra.mxu0 %v4201
    %4536 = vmatpush.bf16.msra.mxu0 %v4200
    %4537 = vmatpush.bf16.msra.mxu0 %v4199
    %4538 = vmatpush.bf16.msra.mxu0 %v4198
    %4539 = vmatmul.bf16.gmra.mxu0 %v3346
    %v4540 = vpop.f32.mrf.mxu0
    %v4541 = vadd.f32 %v4522, %v4540
    %v4542 = vpop.f32.mrf.mxu0
    %v4543 = vadd.f32 %v4524, %v4542
    %4544 = vmatmul.bf16.gmra.mxu0 %v3362
    %v4545 = vpop.f32.mrf.mxu0
    %v4546 = vadd.f32 %v4527, %v4545
    %v4547 = vpop.f32.mrf.mxu0
    %v4548 = vadd.f32 %v4529, %v4547
    %4549 = vdwg.mxu0
    %4550 = vmatpush.bf16.msra.mxu0 %v4213
    %4551 = vmatpush.bf16.msra.mxu0 %v4212
    %4552 = vmatpush.bf16.msra.mxu0 %v4211
    %4553 = vmatpush.bf16.msra.mxu0 %v4210
    %4554 = vmatpush.bf16.msra.mxu0 %v4209
    %4555 = vmatpush.bf16.msra.mxu0 %v4208
    %4556 = vmatpush.bf16.msra.mxu0 %v4207
    %4557 = vmatpush.bf16.msra.mxu0 %v4206
    %4558 = vmatmul.bf16.gmra.mxu0 %v3347
    %v4559 = vpop.f32.mrf.mxu0
    %v4560 = vadd.f32 %v4541, %v4559
    %v4561 = vpop.f32.mrf.mxu0
    %v4562 = vadd.f32 %v4543, %v4561
    %4563 = vmatmul.bf16.gmra.mxu0 %v3363
    %v4564 = vpop.f32.mrf.mxu0
    %v4565 = vadd.f32 %v4546, %v4564
    %v4566 = vpop.f32.mrf.mxu0
    %v4567 = vadd.f32 %v4548, %v4566
    %4568 = vdwg.mxu0
    %4569 = vmatpush.bf16.msra.mxu0 %v4221
    %4570 = vmatpush.bf16.msra.mxu0 %v4220
    %4571 = vmatpush.bf16.msra.mxu0 %v4219
    %4572 = vmatpush.bf16.msra.mxu0 %v4218
    %4573 = vmatpush.bf16.msra.mxu0 %v4217
    %4574 = vmatpush.bf16.msra.mxu0 %v4216
    %4575 = vmatpush.bf16.msra.mxu0 %v4215
    %4576 = vmatpush.bf16.msra.mxu0 %v4214
    %4577 = vmatmul.bf16.gmra.mxu0 %v3348
    %v4578 = vpop.f32.mrf.mxu0
    %v4579 = vadd.f32 %v4560, %v4578
    %v4580 = vpop.f32.mrf.mxu0
    %v4581 = vadd.f32 %v4562, %v4580
    %4582 = vmatmul.bf16.gmra.mxu0 %v3364
    %v4583 = vpop.f32.mrf.mxu0
    %v4584 = vadd.f32 %v4565, %v4583
    %v4585 = vpop.f32.mrf.mxu0
    %v4586 = vadd.f32 %v4567, %v4585
    %4587 = vdwg.mxu0
    %4588 = vmatpush.bf16.msra.mxu0 %v4229
    %4589 = vmatpush.bf16.msra.mxu0 %v4228
    %4590 = vmatpush.bf16.msra.mxu0 %v4227
    %4591 = vmatpush.bf16.msra.mxu0 %v4226
    %4592 = vmatpush.bf16.msra.mxu0 %v4225
    %4593 = vmatpush.bf16.msra.mxu0 %v4224
    %4594 = vmatpush.bf16.msra.mxu0 %v4223
    %4595 = vmatpush.bf16.msra.mxu0 %v4222
    %4596 = vmatmul.bf16.gmra.mxu0 %v3349
    %v4597 = vpop.f32.mrf.mxu0
    %v4598 = vadd.f32 %v4579, %v4597
    %v4599 = vpop.f32.mrf.mxu0
    %v4600 = vadd.f32 %v4581, %v4599
    %4601 = vmatmul.bf16.gmra.mxu0 %v3365
    %v4602 = vpop.f32.mrf.mxu0
    %v4603 = vadd.f32 %v4584, %v4602
    %v4604 = vpop.f32.mrf.mxu0
    %v4605 = vadd.f32 %v4586, %v4604
    %4606 = vdwg.mxu0
    %4607 = vmatpush.bf16.msra.mxu0 %v4237
    %4608 = vmatpush.bf16.msra.mxu0 %v4236
    %4609 = vmatpush.bf16.msra.mxu0 %v4235
    %4610 = vmatpush.bf16.msra.mxu0 %v4234
    %4611 = vmatpush.bf16.msra.mxu0 %v4233
    %4612 = vmatpush.bf16.msra.mxu0 %v4232
    %4613 = vmatpush.bf16.msra.mxu0 %v4231
    %4614 = vmatpush.bf16.msra.mxu0 %v4230
    %4615 = vmatmul.bf16.gmra.mxu0 %v3350
    %v4616 = vpop.f32.mrf.mxu0
    %v4617 = vadd.f32 %v4598, %v4616
    %v4618 = vpop.f32.mrf.mxu0
    %v4619 = vadd.f32 %v4600, %v4618
    %4620 = vmatmul.bf16.gmra.mxu0 %v3366
    %v4621 = vpop.f32.mrf.mxu0
    %v4622 = vadd.f32 %v4603, %v4621
    %v4623 = vpop.f32.mrf.mxu0
    %v4624 = vadd.f32 %v4605, %v4623
    %4625 = vdwg.mxu0
    %4626 = vmatpush.bf16.msra.mxu0 %v4245
    %4627 = vmatpush.bf16.msra.mxu0 %v4244
    %4628 = vmatpush.bf16.msra.mxu0 %v4243
    %4629 = vmatpush.bf16.msra.mxu0 %v4242
    %4630 = vmatpush.bf16.msra.mxu0 %v4241
    %4631 = vmatpush.bf16.msra.mxu0 %v4240
    %4632 = vmatpush.bf16.msra.mxu0 %v4239
    %4633 = vmatpush.bf16.msra.mxu0 %v4238
    %4634 = vmatmul.bf16.gmra.mxu0 %v3351
    %v4635 = vpop.f32.mrf.mxu0
    %v4636 = vadd.f32 %v4617, %v4635
    %v4637 = vpop.f32.mrf.mxu0
    %v4638 = vadd.f32 %v4619, %v4637
    %4639 = vmatmul.bf16.gmra.mxu0 %v3367
    %v4640 = vpop.f32.mrf.mxu0
    %v4641 = vadd.f32 %v4622, %v4640
    %v4642 = vpop.f32.mrf.mxu0
    %v4643 = vadd.f32 %v4624, %v4642
    %4644 = vdwg.mxu0
    %4645 = vmatpush.bf16.msra.mxu0 %v4253
    %4646 = vmatpush.bf16.msra.mxu0 %v4252
    %4647 = vmatpush.bf16.msra.mxu0 %v4251
    %4648 = vmatpush.bf16.msra.mxu0 %v4250
    %4649 = vmatpush.bf16.msra.mxu0 %v4249
    %4650 = vmatpush.bf16.msra.mxu0 %v4248
    %4651 = vmatpush.bf16.msra.mxu0 %v4247
    %4652 = vmatpush.bf16.msra.mxu0 %v4246
    %4653 = vmatmul.bf16.gmra.mxu0 %v3352
    %v4654 = vpop.f32.mrf.mxu0
    %v4655 = vadd.f32 %v4636, %v4654
    %v4656 = vpop.f32.mrf.mxu0
    %v4657 = vadd.f32 %v4638, %v4656
    %4658 = vmatmul.bf16.gmra.mxu0 %v3368
    %v4659 = vpop.f32.mrf.mxu0
    %v4660 = vadd.f32 %v4641, %v4659
    %v4661 = vpop.f32.mrf.mxu0
    %v4662 = vadd.f32 %v4643, %v4661
    %4663 = vdwg.mxu0
    %4664 = vmatpush.bf16.msra.mxu0 %v4261
    %4665 = vmatpush.bf16.msra.mxu0 %v4260
    %4666 = vmatpush.bf16.msra.mxu0 %v4259
    %4667 = vmatpush.bf16.msra.mxu0 %v4258
    %4668 = vmatpush.bf16.msra.mxu0 %v4257
    %4669 = vmatpush.bf16.msra.mxu0 %v4256
    %4670 = vmatpush.bf16.msra.mxu0 %v4255
    %4671 = vmatpush.bf16.msra.mxu0 %v4254
    %4672 = vmatmul.bf16.gmra.mxu0 %v3353
    %v4673 = vpop.f32.mrf.mxu0
    %v4674 = vadd.f32 %v4655, %v4673
    %v4675 = vpop.f32.mrf.mxu0
    %v4676 = vadd.f32 %v4657, %v4675
    %4677 = vmatmul.bf16.gmra.mxu0 %v3369
    %v4678 = vpop.f32.mrf.mxu0
    %v4679 = vadd.f32 %v4660, %v4678
    %v4680 = vpop.f32.mrf.mxu0
    %v4681 = vadd.f32 %v4662, %v4680
    %4682 = vdwg.mxu0
    %4683 = vmatpush.bf16.msra.mxu0 %v4269
    %4684 = vmatpush.bf16.msra.mxu0 %v4268
    %4685 = vmatpush.bf16.msra.mxu0 %v4267
    %4686 = vmatpush.bf16.msra.mxu0 %v4266
    %4687 = vmatpush.bf16.msra.mxu0 %v4265
    %4688 = vmatpush.bf16.msra.mxu0 %v4264
    %4689 = vmatpush.bf16.msra.mxu0 %v4263
    %4690 = vmatpush.bf16.msra.mxu0 %v4262
    %4691 = vmatmul.bf16.gmra.mxu0 %v3354
    %v4692 = vpop.f32.mrf.mxu0
    %v4693 = vadd.f32 %v4674, %v4692
    %v4694 = vpop.f32.mrf.mxu0
    %v4695 = vadd.f32 %v4676, %v4694
    %4696 = vmatmul.bf16.gmra.mxu0 %v3370
    %v4697 = vpop.f32.mrf.mxu0
    %v4698 = vadd.f32 %v4679, %v4697
    %v4699 = vpop.f32.mrf.mxu0
    %v4700 = vadd.f32 %v4681, %v4699
    %4701 = vdwg.mxu0
    %v4702 = vadd.f32 %v4693, %v2731
    %v4703 = vadd.f32 %v4695, %v2732
    %v4704 = vadd.f32 %v4698, %v2733
    %v4705 = vadd.f32 %v4700, %v2734
    %v4706 = vsel %vm73, %v4702, 0.0
    %4707 = vadd.xlane.f32.xlu0 %v4706
    %v4708 = vpop.xlane.xlu0 %4707
    %v4709 = vsel %vm73, %v4703, 0.0
    %4710 = vadd.xlane.f32.xlu0 %v4709
    %v4711 = vpop.xlane.xlu0 %4710
    %v4712 = vsel %vm73, %v4704, 0.0
    %4713 = vadd.xlane.f32.xlu0 %v4712
    %v4714 = vpop.xlane.xlu0 %4713
    %v4715 = vsel %vm73, %v4705, 0.0
    %4716 = vadd.xlane.f32.xlu0 %v4715
    %v4717 = vpop.xlane.xlu0 %4716
    %v4718 = vmul.f32 %v4708, %v1282
    %v4719 = vmul.f32 %v4711, %v1282
    %v4720 = vmul.f32 %v4714, %v1282
    %v4721 = vmul.f32 %v4717, %v1282
    %v4722 = vmul.f32 %v4702, %v4702
    %v4723 = vmul.f32 %v4703, %v4703
    %v4724 = vmul.f32 %v4704, %v4704
    %v4725 = vmul.f32 %v4705, %v4705
    %v4726 = vsel %vm73, %v4722, 0.0
    %4727 = vadd.xlane.f32.xlu0 %v4726
    %v4728 = vpop.xlane.xlu0 %4727
    %v4729 = vsel %vm73, %v4723, 0.0
    %4730 = vadd.xlane.f32.xlu0 %v4729
    %v4731 = vpop.xlane.xlu0 %4730
    %v4732 = vsel %vm73, %v4724, 0.0
    %4733 = vadd.xlane.f32.xlu0 %v4732
    %v4734 = vpop.xlane.xlu0 %4733
    %v4735 = vsel %vm73, %v4725, 0.0
    %4736 = vadd.xlane.f32.xlu0 %v4735
    %v4737 = vpop.xlane.xlu0 %4736
    %v4738 = vmul.f32 %v4728, %v1282
    %v4739 = vmul.f32 %v4731, %v1282
    %v4740 = vmul.f32 %v4734, %v1282
    %v4741 = vmul.f32 %v4737, %v1282
    %v4742 = vmul.f32 %v4718, %v4718
    %v4743 = vmul.f32 %v4719, %v4719
    %v4744 = vmul.f32 %v4720, %v4720
    %v4745 = vmul.f32 %v4721, %v4721
    %v4746 = vsub.f32 %v4738, %v4742
    %v4747 = vsub.f32 %v4739, %v4743
    %v4748 = vsub.f32 %v4740, %v4744
    %v4749 = vsub.f32 %v4741, %v4745
    %v4750 = vsub.f32 %v4702, %v4718
    %v4751 = vsub.f32 %v4703, %v4719
    %v4752 = vsub.f32 %v4704, %v4720
    %v4753 = vsub.f32 %v4705, %v4721
    %v4754 = vadd.f32 %v4746, 1e-05
    %v4755 = vadd.f32 %v4747, 1e-05
    %v4756 = vadd.f32 %v4748, 1e-05
    %v4757 = vadd.f32 %v4749, 1e-05
    %v4758 = vrsqrt.pop %v4754
    %v4759 = vmul.f32 %v4758, %v4754
    %v4760 = vmul.f32 %v4759, %v4758
    %v4761 = vmul.f32 0.5, %v4760
    %v4762 = vsub.f32 1.5, %v4761
    %v4763 = vmul.f32 %v4758, %v4762
    %vm4764 = vweird.f32 %v4754
    %vm4765 = vweird.f32 %v4758
    %vm4766 = vmor %vm4764, %vm4765
    %v4767 = vsel %vm4766, %v4758, %v4763
    %v4768 = vrsqrt.pop %v4755
    %v4769 = vmul.f32 %v4768, %v4755
    %v4770 = vmul.f32 %v4769, %v4768
    %v4771 = vmul.f32 0.5, %v4770
    %v4772 = vsub.f32 1.5, %v4771
    %v4773 = vmul.f32 %v4768, %v4772
    %vm4774 = vweird.f32 %v4755
    %vm4775 = vweird.f32 %v4768
    %vm4776 = vmor %vm4774, %vm4775
    %v4777 = vsel %vm4776, %v4768, %v4773
    %v4778 = vrsqrt.pop %v4756
    %v4779 = vmul.f32 %v4778, %v4756
    %v4780 = vmul.f32 %v4779, %v4778
    %v4781 = vmul.f32 0.5, %v4780
    %v4782 = vsub.f32 1.5, %v4781
    %v4783 = vmul.f32 %v4778, %v4782
    %vm4784 = vweird.f32 %v4756
    %vm4785 = vweird.f32 %v4778
    %vm4786 = vmor %vm4784, %vm4785
    %v4787 = vsel %vm4786, %v4778, %v4783
    %v4788 = vrsqrt.pop %v4757
    %v4789 = vmul.f32 %v4788, %v4757
    %v4790 = vmul.f32 %v4789, %v4788
    %v4791 = vmul.f32 0.5, %v4790
    %v4792 = vsub.f32 1.5, %v4791
    %v4793 = vmul.f32 %v4788, %v4792
    %vm4794 = vweird.f32 %v4757
    %vm4795 = vweird.f32 %v4788
    %vm4796 = vmor %vm4794, %vm4795
    %v4797 = vsel %vm4796, %v4788, %v4793
    %v4798 = vmul.f32 %v4750, %v4767
    %v4799 = vmul.f32 %v4751, %v4777
    %v4800 = vmul.f32 %v4752, %v4787
    %v4801 = vmul.f32 %v4753, %v4797
    %v4803 = vperm.slane %v46, 0
    %v4805 = vmul.f32 %v4798, %v4803
    %v4806 = vmul.f32 %v4799, %v4803
    %v4807 = vmul.f32 %v4800, %v4803
    %v4808 = vmul.f32 %v4801, %v4803
    %v4810 = vperm.slane %v47, 0
    %v4812 = vadd.f32 %v4805, %v4810
    %v4813 = vadd.f32 %v4806, %v4810
    %v4814 = vadd.f32 %v4807, %v4810
    %v4815 = vadd.f32 %v4808, %v4810
    %4816 = vst.msk [vmem:[#allocation2] sm:$0xff] %vm73, %v4812
    %4817 = vst.msk [vmem:[#allocation2 + $0x8] sm:$0xff] %vm73, %v4813
    %4818 = vst.msk [vmem:[#allocation2 + $0x10] sm:$0xff] %vm73, %v4814
    %4819 = vst.msk [vmem:[#allocation2 + $0x18] sm:$0xff] %vm73, %v4815
    // Predicated region
    $region38: #{tpu_custom_call.1} parent=1 // pred_check
      _
    $region39: #{tpu_custom_call.1} parent=1 // pred_check_branch
      %4821 = sbr.rel (0) target = $region41
    $region40: #{tpu_custom_call.1} parent=1 // pred_region
      %4823 = vsyncadd [#allocation3], 0
      %s4824 = sshll.u32 [#allocation2], 4
      %s4825 = int_to_ptr.vmem [resolvable:$true] %s4824
      %s4826 = sshll.u32 %s9, 4
      %s4827 = int_to_ptr.hbm [resolvable:$true] %s4826
      %4832 = dma.vmem_to_hbm [thread:$0]  %s4825, 512, %s4827, [#allocation3], 128, 128, 8
    $region41: #{tpu_custom_call.1} parent=1 // pred_fallthru
      _
    // Predicated region
    $region42: #{tpu_custom_call.1} parent=1 // pred_check
      _
    $region43: #{tpu_custom_call.1} parent=1 // pred_check_branch
      %4834 = sbr.rel (0) target = $region45
    $region44: #{tpu_custom_call.1} parent=1 // pred_region
      %4836 = dma.done [#allocation3], 512
    $region45: #{tpu_custom_call.1} parent=1 // pred_fallthru
      _
    %4837 = vsyncpa [#allocation3], 1

</llo_original>
